<compile_context>
chip_gen: v6e
topology: v6e:2x2x1
jax: 0.10.0
libtpu: 0.0.40
codegen_flags: <defaults>
</compile_context>

<pallas_src>
import jax
import jax.numpy as jnp
from jax import lax
from jax.experimental import pallas as pl
from jax.experimental.pallas import tpu as pltpu


# ---------------------------------------------------------------------------
# Fused kernel: whole forward pass for one batch block.
# ---------------------------------------------------------------------------

def _cnn_kernel(x_ref, w1_ref, b1_ref, w2_ref, b2_ref, wf_ref, bf_ref,
                o_ref, y1_scr, h1_scr, y2_scr, flat_scr):
    """Per batch block of BB elements:

      x_ref   : (BB, 28, 28)  f32   raw images (cast to bf16 in-kernel)
      w1_ref  : (5, 28, 384)  bf16  conv1 banded weight  [i][wcol, ow*16+n]
      b1_ref  : (1, 384)      f32   conv1 bias tiled over ow
      w2_ref  : (5, 368, 256) bf16  conv2 banded weight  [i][w*16+c, ow2*32+n]
                                    (zero rows at odd w -> pool junk ignored)
      b2_ref  : (1, 256)      f32   conv2 bias tiled over ow2
      wf_ref  : (1024, 128)   bf16  fc1 weight, rows = p*256 + ow2*32 + n,
                                    cols padded 10 -> 128
      bf_ref  : (1, 128)      f32
      o_ref   : (BB, 128)     f32   logits (lanes 10..127 zero)

      y1_scr  : (BB, 24, 384) f32   conv1+ReLU   (rows=oh,  lanes=ow*16+n)
      h1_scr  : (BB, 12, 368) f32   pooled conv1 (rows=ph,  data at 32*pw+c)
      y2_scr  : (BB, 8, 256)  f32   conv2+ReLU   (rows=oh2, lanes=ow2*32+n)
      flat_scr: (BB, 1024)    f32   pooled conv2, lane-aligned for the fc
    """
    bb = x_ref.shape[0]

    # ---- conv1: 5 banded matmuls (one per kernel row) ----------------------
    def x_rows(i):
        return x_ref[:, pl.ds(i, 24), :].reshape(bb * 24, 28).astype(
            jnp.bfloat16)

    acc1 = jnp.dot(x_rows(0), w1_ref[0], preferred_element_type=jnp.float32)
    for i in range(1, 5):
        acc1 = acc1 + jnp.dot(x_rows(i), w1_ref[i],
                              preferred_element_type=jnp.float32)
    y1_scr[...] = jnp.maximum(acc1 + b1_ref[...], 0.0).reshape(bb, 24, 384)

    # ---- maxpool 2x2: row pairs via two reads, col pairs via 16-lane shift -
    for ph in range(12):
        m = jnp.maximum(y1_scr[:, 2 * ph, :], y1_scr[:, 2 * ph + 1, :])
        m = jnp.maximum(m[:, 0:368], m[:, 16:384])   # valid at even ow lanes
        h1_scr[:, ph, :] = m

    # ---- conv2: 5 banded matmuls over (width, channel) of pooled conv1 -----
    def h_rows(i):
        return h1_scr[:, pl.ds(i, 8), :].reshape(bb * 8, 368).astype(
            jnp.bfloat16)

    acc2 = jnp.dot(h_rows(0), w2_ref[0], preferred_element_type=jnp.float32)
    for i in range(1, 5):
        acc2 = acc2 + jnp.dot(h_rows(i), w2_ref[i],
                              preferred_element_type=jnp.float32)
    y2_scr[...] = jnp.maximum(acc2 + b2_ref[...], 0.0).reshape(bb, 8, 256)

    # ---- maxpool 2x2 + pack into a lane-aligned flat scratch ---------------
    flat_scr[...] = jnp.zeros(flat_scr.shape, flat_scr.dtype)
    for p in range(4):
        m = jnp.maximum(y2_scr[:, 2 * p, :], y2_scr[:, 2 * p + 1, :])
        m = jnp.maximum(m[:, 0:224], m[:, 32:256])   # valid at even ow2 lanes
        flat_scr[:, pl.ds(p * 256, 224)] = m

    # ---- fc1: a single (BB, 1024) x (1024, 128) matmul ----------------------
    logits = jnp.dot(flat_scr[...].astype(jnp.bfloat16), wf_ref[...],
                     preferred_element_type=jnp.float32)
    o_ref[...] = logits + bf_ref[...]


# ---------------------------------------------------------------------------
# Host-side weight reshaping (pure XLA, tiny, done once per call).
# ---------------------------------------------------------------------------

def _conv1_banded(w1, b1):
    """(16,1,5,5) -> banded (5, 28, 384): [i][wcol, ow*16+n] = w1[n,0,i,wcol-ow]."""
    w1t = w1.reshape(16, 5, 5).transpose(1, 2, 0)            # (i, j, n)
    wcol = jnp.arange(28)[:, None]
    ow = jnp.arange(24)[None, :]
    j = wcol - ow
    valid = (j >= 0) & (j < 5)
    band = w1t[:, jnp.clip(j, 0, 4)]                         # (5, 28, 24, 16)
    band = jnp.where(valid[None, :, :, None], band, 0.0)
    return (band.reshape(5, 28, 24 * 16).astype(jnp.bfloat16),
            jnp.tile(b1, 24).reshape(1, 24 * 16).astype(jnp.float32))


def _conv2_banded(w2, b2):
    """(32,16,5,5) -> banded (5, 368, 256); zero rows at odd w (pool junk)."""
    w2t = w2.transpose(2, 3, 1, 0)                           # (i, j, c, n)
    pw = jnp.arange(12)[:, None]
    ow2 = jnp.arange(8)[None, :]
    j = pw - ow2
    valid = (j >= 0) & (j < 5)
    band = w2t[:, jnp.clip(j, 0, 4)]                         # (5, 12, 8, 16, 32)
    band = jnp.where(valid[None, :, :, None, None], band, 0.0)
    band = band.transpose(0, 1, 3, 2, 4)                     # (i, pw, c, ow2, n)
    full = jnp.zeros((5, 23, 16, 8, 32), jnp.float32).at[:, 0::2].set(band)
    return (full.reshape(5, 23 * 16, 8 * 32).astype(jnp.bfloat16),
            jnp.tile(b2, 8).reshape(1, 8 * 32).astype(jnp.float32))


def _fc_flat(wfc, bfc):
    """(10, 512) torch (c,h,w)-flat -> (1024, 128) rows = p*256 + ow2*32 + n."""
    wf = wfc.reshape(10, 32, 4, 4).transpose(2, 3, 1, 0)     # (p, pw2, n, o)
    full = jnp.zeros((4, 8, 32, 128), jnp.float32)
    full = full.at[:, 0::2, :, 0:10].set(wf)
    bf = jnp.zeros((1, 128), jnp.float32).at[0, 0:10].set(bfc)
    return full.reshape(1024, 128).astype(jnp.bfloat16), bf


# ---------------------------------------------------------------------------
# Forward pass
# ---------------------------------------------------------------------------

def cnn_forward(params, x, *, block_b=64):
    """x: (B, 1, 28, 28) f32 -> logits (B, 10) f32."""
    B, C, H, W = x.shape
    assert (C, H, W) == (1, 28, 28), "fc1(32*4*4) fixes the input to 1x28x28"

    w1b, b1r = _conv1_banded(params["w1"], params["b1"])
    w2b, b2r = _conv2_banded(params["w2"], params["b2"])
    wff, bff = _fc_flat(params["wfc"], params["bfc"])

    bb = B if B <= block_b else block_b          # batch block (8-aligned when tiled)
    bp = pl.cdiv(B, bb) * bb
    x3 = x.reshape(B, 28, 28)
    if bp != B:
        x3 = jnp.pad(x3, ((0, bp - B), (0, 0), (0, 0)))

    logits = pl.pallas_call(
        _cnn_kernel,
        out_shape=jax.ShapeDtypeStruct((bp, 128), jnp.float32),
        grid=(bp // bb,),
        in_specs=[
            pl.BlockSpec((bb, 28, 28), lambda b: (b, 0, 0)),
            # weights / biases: constant index_map -> VMEM-resident across steps
            pl.BlockSpec((5, 28, 384), lambda b: (0, 0, 0)),
            pl.BlockSpec((1, 384), lambda b: (0, 0)),
            pl.BlockSpec((5, 368, 256), lambda b: (0, 0, 0)),
            pl.BlockSpec((1, 256), lambda b: (0, 0)),
            pl.BlockSpec((1024, 128), lambda b: (0, 0)),
            pl.BlockSpec((1, 128), lambda b: (0, 0)),
        ],
        out_specs=pl.BlockSpec((bb, 128), lambda b: (b, 0)),
        scratch_shapes=[
            pltpu.VMEM((bb, 24, 384), jnp.float32),
            pltpu.VMEM((bb, 12, 368), jnp.float32),
            pltpu.VMEM((bb, 8, 256), jnp.float32),
            pltpu.VMEM((bb, 1024), jnp.float32),
        ],
        compiler_params=pltpu.CompilerParams(
            dimension_semantics=("parallel",)),
    )(x3, w1b, b1r, w2b, b2r, wff, bff)
    return logits[:B, :10]


# ---------------------------------------------------------------------------
# Pure-JAX f32 reference + params
# ---------------------------------------------------------------------------

def cnn_reference(params, x):
    def conv(x, w, b):
        y = lax.conv_general_dilated(
            x, w, window_strides=(1, 1), padding="VALID",
            dimension_numbers=("NCHW", "OIHW", "NCHW"))
        return jnp.maximum(y + b.reshape(1, -1, 1, 1), 0.0)

    def pool(x):
        return lax.reduce_window(x, -jnp.inf, lax.max,
                                 (1, 1, 2, 2), (1, 1, 2, 2), "VALID")

    h = pool(conv(x, params["w1"], params["b1"]))
    h = pool(conv(h, params["w2"], params["b2"]))
    h = h.reshape(h.shape[0], -1)
    return h @ params["wfc"].T + params["bfc"]


def init_params(key):
    def uniform(key, shape, fan_in):
        bound = 1.0 / jnp.sqrt(jnp.float32(fan_in))
        return jax.random.uniform(key, shape, jnp.float32, -bound, bound)

    k = jax.random.split(key, 6)
    return {
        "w1": uniform(k[0], (16, 1, 5, 5), 1 * 5 * 5),
        "b1": uniform(k[1], (16,), 1 * 5 * 5),
        "w2": uniform(k[2], (32, 16, 5, 5), 16 * 5 * 5),
        "b2": uniform(k[3], (32,), 16 * 5 * 5),
        "wfc": uniform(k[4], (10, 32 * 4 * 4), 32 * 4 * 4),
        "bfc": uniform(k[5], (10,), 32 * 4 * 4),
    }


if __name__ == "__main__":
    key = jax.random.PRNGKey(0)
    pkey, xkey = jax.random.split(key)
    params = init_params(pkey)

    # fc1 expects 32*4*4 features => spatial input must be 28x28 (MNIST-like).
    x = jax.random.normal(xkey, (2, 1, 28, 28), jnp.float32)

    out = jax.block_until_ready(jax.jit(cnn_forward)(params, x))
    ref = jax.block_until_ready(jax.jit(cnn_reference)(params, x))

    assert out.shape == (2, 10), out.shape
    # bf16 matmul operands (f32 accumulation) => loosened tolerance vs f32 ref.
    assert jnp.allclose(out, ref, rtol=5e-2, atol=5e-2), (
        float(jnp.max(jnp.abs(out - ref))))
    print("KERNEL_OK")
</pallas_src>

<mosaic_0001>
module attributes {stable_mosaic.version = 11 : i64} {
  func.func @_cnn_kernel(%arg0: i32, %arg1: memref<2x28x28xf32, #tpu.memory_space<vmem>>, %arg2: memref<5x28x384xbf16, #tpu.memory_space<vmem>>, %arg3: memref<1x384xf32, #tpu.memory_space<vmem>>, %arg4: memref<5x368x256xbf16, #tpu.memory_space<vmem>>, %arg5: memref<1x256xf32, #tpu.memory_space<vmem>>, %arg6: memref<1024x128xbf16, #tpu.memory_space<vmem>>, %arg7: memref<1x128xf32, #tpu.memory_space<vmem>>, %arg8: memref<2x128xf32, #tpu.memory_space<vmem>>, %arg9: memref<2x24x384xf32, #tpu.memory_space<vmem>>, %arg10: memref<2x12x368xf32, #tpu.memory_space<vmem>>, %arg11: memref<2x8x256xf32, #tpu.memory_space<vmem>>, %arg12: memref<2x1024xf32, #tpu.memory_space<vmem>>) attributes {dimension_semantics = [#tpu.dimension_semantics<parallel>], iteration_bounds = array<i64: 1>, scalar_prefetch = 0 : i64, scratch_operands = 4 : i64, tpu.core_type = #tpu.core_type<tc>, window_params = [{transform_indices = @transform_0, window_bounds = array<i64: 2, 28, 28>}, {pipeline_mode = #tpu.pipeline_mode<synchronous>, transform_indices = @transform_1, window_bounds = array<i64: 5, 28, 384>}, {pipeline_mode = #tpu.pipeline_mode<synchronous>, transform_indices = @transform_2, window_bounds = array<i64: 1, 384>}, {pipeline_mode = #tpu.pipeline_mode<synchronous>, transform_indices = @transform_3, window_bounds = array<i64: 5, 368, 256>}, {pipeline_mode = #tpu.pipeline_mode<synchronous>, transform_indices = @transform_4, window_bounds = array<i64: 1, 256>}, {pipeline_mode = #tpu.pipeline_mode<synchronous>, transform_indices = @transform_5, window_bounds = array<i64: 1024, 128>}, {pipeline_mode = #tpu.pipeline_mode<synchronous>, transform_indices = @transform_6, window_bounds = array<i64: 1, 128>}, {transform_indices = @transform_7, window_bounds = array<i64: 2, 128>}]} {
    %c0 = arith.constant 0 : index
    %c0_0 = arith.constant 0 : index
    %c0_1 = arith.constant 0 : index
    %0 = vector.load %arg1[%c0, %c0_0, %c0_1] : memref<2x28x28xf32, #tpu.memory_space<vmem>>, vector<2x24x28xf32>
    %1 = vector.shape_cast %0 : vector<2x24x28xf32> to vector<48x28xf32>
    %2 = arith.truncf %1 : vector<48x28xf32> to vector<48x28xbf16>
    %c0_2 = arith.constant 0 : index
    %c0_3 = arith.constant 0 : index
    %c0_4 = arith.constant 0 : index
    %3 = vector.load %arg2[%c0_2, %c0_3, %c0_4] : memref<5x28x384xbf16, #tpu.memory_space<vmem>>, vector<1x28x384xbf16>
    %4 = vector.shape_cast %3 : vector<1x28x384xbf16> to vector<28x384xbf16>
    %cst = arith.constant dense<0.000000e+00> : vector<48x384xf32>
    %5 = tpu.matmul %2, %4, %cst {dimension_numbers = #tpu.dot_dimension_numbers<[1], [0], [0], [1], [0, 0, 1, 1], [], []>} : vector<48x28xbf16>, vector<28x384xbf16>, vector<48x384xf32> -> vector<48x384xf32>
    %c0_5 = arith.constant 0 : index
    %c1 = arith.constant 1 : index
    %c0_6 = arith.constant 0 : index
    %6 = vector.load %arg1[%c0_5, %c1, %c0_6] : memref<2x28x28xf32, #tpu.memory_space<vmem>>, vector<2x24x28xf32>
    %7 = vector.shape_cast %6 : vector<2x24x28xf32> to vector<48x28xf32>
    %8 = arith.truncf %7 : vector<48x28xf32> to vector<48x28xbf16>
    %c1_7 = arith.constant 1 : index
    %c0_8 = arith.constant 0 : index
    %c0_9 = arith.constant 0 : index
    %9 = vector.load %arg2[%c1_7, %c0_8, %c0_9] : memref<5x28x384xbf16, #tpu.memory_space<vmem>>, vector<1x28x384xbf16>
    %10 = vector.shape_cast %9 : vector<1x28x384xbf16> to vector<28x384xbf16>
    %cst_10 = arith.constant dense<0.000000e+00> : vector<48x384xf32>
    %11 = tpu.matmul %8, %10, %cst_10 {dimension_numbers = #tpu.dot_dimension_numbers<[1], [0], [0], [1], [0, 0, 1, 1], [], []>} : vector<48x28xbf16>, vector<28x384xbf16>, vector<48x384xf32> -> vector<48x384xf32>
    %12 = arith.addf %5, %11 : vector<48x384xf32>
    %c0_11 = arith.constant 0 : index
    %c2 = arith.constant 2 : index
    %c0_12 = arith.constant 0 : index
    %13 = vector.load %arg1[%c0_11, %c2, %c0_12] : memref<2x28x28xf32, #tpu.memory_space<vmem>>, vector<2x24x28xf32>
    %14 = vector.shape_cast %13 : vector<2x24x28xf32> to vector<48x28xf32>
    %15 = arith.truncf %14 : vector<48x28xf32> to vector<48x28xbf16>
    %c2_13 = arith.constant 2 : index
    %c0_14 = arith.constant 0 : index
    %c0_15 = arith.constant 0 : index
    %16 = vector.load %arg2[%c2_13, %c0_14, %c0_15] : memref<5x28x384xbf16, #tpu.memory_space<vmem>>, vector<1x28x384xbf16>
    %17 = vector.shape_cast %16 : vector<1x28x384xbf16> to vector<28x384xbf16>
    %cst_16 = arith.constant dense<0.000000e+00> : vector<48x384xf32>
    %18 = tpu.matmul %15, %17, %cst_16 {dimension_numbers = #tpu.dot_dimension_numbers<[1], [0], [0], [1], [0, 0, 1, 1], [], []>} : vector<48x28xbf16>, vector<28x384xbf16>, vector<48x384xf32> -> vector<48x384xf32>
    %19 = arith.addf %12, %18 : vector<48x384xf32>
    %c0_17 = arith.constant 0 : index
    %c3 = arith.constant 3 : index
    %c0_18 = arith.constant 0 : index
    %20 = vector.load %arg1[%c0_17, %c3, %c0_18] : memref<2x28x28xf32, #tpu.memory_space<vmem>>, vector<2x24x28xf32>
    %21 = vector.shape_cast %20 : vector<2x24x28xf32> to vector<48x28xf32>
    %22 = arith.truncf %21 : vector<48x28xf32> to vector<48x28xbf16>
    %c3_19 = arith.constant 3 : index
    %c0_20 = arith.constant 0 : index
    %c0_21 = arith.constant 0 : index
    %23 = vector.load %arg2[%c3_19, %c0_20, %c0_21] : memref<5x28x384xbf16, #tpu.memory_space<vmem>>, vector<1x28x384xbf16>
    %24 = vector.shape_cast %23 : vector<1x28x384xbf16> to vector<28x384xbf16>
    %cst_22 = arith.constant dense<0.000000e+00> : vector<48x384xf32>
    %25 = tpu.matmul %22, %24, %cst_22 {dimension_numbers = #tpu.dot_dimension_numbers<[1], [0], [0], [1], [0, 0, 1, 1], [], []>} : vector<48x28xbf16>, vector<28x384xbf16>, vector<48x384xf32> -> vector<48x384xf32>
    %26 = arith.addf %19, %25 : vector<48x384xf32>
    %c0_23 = arith.constant 0 : index
    %c4 = arith.constant 4 : index
    %c0_24 = arith.constant 0 : index
    %27 = vector.load %arg1[%c0_23, %c4, %c0_24] : memref<2x28x28xf32, #tpu.memory_space<vmem>>, vector<2x24x28xf32>
    %28 = vector.shape_cast %27 : vector<2x24x28xf32> to vector<48x28xf32>
    %29 = arith.truncf %28 : vector<48x28xf32> to vector<48x28xbf16>
    %c4_25 = arith.constant 4 : index
    %c0_26 = arith.constant 0 : index
    %c0_27 = arith.constant 0 : index
    %30 = vector.load %arg2[%c4_25, %c0_26, %c0_27] : memref<5x28x384xbf16, #tpu.memory_space<vmem>>, vector<1x28x384xbf16>
    %31 = vector.shape_cast %30 : vector<1x28x384xbf16> to vector<28x384xbf16>
    %cst_28 = arith.constant dense<0.000000e+00> : vector<48x384xf32>
    %32 = tpu.matmul %29, %31, %cst_28 {dimension_numbers = #tpu.dot_dimension_numbers<[1], [0], [0], [1], [0, 0, 1, 1], [], []>} : vector<48x28xbf16>, vector<28x384xbf16>, vector<48x384xf32> -> vector<48x384xf32>
    %33 = arith.addf %26, %32 : vector<48x384xf32>
    %c0_29 = arith.constant 0 : index
    %c0_30 = arith.constant 0 : index
    %34 = vector.load %arg3[%c0_29, %c0_30] : memref<1x384xf32, #tpu.memory_space<vmem>>, vector<1x384xf32>
    %35 = vector.broadcast %34 : vector<1x384xf32> to vector<48x384xf32>
    %36 = arith.addf %33, %35 : vector<48x384xf32>
    %cst_31 = arith.constant 0.000000e+00 : f32
    %37 = vector.broadcast %cst_31 : f32 to vector<48x384xf32>
    %38 = arith.maximumf %36, %37 : vector<48x384xf32>
    %39 = vector.shape_cast %38 : vector<48x384xf32> to vector<2x24x384xf32>
    %c0_32 = arith.constant 0 : index
    %c0_33 = arith.constant 0 : index
    %c0_34 = arith.constant 0 : index
    %40 = vector.load %arg9[%c0_32, %c0_33, %c0_34] : memref<2x24x384xf32, #tpu.memory_space<vmem>>, vector<2x24x384xf32>
    tpu.vector_store %arg9[%c0_32, %c0_33, %c0_34], %39 {strides = array<i32>} : memref<2x24x384xf32, #tpu.memory_space<vmem>>, vector<2x24x384xf32>,
    %c0_35 = arith.constant 0 : index
    %c0_36 = arith.constant 0 : index
    %c0_37 = arith.constant 0 : index
    %41 = vector.load %arg9[%c0_35, %c0_36, %c0_37] : memref<2x24x384xf32, #tpu.memory_space<vmem>>, vector<2x1x384xf32>
    %42 = vector.shape_cast %41 : vector<2x1x384xf32> to vector<2x384xf32>
    %c0_38 = arith.constant 0 : index
    %c1_39 = arith.constant 1 : index
    %c0_40 = arith.constant 0 : index
    %43 = vector.load %arg9[%c0_38, %c1_39, %c0_40] : memref<2x24x384xf32, #tpu.memory_space<vmem>>, vector<2x1x384xf32>
    %44 = vector.shape_cast %43 : vector<2x1x384xf32> to vector<2x384xf32>
    %45 = arith.maximumf %42, %44 : vector<2x384xf32>
    %46 = vector.extract_strided_slice %45 {offsets = [0, 0], sizes = [2, 368], strides = [1, 1]} : vector<2x384xf32> to vector<2x368xf32>
    %47 = vector.extract_strided_slice %45 {offsets = [0, 16], sizes = [2, 368], strides = [1, 1]} : vector<2x384xf32> to vector<2x368xf32>
    %48 = arith.maximumf %46, %47 : vector<2x368xf32>
    %c0_41 = arith.constant 0 : index
    %c0_42 = arith.constant 0 : index
    %c0_43 = arith.constant 0 : index
    %49 = vector.load %arg10[%c0_41, %c0_42, %c0_43] : memref<2x12x368xf32, #tpu.memory_space<vmem>>, vector<2x1x368xf32>
    %50 = vector.shape_cast %49 : vector<2x1x368xf32> to vector<2x368xf32>
    %51 = vector.shape_cast %48 : vector<2x368xf32> to vector<2x1x368xf32>
    tpu.vector_store %arg10[%c0_41, %c0_42, %c0_43], %51 {strides = array<i32>} : memref<2x12x368xf32, #tpu.memory_space<vmem>>, vector<2x1x368xf32>,
    %c0_44 = arith.constant 0 : index
    %c2_45 = arith.constant 2 : index
    %c0_46 = arith.constant 0 : index
    %52 = vector.load %arg9[%c0_44, %c2_45, %c0_46] : memref<2x24x384xf32, #tpu.memory_space<vmem>>, vector<2x1x384xf32>
    %53 = vector.shape_cast %52 : vector<2x1x384xf32> to vector<2x384xf32>
    %c0_47 = arith.constant 0 : index
    %c3_48 = arith.constant 3 : index
    %c0_49 = arith.constant 0 : index
    %54 = vector.load %arg9[%c0_47, %c3_48, %c0_49] : memref<2x24x384xf32, #tpu.memory_space<vmem>>, vector<2x1x384xf32>
    %55 = vector.shape_cast %54 : vector<2x1x384xf32> to vector<2x384xf32>
    %56 = arith.maximumf %53, %55 : vector<2x384xf32>
    %57 = vector.extract_strided_slice %56 {offsets = [0, 0], sizes = [2, 368], strides = [1, 1]} : vector<2x384xf32> to vector<2x368xf32>
    %58 = vector.extract_strided_slice %56 {offsets = [0, 16], sizes = [2, 368], strides = [1, 1]} : vector<2x384xf32> to vector<2x368xf32>
    %59 = arith.maximumf %57, %58 : vector<2x368xf32>
    %c0_50 = arith.constant 0 : index
    %c1_51 = arith.constant 1 : index
    %c0_52 = arith.constant 0 : index
    %60 = vector.load %arg10[%c0_50, %c1_51, %c0_52] : memref<2x12x368xf32, #tpu.memory_space<vmem>>, vector<2x1x368xf32>
    %61 = vector.shape_cast %60 : vector<2x1x368xf32> to vector<2x368xf32>
    %62 = vector.shape_cast %59 : vector<2x368xf32> to vector<2x1x368xf32>
    tpu.vector_store %arg10[%c0_50, %c1_51, %c0_52], %62 {strides = array<i32>} : memref<2x12x368xf32, #tpu.memory_space<vmem>>, vector<2x1x368xf32>,
    %c0_53 = arith.constant 0 : index
    %c4_54 = arith.constant 4 : index
    %c0_55 = arith.constant 0 : index
    %63 = vector.load %arg9[%c0_53, %c4_54, %c0_55] : memref<2x24x384xf32, #tpu.memory_space<vmem>>, vector<2x1x384xf32>
    %64 = vector.shape_cast %63 : vector<2x1x384xf32> to vector<2x384xf32>
    %c0_56 = arith.constant 0 : index
    %c5 = arith.constant 5 : index
    %c0_57 = arith.constant 0 : index
    %65 = vector.load %arg9[%c0_56, %c5, %c0_57] : memref<2x24x384xf32, #tpu.memory_space<vmem>>, vector<2x1x384xf32>
    %66 = vector.shape_cast %65 : vector<2x1x384xf32> to vector<2x384xf32>
    %67 = arith.maximumf %64, %66 : vector<2x384xf32>
    %68 = vector.extract_strided_slice %67 {offsets = [0, 0], sizes = [2, 368], strides = [1, 1]} : vector<2x384xf32> to vector<2x368xf32>
    %69 = vector.extract_strided_slice %67 {offsets = [0, 16], sizes = [2, 368], strides = [1, 1]} : vector<2x384xf32> to vector<2x368xf32>
    %70 = arith.maximumf %68, %69 : vector<2x368xf32>
    %c0_58 = arith.constant 0 : index
    %c2_59 = arith.constant 2 : index
    %c0_60 = arith.constant 0 : index
    %71 = vector.load %arg10[%c0_58, %c2_59, %c0_60] : memref<2x12x368xf32, #tpu.memory_space<vmem>>, vector<2x1x368xf32>
    %72 = vector.shape_cast %71 : vector<2x1x368xf32> to vector<2x368xf32>
    %73 = vector.shape_cast %70 : vector<2x368xf32> to vector<2x1x368xf32>
    tpu.vector_store %arg10[%c0_58, %c2_59, %c0_60], %73 {strides = array<i32>} : memref<2x12x368xf32, #tpu.memory_space<vmem>>, vector<2x1x368xf32>,
    %c0_61 = arith.constant 0 : index
    %c6 = arith.constant 6 : index
    %c0_62 = arith.constant 0 : index
    %74 = vector.load %arg9[%c0_61, %c6, %c0_62] : memref<2x24x384xf32, #tpu.memory_space<vmem>>, vector<2x1x384xf32>
    %75 = vector.shape_cast %74 : vector<2x1x384xf32> to vector<2x384xf32>
    %c0_63 = arith.constant 0 : index
    %c7 = arith.constant 7 : index
    %c0_64 = arith.constant 0 : index
    %76 = vector.load %arg9[%c0_63, %c7, %c0_64] : memref<2x24x384xf32, #tpu.memory_space<vmem>>, vector<2x1x384xf32>
    %77 = vector.shape_cast %76 : vector<2x1x384xf32> to vector<2x384xf32>
    %78 = arith.maximumf %75, %77 : vector<2x384xf32>
    %79 = vector.extract_strided_slice %78 {offsets = [0, 0], sizes = [2, 368], strides = [1, 1]} : vector<2x384xf32> to vector<2x368xf32>
    %80 = vector.extract_strided_slice %78 {offsets = [0, 16], sizes = [2, 368], strides = [1, 1]} : vector<2x384xf32> to vector<2x368xf32>
    %81 = arith.maximumf %79, %80 : vector<2x368xf32>
    %c0_65 = arith.constant 0 : index
    %c3_66 = arith.constant 3 : index
    %c0_67 = arith.constant 0 : index
    %82 = vector.load %arg10[%c0_65, %c3_66, %c0_67] : memref<2x12x368xf32, #tpu.memory_space<vmem>>, vector<2x1x368xf32>
    %83 = vector.shape_cast %82 : vector<2x1x368xf32> to vector<2x368xf32>
    %84 = vector.shape_cast %81 : vector<2x368xf32> to vector<2x1x368xf32>
    tpu.vector_store %arg10[%c0_65, %c3_66, %c0_67], %84 {strides = array<i32>} : memref<2x12x368xf32, #tpu.memory_space<vmem>>, vector<2x1x368xf32>,
    %c0_68 = arith.constant 0 : index
    %c8 = arith.constant 8 : index
    %c0_69 = arith.constant 0 : index
    %85 = vector.load %arg9[%c0_68, %c8, %c0_69] : memref<2x24x384xf32, #tpu.memory_space<vmem>>, vector<2x1x384xf32>
    %86 = vector.shape_cast %85 : vector<2x1x384xf32> to vector<2x384xf32>
    %c0_70 = arith.constant 0 : index
    %c9 = arith.constant 9 : index
    %c0_71 = arith.constant 0 : index
    %87 = vector.load %arg9[%c0_70, %c9, %c0_71] : memref<2x24x384xf32, #tpu.memory_space<vmem>>, vector<2x1x384xf32>
    %88 = vector.shape_cast %87 : vector<2x1x384xf32> to vector<2x384xf32>
    %89 = arith.maximumf %86, %88 : vector<2x384xf32>
    %90 = vector.extract_strided_slice %89 {offsets = [0, 0], sizes = [2, 368], strides = [1, 1]} : vector<2x384xf32> to vector<2x368xf32>
    %91 = vector.extract_strided_slice %89 {offsets = [0, 16], sizes = [2, 368], strides = [1, 1]} : vector<2x384xf32> to vector<2x368xf32>
    %92 = arith.maximumf %90, %91 : vector<2x368xf32>
    %c0_72 = arith.constant 0 : index
    %c4_73 = arith.constant 4 : index
    %c0_74 = arith.constant 0 : index
    %93 = vector.load %arg10[%c0_72, %c4_73, %c0_74] : memref<2x12x368xf32, #tpu.memory_space<vmem>>, vector<2x1x368xf32>
    %94 = vector.shape_cast %93 : vector<2x1x368xf32> to vector<2x368xf32>
    %95 = vector.shape_cast %92 : vector<2x368xf32> to vector<2x1x368xf32>
    tpu.vector_store %arg10[%c0_72, %c4_73, %c0_74], %95 {strides = array<i32>} : memref<2x12x368xf32, #tpu.memory_space<vmem>>, vector<2x1x368xf32>,
    %c0_75 = arith.constant 0 : index
    %c10 = arith.constant 10 : index
    %c0_76 = arith.constant 0 : index
    %96 = vector.load %arg9[%c0_75, %c10, %c0_76] : memref<2x24x384xf32, #tpu.memory_space<vmem>>, vector<2x1x384xf32>
    %97 = vector.shape_cast %96 : vector<2x1x384xf32> to vector<2x384xf32>
    %c0_77 = arith.constant 0 : index
    %c11 = arith.constant 11 : index
    %c0_78 = arith.constant 0 : index
    %98 = vector.load %arg9[%c0_77, %c11, %c0_78] : memref<2x24x384xf32, #tpu.memory_space<vmem>>, vector<2x1x384xf32>
    %99 = vector.shape_cast %98 : vector<2x1x384xf32> to vector<2x384xf32>
    %100 = arith.maximumf %97, %99 : vector<2x384xf32>
    %101 = vector.extract_strided_slice %100 {offsets = [0, 0], sizes = [2, 368], strides = [1, 1]} : vector<2x384xf32> to vector<2x368xf32>
    %102 = vector.extract_strided_slice %100 {offsets = [0, 16], sizes = [2, 368], strides = [1, 1]} : vector<2x384xf32> to vector<2x368xf32>
    %103 = arith.maximumf %101, %102 : vector<2x368xf32>
    %c0_79 = arith.constant 0 : index
    %c5_80 = arith.constant 5 : index
    %c0_81 = arith.constant 0 : index
    %104 = vector.load %arg10[%c0_79, %c5_80, %c0_81] : memref<2x12x368xf32, #tpu.memory_space<vmem>>, vector<2x1x368xf32>
    %105 = vector.shape_cast %104 : vector<2x1x368xf32> to vector<2x368xf32>
    %106 = vector.shape_cast %103 : vector<2x368xf32> to vector<2x1x368xf32>
    tpu.vector_store %arg10[%c0_79, %c5_80, %c0_81], %106 {strides = array<i32>} : memref<2x12x368xf32, #tpu.memory_space<vmem>>, vector<2x1x368xf32>,
    %c0_82 = arith.constant 0 : index
    %c12 = arith.constant 12 : index
    %c0_83 = arith.constant 0 : index
    %107 = vector.load %arg9[%c0_82, %c12, %c0_83] : memref<2x24x384xf32, #tpu.memory_space<vmem>>, vector<2x1x384xf32>
    %108 = vector.shape_cast %107 : vector<2x1x384xf32> to vector<2x384xf32>
    %c0_84 = arith.constant 0 : index
    %c13 = arith.constant 13 : index
    %c0_85 = arith.constant 0 : index
    %109 = vector.load %arg9[%c0_84, %c13, %c0_85] : memref<2x24x384xf32, #tpu.memory_space<vmem>>, vector<2x1x384xf32>
    %110 = vector.shape_cast %109 : vector<2x1x384xf32> to vector<2x384xf32>
    %111 = arith.maximumf %108, %110 : vector<2x384xf32>
    %112 = vector.extract_strided_slice %111 {offsets = [0, 0], sizes = [2, 368], strides = [1, 1]} : vector<2x384xf32> to vector<2x368xf32>
    %113 = vector.extract_strided_slice %111 {offsets = [0, 16], sizes = [2, 368], strides = [1, 1]} : vector<2x384xf32> to vector<2x368xf32>
    %114 = arith.maximumf %112, %113 : vector<2x368xf32>
    %c0_86 = arith.constant 0 : index
    %c6_87 = arith.constant 6 : index
    %c0_88 = arith.constant 0 : index
    %115 = vector.load %arg10[%c0_86, %c6_87, %c0_88] : memref<2x12x368xf32, #tpu.memory_space<vmem>>, vector<2x1x368xf32>
    %116 = vector.shape_cast %115 : vector<2x1x368xf32> to vector<2x368xf32>
    %117 = vector.shape_cast %114 : vector<2x368xf32> to vector<2x1x368xf32>
    tpu.vector_store %arg10[%c0_86, %c6_87, %c0_88], %117 {strides = array<i32>} : memref<2x12x368xf32, #tpu.memory_space<vmem>>, vector<2x1x368xf32>,
    %c0_89 = arith.constant 0 : index
    %c14 = arith.constant 14 : index
    %c0_90 = arith.constant 0 : index
    %118 = vector.load %arg9[%c0_89, %c14, %c0_90] : memref<2x24x384xf32, #tpu.memory_space<vmem>>, vector<2x1x384xf32>
    %119 = vector.shape_cast %118 : vector<2x1x384xf32> to vector<2x384xf32>
    %c0_91 = arith.constant 0 : index
    %c15 = arith.constant 15 : index
    %c0_92 = arith.constant 0 : index
    %120 = vector.load %arg9[%c0_91, %c15, %c0_92] : memref<2x24x384xf32, #tpu.memory_space<vmem>>, vector<2x1x384xf32>
    %121 = vector.shape_cast %120 : vector<2x1x384xf32> to vector<2x384xf32>
    %122 = arith.maximumf %119, %121 : vector<2x384xf32>
    %123 = vector.extract_strided_slice %122 {offsets = [0, 0], sizes = [2, 368], strides = [1, 1]} : vector<2x384xf32> to vector<2x368xf32>
    %124 = vector.extract_strided_slice %122 {offsets = [0, 16], sizes = [2, 368], strides = [1, 1]} : vector<2x384xf32> to vector<2x368xf32>
    %125 = arith.maximumf %123, %124 : vector<2x368xf32>
    %c0_93 = arith.constant 0 : index
    %c7_94 = arith.constant 7 : index
    %c0_95 = arith.constant 0 : index
    %126 = vector.load %arg10[%c0_93, %c7_94, %c0_95] : memref<2x12x368xf32, #tpu.memory_space<vmem>>, vector<2x1x368xf32>
    %127 = vector.shape_cast %126 : vector<2x1x368xf32> to vector<2x368xf32>
    %128 = vector.shape_cast %125 : vector<2x368xf32> to vector<2x1x368xf32>
    tpu.vector_store %arg10[%c0_93, %c7_94, %c0_95], %128 {strides = array<i32>} : memref<2x12x368xf32, #tpu.memory_space<vmem>>, vector<2x1x368xf32>,
    %c0_96 = arith.constant 0 : index
    %c16 = arith.constant 16 : index
    %c0_97 = arith.constant 0 : index
    %129 = vector.load %arg9[%c0_96, %c16, %c0_97] : memref<2x24x384xf32, #tpu.memory_space<vmem>>, vector<2x1x384xf32>
    %130 = vector.shape_cast %129 : vector<2x1x384xf32> to vector<2x384xf32>
    %c0_98 = arith.constant 0 : index
    %c17 = arith.constant 17 : index
    %c0_99 = arith.constant 0 : index
    %131 = vector.load %arg9[%c0_98, %c17, %c0_99] : memref<2x24x384xf32, #tpu.memory_space<vmem>>, vector<2x1x384xf32>
    %132 = vector.shape_cast %131 : vector<2x1x384xf32> to vector<2x384xf32>
    %133 = arith.maximumf %130, %132 : vector<2x384xf32>
    %134 = vector.extract_strided_slice %133 {offsets = [0, 0], sizes = [2, 368], strides = [1, 1]} : vector<2x384xf32> to vector<2x368xf32>
    %135 = vector.extract_strided_slice %133 {offsets = [0, 16], sizes = [2, 368], strides = [1, 1]} : vector<2x384xf32> to vector<2x368xf32>
    %136 = arith.maximumf %134, %135 : vector<2x368xf32>
    %c0_100 = arith.constant 0 : index
    %c8_101 = arith.constant 8 : index
    %c0_102 = arith.constant 0 : index
    %137 = vector.load %arg10[%c0_100, %c8_101, %c0_102] : memref<2x12x368xf32, #tpu.memory_space<vmem>>, vector<2x1x368xf32>
    %138 = vector.shape_cast %137 : vector<2x1x368xf32> to vector<2x368xf32>
    %139 = vector.shape_cast %136 : vector<2x368xf32> to vector<2x1x368xf32>
    tpu.vector_store %arg10[%c0_100, %c8_101, %c0_102], %139 {strides = array<i32>} : memref<2x12x368xf32, #tpu.memory_space<vmem>>, vector<2x1x368xf32>,
    %c0_103 = arith.constant 0 : index
    %c18 = arith.constant 18 : index
    %c0_104 = arith.constant 0 : index
    %140 = vector.load %arg9[%c0_103, %c18, %c0_104] : memref<2x24x384xf32, #tpu.memory_space<vmem>>, vector<2x1x384xf32>
    %141 = vector.shape_cast %140 : vector<2x1x384xf32> to vector<2x384xf32>
    %c0_105 = arith.constant 0 : index
    %c19 = arith.constant 19 : index
    %c0_106 = arith.constant 0 : index
    %142 = vector.load %arg9[%c0_105, %c19, %c0_106] : memref<2x24x384xf32, #tpu.memory_space<vmem>>, vector<2x1x384xf32>
    %143 = vector.shape_cast %142 : vector<2x1x384xf32> to vector<2x384xf32>
    %144 = arith.maximumf %141, %143 : vector<2x384xf32>
    %145 = vector.extract_strided_slice %144 {offsets = [0, 0], sizes = [2, 368], strides = [1, 1]} : vector<2x384xf32> to vector<2x368xf32>
    %146 = vector.extract_strided_slice %144 {offsets = [0, 16], sizes = [2, 368], strides = [1, 1]} : vector<2x384xf32> to vector<2x368xf32>
    %147 = arith.maximumf %145, %146 : vector<2x368xf32>
    %c0_107 = arith.constant 0 : index
    %c9_108 = arith.constant 9 : index
    %c0_109 = arith.constant 0 : index
    %148 = vector.load %arg10[%c0_107, %c9_108, %c0_109] : memref<2x12x368xf32, #tpu.memory_space<vmem>>, vector<2x1x368xf32>
    %149 = vector.shape_cast %148 : vector<2x1x368xf32> to vector<2x368xf32>
    %150 = vector.shape_cast %147 : vector<2x368xf32> to vector<2x1x368xf32>
    tpu.vector_store %arg10[%c0_107, %c9_108, %c0_109], %150 {strides = array<i32>} : memref<2x12x368xf32, #tpu.memory_space<vmem>>, vector<2x1x368xf32>,
    %c0_110 = arith.constant 0 : index
    %c20 = arith.constant 20 : index
    %c0_111 = arith.constant 0 : index
    %151 = vector.load %arg9[%c0_110, %c20, %c0_111] : memref<2x24x384xf32, #tpu.memory_space<vmem>>, vector<2x1x384xf32>
    %152 = vector.shape_cast %151 : vector<2x1x384xf32> to vector<2x384xf32>
    %c0_112 = arith.constant 0 : index
    %c21 = arith.constant 21 : index
    %c0_113 = arith.constant 0 : index
    %153 = vector.load %arg9[%c0_112, %c21, %c0_113] : memref<2x24x384xf32, #tpu.memory_space<vmem>>, vector<2x1x384xf32>
    %154 = vector.shape_cast %153 : vector<2x1x384xf32> to vector<2x384xf32>
    %155 = arith.maximumf %152, %154 : vector<2x384xf32>
    %156 = vector.extract_strided_slice %155 {offsets = [0, 0], sizes = [2, 368], strides = [1, 1]} : vector<2x384xf32> to vector<2x368xf32>
    %157 = vector.extract_strided_slice %155 {offsets = [0, 16], sizes = [2, 368], strides = [1, 1]} : vector<2x384xf32> to vector<2x368xf32>
    %158 = arith.maximumf %156, %157 : vector<2x368xf32>
    %c0_114 = arith.constant 0 : index
    %c10_115 = arith.constant 10 : index
    %c0_116 = arith.constant 0 : index
    %159 = vector.load %arg10[%c0_114, %c10_115, %c0_116] : memref<2x12x368xf32, #tpu.memory_space<vmem>>, vector<2x1x368xf32>
    %160 = vector.shape_cast %159 : vector<2x1x368xf32> to vector<2x368xf32>
    %161 = vector.shape_cast %158 : vector<2x368xf32> to vector<2x1x368xf32>
    tpu.vector_store %arg10[%c0_114, %c10_115, %c0_116], %161 {strides = array<i32>} : memref<2x12x368xf32, #tpu.memory_space<vmem>>, vector<2x1x368xf32>,
    %c0_117 = arith.constant 0 : index
    %c22 = arith.constant 22 : index
    %c0_118 = arith.constant 0 : index
    %162 = vector.load %arg9[%c0_117, %c22, %c0_118] : memref<2x24x384xf32, #tpu.memory_space<vmem>>, vector<2x1x384xf32>
    %163 = vector.shape_cast %162 : vector<2x1x384xf32> to vector<2x384xf32>
    %c0_119 = arith.constant 0 : index
    %c23 = arith.constant 23 : index
    %c0_120 = arith.constant 0 : index
    %164 = vector.load %arg9[%c0_119, %c23, %c0_120] : memref<2x24x384xf32, #tpu.memory_space<vmem>>, vector<2x1x384xf32>
    %165 = vector.shape_cast %164 : vector<2x1x384xf32> to vector<2x384xf32>
    %166 = arith.maximumf %163, %165 : vector<2x384xf32>
    %167 = vector.extract_strided_slice %166 {offsets = [0, 0], sizes = [2, 368], strides = [1, 1]} : vector<2x384xf32> to vector<2x368xf32>
    %168 = vector.extract_strided_slice %166 {offsets = [0, 16], sizes = [2, 368], strides = [1, 1]} : vector<2x384xf32> to vector<2x368xf32>
    %169 = arith.maximumf %167, %168 : vector<2x368xf32>
    %c0_121 = arith.constant 0 : index
    %c11_122 = arith.constant 11 : index
    %c0_123 = arith.constant 0 : index
    %170 = vector.load %arg10[%c0_121, %c11_122, %c0_123] : memref<2x12x368xf32, #tpu.memory_space<vmem>>, vector<2x1x368xf32>
    %171 = vector.shape_cast %170 : vector<2x1x368xf32> to vector<2x368xf32>
    %172 = vector.shape_cast %169 : vector<2x368xf32> to vector<2x1x368xf32>
    tpu.vector_store %arg10[%c0_121, %c11_122, %c0_123], %172 {strides = array<i32>} : memref<2x12x368xf32, #tpu.memory_space<vmem>>, vector<2x1x368xf32>,
    %c0_124 = arith.constant 0 : index
    %c0_125 = arith.constant 0 : index
    %c0_126 = arith.constant 0 : index
    %173 = vector.load %arg10[%c0_124, %c0_125, %c0_126] : memref<2x12x368xf32, #tpu.memory_space<vmem>>, vector<2x8x368xf32>
    %174 = vector.shape_cast %173 : vector<2x8x368xf32> to vector<16x368xf32>
    %175 = arith.truncf %174 : vector<16x368xf32> to vector<16x368xbf16>
    %c0_127 = arith.constant 0 : index
    %c0_128 = arith.constant 0 : index
    %c0_129 = arith.constant 0 : index
    %176 = vector.load %arg4[%c0_127, %c0_128, %c0_129] : memref<5x368x256xbf16, #tpu.memory_space<vmem>>, vector<1x368x256xbf16>
    %177 = vector.shape_cast %176 : vector<1x368x256xbf16> to vector<368x256xbf16>
    %cst_130 = arith.constant dense<0.000000e+00> : vector<16x256xf32>
    %178 = tpu.matmul %175, %177, %cst_130 {dimension_numbers = #tpu.dot_dimension_numbers<[1], [0], [0], [1], [0, 0, 1, 1], [], []>} : vector<16x368xbf16>, vector<368x256xbf16>, vector<16x256xf32> -> vector<16x256xf32>
    %c0_131 = arith.constant 0 : index
    %c1_132 = arith.constant 1 : index
    %c0_133 = arith.constant 0 : index
    %179 = vector.load %arg10[%c0_131, %c1_132, %c0_133] : memref<2x12x368xf32, #tpu.memory_space<vmem>>, vector<2x8x368xf32>
    %180 = vector.shape_cast %179 : vector<2x8x368xf32> to vector<16x368xf32>
    %181 = arith.truncf %180 : vector<16x368xf32> to vector<16x368xbf16>
    %c1_134 = arith.constant 1 : index
    %c0_135 = arith.constant 0 : index
    %c0_136 = arith.constant 0 : index
    %182 = vector.load %arg4[%c1_134, %c0_135, %c0_136] : memref<5x368x256xbf16, #tpu.memory_space<vmem>>, vector<1x368x256xbf16>
    %183 = vector.shape_cast %182 : vector<1x368x256xbf16> to vector<368x256xbf16>
    %cst_137 = arith.constant dense<0.000000e+00> : vector<16x256xf32>
    %184 = tpu.matmul %181, %183, %cst_137 {dimension_numbers = #tpu.dot_dimension_numbers<[1], [0], [0], [1], [0, 0, 1, 1], [], []>} : vector<16x368xbf16>, vector<368x256xbf16>, vector<16x256xf32> -> vector<16x256xf32>
    %185 = arith.addf %178, %184 : vector<16x256xf32>
    %c0_138 = arith.constant 0 : index
    %c2_139 = arith.constant 2 : index
    %c0_140 = arith.constant 0 : index
    %186 = vector.load %arg10[%c0_138, %c2_139, %c0_140] : memref<2x12x368xf32, #tpu.memory_space<vmem>>, vector<2x8x368xf32>
    %187 = vector.shape_cast %186 : vector<2x8x368xf32> to vector<16x368xf32>
    %188 = arith.truncf %187 : vector<16x368xf32> to vector<16x368xbf16>
    %c2_141 = arith.constant 2 : index
    %c0_142 = arith.constant 0 : index
    %c0_143 = arith.constant 0 : index
    %189 = vector.load %arg4[%c2_141, %c0_142, %c0_143] : memref<5x368x256xbf16, #tpu.memory_space<vmem>>, vector<1x368x256xbf16>
    %190 = vector.shape_cast %189 : vector<1x368x256xbf16> to vector<368x256xbf16>
    %cst_144 = arith.constant dense<0.000000e+00> : vector<16x256xf32>
    %191 = tpu.matmul %188, %190, %cst_144 {dimension_numbers = #tpu.dot_dimension_numbers<[1], [0], [0], [1], [0, 0, 1, 1], [], []>} : vector<16x368xbf16>, vector<368x256xbf16>, vector<16x256xf32> -> vector<16x256xf32>
    %192 = arith.addf %185, %191 : vector<16x256xf32>
    %c0_145 = arith.constant 0 : index
    %c3_146 = arith.constant 3 : index
    %c0_147 = arith.constant 0 : index
    %193 = vector.load %arg10[%c0_145, %c3_146, %c0_147] : memref<2x12x368xf32, #tpu.memory_space<vmem>>, vector<2x8x368xf32>
    %194 = vector.shape_cast %193 : vector<2x8x368xf32> to vector<16x368xf32>
    %195 = arith.truncf %194 : vector<16x368xf32> to vector<16x368xbf16>
    %c3_148 = arith.constant 3 : index
    %c0_149 = arith.constant 0 : index
    %c0_150 = arith.constant 0 : index
    %196 = vector.load %arg4[%c3_148, %c0_149, %c0_150] : memref<5x368x256xbf16, #tpu.memory_space<vmem>>, vector<1x368x256xbf16>
    %197 = vector.shape_cast %196 : vector<1x368x256xbf16> to vector<368x256xbf16>
    %cst_151 = arith.constant dense<0.000000e+00> : vector<16x256xf32>
    %198 = tpu.matmul %195, %197, %cst_151 {dimension_numbers = #tpu.dot_dimension_numbers<[1], [0], [0], [1], [0, 0, 1, 1], [], []>} : vector<16x368xbf16>, vector<368x256xbf16>, vector<16x256xf32> -> vector<16x256xf32>
    %199 = arith.addf %192, %198 : vector<16x256xf32>
    %c0_152 = arith.constant 0 : index
    %c4_153 = arith.constant 4 : index
    %c0_154 = arith.constant 0 : index
    %200 = vector.load %arg10[%c0_152, %c4_153, %c0_154] : memref<2x12x368xf32, #tpu.memory_space<vmem>>, vector<2x8x368xf32>
    %201 = vector.shape_cast %200 : vector<2x8x368xf32> to vector<16x368xf32>
    %202 = arith.truncf %201 : vector<16x368xf32> to vector<16x368xbf16>
    %c4_155 = arith.constant 4 : index
    %c0_156 = arith.constant 0 : index
    %c0_157 = arith.constant 0 : index
    %203 = vector.load %arg4[%c4_155, %c0_156, %c0_157] : memref<5x368x256xbf16, #tpu.memory_space<vmem>>, vector<1x368x256xbf16>
    %204 = vector.shape_cast %203 : vector<1x368x256xbf16> to vector<368x256xbf16>
    %cst_158 = arith.constant dense<0.000000e+00> : vector<16x256xf32>
    %205 = tpu.matmul %202, %204, %cst_158 {dimension_numbers = #tpu.dot_dimension_numbers<[1], [0], [0], [1], [0, 0, 1, 1], [], []>} : vector<16x368xbf16>, vector<368x256xbf16>, vector<16x256xf32> -> vector<16x256xf32>
    %206 = arith.addf %199, %205 : vector<16x256xf32>
    %c0_159 = arith.constant 0 : index
    %c0_160 = arith.constant 0 : index
    %207 = vector.load %arg5[%c0_159, %c0_160] : memref<1x256xf32, #tpu.memory_space<vmem>>, vector<1x256xf32>
    %208 = vector.broadcast %207 : vector<1x256xf32> to vector<16x256xf32>
    %209 = arith.addf %206, %208 : vector<16x256xf32>
    %cst_161 = arith.constant 0.000000e+00 : f32
    %210 = vector.broadcast %cst_161 : f32 to vector<16x256xf32>
    %211 = arith.maximumf %209, %210 : vector<16x256xf32>
    %212 = vector.shape_cast %211 : vector<16x256xf32> to vector<2x8x256xf32>
    %c0_162 = arith.constant 0 : index
    %c0_163 = arith.constant 0 : index
    %c0_164 = arith.constant 0 : index
    %213 = vector.load %arg11[%c0_162, %c0_163, %c0_164] : memref<2x8x256xf32, #tpu.memory_space<vmem>>, vector<2x8x256xf32>
    tpu.vector_store %arg11[%c0_162, %c0_163, %c0_164], %212 {strides = array<i32>} : memref<2x8x256xf32, #tpu.memory_space<vmem>>, vector<2x8x256xf32>,
    %cst_165 = arith.constant 0.000000e+00 : f32
    %214 = vector.broadcast %cst_165 : f32 to vector<2x1024xf32>
    %c0_166 = arith.constant 0 : index
    %c0_167 = arith.constant 0 : index
    %215 = vector.load %arg12[%c0_166, %c0_167] : memref<2x1024xf32, #tpu.memory_space<vmem>>, vector<2x1024xf32>
    tpu.vector_store %arg12[%c0_166, %c0_167], %214 {strides = array<i32>} : memref<2x1024xf32, #tpu.memory_space<vmem>>, vector<2x1024xf32>,
    %c0_168 = arith.constant 0 : index
    %c0_169 = arith.constant 0 : index
    %c0_170 = arith.constant 0 : index
    %216 = vector.load %arg11[%c0_168, %c0_169, %c0_170] : memref<2x8x256xf32, #tpu.memory_space<vmem>>, vector<2x1x256xf32>
    %217 = vector.shape_cast %216 : vector<2x1x256xf32> to vector<2x256xf32>
    %c0_171 = arith.constant 0 : index
    %c1_172 = arith.constant 1 : index
    %c0_173 = arith.constant 0 : index
    %218 = vector.load %arg11[%c0_171, %c1_172, %c0_173] : memref<2x8x256xf32, #tpu.memory_space<vmem>>, vector<2x1x256xf32>
    %219 = vector.shape_cast %218 : vector<2x1x256xf32> to vector<2x256xf32>
    %220 = arith.maximumf %217, %219 : vector<2x256xf32>
    %221 = vector.extract_strided_slice %220 {offsets = [0, 0], sizes = [2, 224], strides = [1, 1]} : vector<2x256xf32> to vector<2x224xf32>
    %222 = vector.extract_strided_slice %220 {offsets = [0, 32], sizes = [2, 224], strides = [1, 1]} : vector<2x256xf32> to vector<2x224xf32>
    %223 = arith.maximumf %221, %222 : vector<2x224xf32>
    %c0_174 = arith.constant 0 : index
    %c0_175 = arith.constant 0 : index
    %224 = vector.load %arg12[%c0_174, %c0_175] : memref<2x1024xf32, #tpu.memory_space<vmem>>, vector<2x224xf32>
    tpu.vector_store %arg12[%c0_174, %c0_175], %223 {strides = array<i32>} : memref<2x1024xf32, #tpu.memory_space<vmem>>, vector<2x224xf32>,
    %c0_176 = arith.constant 0 : index
    %c2_177 = arith.constant 2 : index
    %c0_178 = arith.constant 0 : index
    %225 = vector.load %arg11[%c0_176, %c2_177, %c0_178] : memref<2x8x256xf32, #tpu.memory_space<vmem>>, vector<2x1x256xf32>
    %226 = vector.shape_cast %225 : vector<2x1x256xf32> to vector<2x256xf32>
    %c0_179 = arith.constant 0 : index
    %c3_180 = arith.constant 3 : index
    %c0_181 = arith.constant 0 : index
    %227 = vector.load %arg11[%c0_179, %c3_180, %c0_181] : memref<2x8x256xf32, #tpu.memory_space<vmem>>, vector<2x1x256xf32>
    %228 = vector.shape_cast %227 : vector<2x1x256xf32> to vector<2x256xf32>
    %229 = arith.maximumf %226, %228 : vector<2x256xf32>
    %230 = vector.extract_strided_slice %229 {offsets = [0, 0], sizes = [2, 224], strides = [1, 1]} : vector<2x256xf32> to vector<2x224xf32>
    %231 = vector.extract_strided_slice %229 {offsets = [0, 32], sizes = [2, 224], strides = [1, 1]} : vector<2x256xf32> to vector<2x224xf32>
    %232 = arith.maximumf %230, %231 : vector<2x224xf32>
    %c0_182 = arith.constant 0 : index
    %c256 = arith.constant 256 : index
    %233 = vector.load %arg12[%c0_182, %c256] : memref<2x1024xf32, #tpu.memory_space<vmem>>, vector<2x224xf32>
    tpu.vector_store %arg12[%c0_182, %c256], %232 {strides = array<i32>} : memref<2x1024xf32, #tpu.memory_space<vmem>>, vector<2x224xf32>,
    %c0_183 = arith.constant 0 : index
    %c4_184 = arith.constant 4 : index
    %c0_185 = arith.constant 0 : index
    %234 = vector.load %arg11[%c0_183, %c4_184, %c0_185] : memref<2x8x256xf32, #tpu.memory_space<vmem>>, vector<2x1x256xf32>
    %235 = vector.shape_cast %234 : vector<2x1x256xf32> to vector<2x256xf32>
    %c0_186 = arith.constant 0 : index
    %c5_187 = arith.constant 5 : index
    %c0_188 = arith.constant 0 : index
    %236 = vector.load %arg11[%c0_186, %c5_187, %c0_188] : memref<2x8x256xf32, #tpu.memory_space<vmem>>, vector<2x1x256xf32>
    %237 = vector.shape_cast %236 : vector<2x1x256xf32> to vector<2x256xf32>
    %238 = arith.maximumf %235, %237 : vector<2x256xf32>
    %239 = vector.extract_strided_slice %238 {offsets = [0, 0], sizes = [2, 224], strides = [1, 1]} : vector<2x256xf32> to vector<2x224xf32>
    %240 = vector.extract_strided_slice %238 {offsets = [0, 32], sizes = [2, 224], strides = [1, 1]} : vector<2x256xf32> to vector<2x224xf32>
    %241 = arith.maximumf %239, %240 : vector<2x224xf32>
    %c0_189 = arith.constant 0 : index
    %c512 = arith.constant 512 : index
    %242 = vector.load %arg12[%c0_189, %c512] : memref<2x1024xf32, #tpu.memory_space<vmem>>, vector<2x224xf32>
    tpu.vector_store %arg12[%c0_189, %c512], %241 {strides = array<i32>} : memref<2x1024xf32, #tpu.memory_space<vmem>>, vector<2x224xf32>,
    %c0_190 = arith.constant 0 : index
    %c6_191 = arith.constant 6 : index
    %c0_192 = arith.constant 0 : index
    %243 = vector.load %arg11[%c0_190, %c6_191, %c0_192] : memref<2x8x256xf32, #tpu.memory_space<vmem>>, vector<2x1x256xf32>
    %244 = vector.shape_cast %243 : vector<2x1x256xf32> to vector<2x256xf32>
    %c0_193 = arith.constant 0 : index
    %c7_194 = arith.constant 7 : index
    %c0_195 = arith.constant 0 : index
    %245 = vector.load %arg11[%c0_193, %c7_194, %c0_195] : memref<2x8x256xf32, #tpu.memory_space<vmem>>, vector<2x1x256xf32>
    %246 = vector.shape_cast %245 : vector<2x1x256xf32> to vector<2x256xf32>
    %247 = arith.maximumf %244, %246 : vector<2x256xf32>
    %248 = vector.extract_strided_slice %247 {offsets = [0, 0], sizes = [2, 224], strides = [1, 1]} : vector<2x256xf32> to vector<2x224xf32>
    %249 = vector.extract_strided_slice %247 {offsets = [0, 32], sizes = [2, 224], strides = [1, 1]} : vector<2x256xf32> to vector<2x224xf32>
    %250 = arith.maximumf %248, %249 : vector<2x224xf32>
    %c0_196 = arith.constant 0 : index
    %c768 = arith.constant 768 : index
    %251 = vector.load %arg12[%c0_196, %c768] : memref<2x1024xf32, #tpu.memory_space<vmem>>, vector<2x224xf32>
    tpu.vector_store %arg12[%c0_196, %c768], %250 {strides = array<i32>} : memref<2x1024xf32, #tpu.memory_space<vmem>>, vector<2x224xf32>,
    %c0_197 = arith.constant 0 : index
    %c0_198 = arith.constant 0 : index
    %252 = vector.load %arg12[%c0_197, %c0_198] : memref<2x1024xf32, #tpu.memory_space<vmem>>, vector<2x1024xf32>
    %253 = arith.truncf %252 : vector<2x1024xf32> to vector<2x1024xbf16>
    %c0_199 = arith.constant 0 : index
    %c0_200 = arith.constant 0 : index
    %254 = vector.load %arg6[%c0_199, %c0_200] : memref<1024x128xbf16, #tpu.memory_space<vmem>>, vector<1024x128xbf16>
    %cst_201 = arith.constant dense<0.000000e+00> : vector<2x128xf32>
    %255 = tpu.matmul %253, %254, %cst_201 {dimension_numbers = #tpu.dot_dimension_numbers<[1], [0], [0], [1], [0, 0, 1, 1], [], []>} : vector<2x1024xbf16>, vector<1024x128xbf16>, vector<2x128xf32> -> vector<2x128xf32>
    %c0_202 = arith.constant 0 : index
    %c0_203 = arith.constant 0 : index
    %256 = vector.load %arg7[%c0_202, %c0_203] : memref<1x128xf32, #tpu.memory_space<vmem>>, vector<1x128xf32>
    %257 = vector.broadcast %256 : vector<1x128xf32> to vector<2x128xf32>
    %258 = arith.addf %255, %257 : vector<2x128xf32>
    %c0_204 = arith.constant 0 : index
    %c0_205 = arith.constant 0 : index
    %259 = vector.load %arg8[%c0_204, %c0_205] : memref<2x128xf32, #tpu.memory_space<vmem>>, vector<2x128xf32>
    tpu.vector_store %arg8[%c0_204, %c0_205], %258 {strides = array<i32>} : memref<2x128xf32, #tpu.memory_space<vmem>>, vector<2x128xf32>,
    return
  }
  func.func @transform_0(%arg0: i32) -> (i32, i32, i32) {
    %c0_i32 = arith.constant 0 : i32
    %c0_i32_0 = arith.constant 0 : i32
    %c0_i32_1 = arith.constant 0 : i32
    return %arg0, %c0_i32, %c0_i32_0 : i32, i32, i32
  }
  func.func @transform_1(%arg0: i32) -> (i32, i32, i32) {
    %c0_i32 = arith.constant 0 : i32
    %c0_i32_0 = arith.constant 0 : i32
    %c0_i32_1 = arith.constant 0 : i32
    %c0_i32_2 = arith.constant 0 : i32
    return %c0_i32, %c0_i32_0, %c0_i32_1 : i32, i32, i32
  }
  func.func @transform_2(%arg0: i32) -> (i32, i32) {
    %c0_i32 = arith.constant 0 : i32
    %c0_i32_0 = arith.constant 0 : i32
    %c0_i32_1 = arith.constant 0 : i32
    return %c0_i32, %c0_i32_0 : i32, i32
  }
  func.func @transform_3(%arg0: i32) -> (i32, i32, i32) {
    %c0_i32 = arith.constant 0 : i32
    %c0_i32_0 = arith.constant 0 : i32
    %c0_i32_1 = arith.constant 0 : i32
    %c0_i32_2 = arith.constant 0 : i32
    return %c0_i32, %c0_i32_0, %c0_i32_1 : i32, i32, i32
  }
  func.func @transform_4(%arg0: i32) -> (i32, i32) {
    %c0_i32 = arith.constant 0 : i32
    %c0_i32_0 = arith.constant 0 : i32
    %c0_i32_1 = arith.constant 0 : i32
    return %c0_i32, %c0_i32_0 : i32, i32
  }
  func.func @transform_5(%arg0: i32) -> (i32, i32) {
    %c0_i32 = arith.constant 0 : i32
    %c0_i32_0 = arith.constant 0 : i32
    %c0_i32_1 = arith.constant 0 : i32
    return %c0_i32, %c0_i32_0 : i32, i32
  }
  func.func @transform_6(%arg0: i32) -> (i32, i32) {
    %c0_i32 = arith.constant 0 : i32
    %c0_i32_0 = arith.constant 0 : i32
    %c0_i32_1 = arith.constant 0 : i32
    return %c0_i32, %c0_i32_0 : i32, i32
  }
  func.func @transform_7(%arg0: i32) -> (i32, i32) {
    %c0_i32 = arith.constant 0 : i32
    %c0_i32_0 = arith.constant 0 : i32
    return %arg0, %c0_i32 : i32, i32
  }
}

</mosaic_0001>

<llo_original>
// kernel: tile.13
$region0: #{tile.13}
  #allocation0 [shape = 's32[1]{0}', space=sflag, size = 0x4, scoped, tag = 'scoped memory for tile.13']
  %s0 = inlined_call_operand.vmem [shape: f32[16], index: 0, kind: input, shape index: {}]
  %s1 = inlined_call_operand.vmem [shape: f32[24,16], index: 1, kind: output, shape index: {}]
  // Predicated region
  $region2: #{tile.13} parent=0 // pred_check
    _
  $region3: #{tile.13} parent=0 // pred_check_branch
    %3 = sbr.rel (0) target = $region5
  $region4: #{tile.13} parent=0 // pred_region
    _
  $region5: #{tile.13} parent=0 // pred_fallthru
    _
  %v4 = vld [vmem:[%s0] ss:$0 sm:$0xff]
  %5 = vst [vmem:[%s1] sm:$0xff] %v4
  %s6 = scalar_lea.vmem %s1, 8
  %7 = vst [vmem:[%s6] sm:$0xff] %v4
  %s8 = scalar_lea.vmem %s1, 16
  %9 = vst [vmem:[%s8] sm:$0xff] %v4

// kernel: tile.14
$region0: #{tile.14}
  %s0 = inlined_call_operand.vmem [shape: f32[24,16], index: 0, kind: input, shape index: {}]
  %s1 = inlined_call_operand.vmem [shape: f32[1,384], index: 1, kind: output, shape index: {}]
  $region1: #{tile.14} parent=0
    #allocation0 [shape = 'u8[12288]{0}', space=vmem, size = 0x3000, scoped, tag = 'scoped mem for output reshape']
    %v2 = vld [vmem:[%s0] ss:$8 sm:$0x7]
    %vm3 = vcmask 130048
    %4 = vst.msk [vmem:[#allocation0] ss:$8 sm:$0x7] %vm3, %v2
    %s5 = scalar_lea.vmem %s0, 7
    %v6 = vld [vmem:[%s5] ss:$8 sm:$0x7]
    %7 = vrot.lane.b32.xlu0 %v6, 112
    %v8 = vpop.permute.xlu0 %7
    %vm9 = vcmask 1048448
    %10 = vst.msk [vmem:[#allocation0] ss:$8 sm:$0x7] %vm9, %v8
    %s11 = scalar_lea.vmem %s0, 6
    %v12 = vld [vmem:[%s11] ss:$8 sm:$0x7]
    %13 = vrot.lane.b32.xlu0 %v12, 96
    %v14 = vpop.permute.xlu0 %13
    %vm15 = vcmask 917248
    %16 = vst.msk [vmem:[#allocation0] ss:$8 sm:$0x7] %vm15, %v14
    %s17 = scalar_lea.vmem %s0, 5
    %v18 = vld [vmem:[%s17] ss:$8 sm:$0x7]
    %19 = vrot.lane.b32.xlu0 %v18, 80
    %v20 = vpop.permute.xlu0 %19
    %vm21 = vcmask 786048
    %22 = vst.msk [vmem:[#allocation0] ss:$8 sm:$0x7] %vm21, %v20
    %s23 = scalar_lea.vmem %s0, 4
    %v24 = vld [vmem:[%s23] ss:$8 sm:$0x7]
    %25 = vrot.lane.b32.xlu0 %v24, 64
    %v26 = vpop.permute.xlu0 %25
    %vm27 = vcmask 654848
    %28 = vst.msk [vmem:[#allocation0] ss:$8 sm:$0x7] %vm27, %v26
    %s29 = scalar_lea.vmem %s0, 3
    %v30 = vld [vmem:[%s29] ss:$8 sm:$0x7]
    %31 = vrot.lane.b32.xlu0 %v30, 48
    %v32 = vpop.permute.xlu0 %31
    %vm33 = vcmask 523648
    %34 = vst.msk [vmem:[#allocation0] ss:$8 sm:$0x7] %vm33, %v32
    %s35 = scalar_lea.vmem %s0, 2
    %v36 = vld [vmem:[%s35] ss:$8 sm:$0x7]
    %37 = vrot.lane.b32.xlu0 %v36, 32
    %v38 = vpop.permute.xlu0 %37
    %vm39 = vcmask 392448
    %40 = vst.msk [vmem:[#allocation0] ss:$8 sm:$0x7] %vm39, %v38
    %s41 = scalar_lea.vmem %s0, 1
    %v42 = vld [vmem:[%s41] ss:$8 sm:$0x7]
    %43 = vrot.lane.b32.xlu0 %v42, 16
    %v44 = vpop.permute.xlu0 %43
    %vm45 = vcmask 261248
    %46 = vst.msk [vmem:[#allocation0] ss:$8 sm:$0x7] %vm45, %v44
    %s48 = sshll.u32 1, 1
    %s49 = ssub.s32 %s48, 1
    %v51 = vld [vmem:[#allocation0] sm:%s49]
    %s52 = sshll.u32 1, 1
    %s53 = ssub.s32 %s52, 1
    %54 = vst [vmem:[%s1] sm:%s53] %v51
    %s55 = scalar_lea.vmem [#allocation0], 8
    %v56 = vld [vmem:[%s55] sm:%s49]
    %s57 = sshll.u32 1, 1
    %s58 = ssub.s32 %s57, 1
    %s59 = scalar_lea.vmem %s1, 1
    %60 = vst [vmem:[%s59] sm:%s58] %v56
    %s61 = scalar_lea.vmem [#allocation0], 16
    %v62 = vld [vmem:[%s61] sm:%s49]
    %s63 = sshll.u32 1, 1
    %s64 = ssub.s32 %s63, 1
    %s65 = smul.addr 1, 2
    %s66 = scalar_lea.vmem %s1, %s65
    %67 = vst [vmem:[%s66] sm:%s64] %v62

// kernel: tile.18
$region0: #{tile.18}
  #allocation0 [shape = 's32[1]{0}', space=sflag, size = 0x4, scoped, tag = 'scoped memory for tile.18']
  %s0 = inlined_call_operand.vmem [shape: f32[32], index: 0, kind: input, shape index: {}]
  %s1 = inlined_call_operand.vmem [shape: f32[8,32], index: 1, kind: output, shape index: {}]
  // Predicated region
  $region2: #{tile.18} parent=0 // pred_check
    _
  $region3: #{tile.18} parent=0 // pred_check_branch
    %3 = sbr.rel (0) target = $region5
  $region4: #{tile.18} parent=0 // pred_region
    _
  $region5: #{tile.18} parent=0 // pred_fallthru
    _
  %v4 = vld [vmem:[%s0] ss:$0 sm:$0xff]
  %5 = vst [vmem:[%s1] sm:$0xff] %v4

// kernel: tile.19
$region0: #{tile.19}
  %s0 = inlined_call_operand.vmem [shape: f32[8,32], index: 0, kind: input, shape index: {}]
  %s1 = inlined_call_operand.vmem [shape: f32[1,256], index: 1, kind: output, shape index: {}]
  $region1: #{tile.19} parent=0
    #allocation0 [shape = 'u8[8192]{0}', space=vmem, size = 0x2000, scoped, tag = 'scoped mem for output reshape']
    %s2 = smov 3
    %v3 = vld [vmem:[%s0] ss:$4 sm:%s2]
    %vm4 = vcmask 261120
    %5 = vst.msk [vmem:[#allocation0] ss:$8 sm:$0x3] %vm4, %v3
    %s6 = scalar_lea.vmem %s0, 3
    %s7 = smov 3
    %v8 = vld [vmem:[%s6] ss:$4 sm:%s7]
    %9 = vrot.lane.b32.xlu0 %v8, 96
    %v10 = vpop.permute.xlu0 %9
    %vm11 = vcmask 1048320
    %12 = vst.msk [vmem:[#allocation0] ss:$8 sm:$0x3] %vm11, %v10
    %s13 = scalar_lea.vmem %s0, 2
    %s14 = smov 3
    %v15 = vld [vmem:[%s13] ss:$4 sm:%s14]
    %16 = vrot.lane.b32.xlu0 %v15, 64
    %v17 = vpop.permute.xlu0 %16
    %vm18 = vcmask 785920
    %19 = vst.msk [vmem:[#allocation0] ss:$8 sm:$0x3] %vm18, %v17
    %s20 = scalar_lea.vmem %s0, 1
    %s21 = smov 3
    %v22 = vld [vmem:[%s20] ss:$4 sm:%s21]
    %23 = vrot.lane.b32.xlu0 %v22, 32
    %v24 = vpop.permute.xlu0 %23
    %vm25 = vcmask 523520
    %26 = vst.msk [vmem:[#allocation0] ss:$8 sm:$0x3] %vm25, %v24
    %s28 = sshll.u32 1, 1
    %s29 = ssub.s32 %s28, 1
    %v31 = vld [vmem:[#allocation0] sm:%s29]
    %s32 = sshll.u32 1, 1
    %s33 = ssub.s32 %s32, 1
    %34 = vst [vmem:[%s1] sm:%s33] %v31
    %s35 = scalar_lea.vmem [#allocation0], 8
    %v36 = vld [vmem:[%s35] sm:%s29]
    %s37 = sshll.u32 1, 1
    %s38 = ssub.s32 %s37, 1
    %s39 = scalar_lea.vmem %s1, 1
    %40 = vst [vmem:[%s39] sm:%s38] %v36

// kernel: cnn_forward.1
$region0: #{cnn_forward.1}
  #allocation0 [shape = 'u32[]', space=smem, size = 0x4, offset = 0x4, fixed_abs, tag = 'smem constant byte address 0x4 - core index']
  #allocation1 [shape = 'u32[144,128]{1,0:T(1,128)}', space=vmem, size = 0x12000, scoped, tag = 'internal scratch']
  #allocation2 [shape = 'f32[2,24,384]{2,1,0:T(8,128)}', space=vmem, size = 0x12000, scoped, tag = 'scratch operand']
  #allocation3 [shape = 'f32[2,12,368]{2,1,0:T(8,128)}', space=vmem, size = 0xc000, scoped, tag = 'scratch operand']
  #allocation4 [shape = 'f32[2,8,256]{2,1,0:T(8,128)}', space=vmem, size = 0x4000, scoped, tag = 'scratch operand']
  #allocation5 [shape = 'f32[2,1024]{1,0:T(2,128)}', space=vmem, size = 0x2000, scoped, tag = 'scratch operand']
  %s0 = inlined_call_operand.vmem [shape: f32[2,28,28], index: 0, kind: input, shape index: {}]
  %s1 = inlined_call_operand.vmem [shape: bf16[5,28,384], index: 1, kind: input, shape index: {}]
  %s2 = inlined_call_operand.vmem [shape: f32[1,384], index: 2, kind: input, shape index: {}]
  %s3 = inlined_call_operand.vmem [shape: bf16[5,368,256], index: 3, kind: input, shape index: {}]
  %s4 = inlined_call_operand.vmem [shape: f32[1,256], index: 4, kind: input, shape index: {}]
  %s5 = inlined_call_operand.vmem [shape: bf16[1024,128], index: 5, kind: input, shape index: {}]
  %s6 = inlined_call_operand.vmem [shape: f32[1,128], index: 6, kind: input, shape index: {}]
  %s7 = inlined_call_operand.hbm [shape: f32[2,128], index: 7, kind: output, shape index: {}]
  %s8 = sld [smem:[#allocation0]]
  $region38: #{cnn_forward.1} parent=0
    _
  %s10 = ssub.s32 1, %s8
  %s11 = scalar_select 0, %s10, %s8
  $region1: #{cnn_forward.1} parent=0
    #allocation6 [shape = 'u8[1024]{0}', space=vmem, size = 0x400, scoped, tag = 'output window, operand 0, single buffered']
    #allocation7 [shape = 's32[1]{0}', space=sflag, size = 0x4, scoped, tag = 'scoped memory for cnn_forward.1']
    %12 = vsyncpa [#allocation7], 0
    // Predicated region
    $region2: #{cnn_forward.1} parent=1 // pred_check
      _
    $region3: #{cnn_forward.1} parent=1 // pred_check_branch
      %14 = sbr.rel (0) target = $region5
    $region4: #{cnn_forward.1} parent=1 // pred_region
      _
    $region5: #{cnn_forward.1} parent=1 // pred_fallthru
      _
    // Predicated region
    $region6: #{cnn_forward.1} parent=1 // pred_check
      _
    $region7: #{cnn_forward.1} parent=1 // pred_check_branch
      %16 = sbr.rel (0) target = $region9
    $region8: #{cnn_forward.1} parent=1 // pred_region
      _
    $region9: #{cnn_forward.1} parent=1 // pred_fallthru
      _
    // Predicated region
    $region10: #{cnn_forward.1} parent=1 // pred_check
      _
    $region11: #{cnn_forward.1} parent=1 // pred_check_branch
      %18 = sbr.rel (0) target = $region13
    $region12: #{cnn_forward.1} parent=1 // pred_region
      _
    $region13: #{cnn_forward.1} parent=1 // pred_fallthru
      _
    // Predicated region
    $region14: #{cnn_forward.1} parent=1 // pred_check
      _
    $region15: #{cnn_forward.1} parent=1 // pred_check_branch
      %20 = sbr.rel (0) target = $region17
    $region16: #{cnn_forward.1} parent=1 // pred_region
      _
    $region17: #{cnn_forward.1} parent=1 // pred_fallthru
      _
    // Predicated region
    $region18: #{cnn_forward.1} parent=1 // pred_check
      _
    $region19: #{cnn_forward.1} parent=1 // pred_check_branch
      %22 = sbr.rel (0) target = $region21
    $region20: #{cnn_forward.1} parent=1 // pred_region
      _
    $region21: #{cnn_forward.1} parent=1 // pred_fallthru
      _
    // Predicated region
    $region22: #{cnn_forward.1} parent=1 // pred_check
      _
    $region23: #{cnn_forward.1} parent=1 // pred_check_branch
      %24 = sbr.rel (0) target = $region25
    $region24: #{cnn_forward.1} parent=1 // pred_region
      _
    $region25: #{cnn_forward.1} parent=1 // pred_fallthru
      _
    // Predicated region
    $region26: #{cnn_forward.1} parent=1 // pred_check
      _
    $region27: #{cnn_forward.1} parent=1 // pred_check_branch
      %26 = sbr.rel (0) target = $region29
    $region28: #{cnn_forward.1} parent=1 // pred_region
      _
    $region29: #{cnn_forward.1} parent=1 // pred_fallthru
      _
    %v28 = vld [vmem:[%s0] sm:$0xff]
    %v29 = vld [vmem:[%s0 + $0x8] sm:$0xff]
    %v30 = vld [vmem:[%s0 + $0x10] sm:$0xff]
    %v31 = vld [vmem:[%s0 + $0x20] sm:$0xff]
    %v32 = vld [vmem:[%s0 + $0x28] sm:$0xff]
    %v33 = vld [vmem:[%s0 + $0x30] sm:$0xff]
    %v34 = vpack.c.bf16 %v29, %v28
    %v35 = vpack.c.bf16 %v31, %v30
    %v36 = vpack.c.bf16 %v33, %v32
    %v37 = vld [vmem:[%s1] sm:$0xff]
    %v38 = vld [vmem:[%s1 + $0x8] sm:$0xf]
    %v39 = vld [vmem:[%s1 + $0xc] sm:$0xff]
    %v40 = vld [vmem:[%s1 + $0x14] sm:$0xf]
    %v41 = vld [vmem:[%s1 + $0x18] sm:$0xff]
    %v42 = vld [vmem:[%s1 + $0x20] sm:$0xf]
    %v43 = vld [vmem:[%s1 + $0x24] sm:$0x33]
    %v44 = vld [vmem:[%s1 + $0x2c] sm:$0x3]
    %v45 = vld [vmem:[%s0 + $0x1] sm:$0xff]
    %v46 = vld [vmem:[%s0 + $0x9] sm:$0xff]
    %v47 = vld [vmem:[%s0 + $0x11] sm:$0xff]
    %v48 = vld [vmem:[%s0 + $0x21] sm:$0xff]
    %v49 = vld [vmem:[%s0 + $0x29] sm:$0xff]
    %v50 = vld [vmem:[%s0 + $0x31] sm:$0xff]
    %v51 = vpack.c.bf16 %v46, %v45
    %v52 = vpack.c.bf16 %v48, %v47
    %v53 = vpack.c.bf16 %v50, %v49
    %s54 = scalar_lea.vmem %s1, 48
    %v55 = vld [vmem:[%s54] sm:$0xff]
    %v56 = vld [vmem:[%s54 + $0x8] sm:$0xf]
    %v57 = vld [vmem:[%s54 + $0xc] sm:$0xff]
    %v58 = vld [vmem:[%s54 + $0x14] sm:$0xf]
    %v59 = vld [vmem:[%s54 + $0x18] sm:$0xff]
    %v60 = vld [vmem:[%s54 + $0x20] sm:$0xf]
    %v61 = vld [vmem:[%s54 + $0x24] sm:$0x33]
    %v62 = vld [vmem:[%s54 + $0x2c] sm:$0x3]
    %v71 = vunpack.c.l.b16 %v55
    %v72 = vunpack.c.h.b16 %v55
    %v73 = vunpack.c.l.b16 %v56
    %v74 = vunpack.c.l.b16 %v57
    %v75 = vunpack.c.h.b16 %v57
    %v76 = vunpack.c.l.b16 %v58
    %v77 = vunpack.c.l.b16 %v59
    %v78 = vunpack.c.h.b16 %v59
    %v79 = vunpack.c.l.b16 %v60
    %v80 = vunpack.c.l.b16 %v61
    %v81 = vunpack.c.h.b16 %v61
    %v82 = vunpack.c.l.b16 %v62
    %v83 = vpack.c.b16 %v74, %v71
    %v84 = vpack.c.b16 %v75, %v72
    %v85 = vpack.c.b16 %v76, %v73
    %v86 = vpack.c.b16 %v80, %v77
    %v87 = vpack.c.b16 %v81, %v78
    %v88 = vpack.c.b16 %v82, %v79
    %vm92 = vcmask 228352
    %v94 = vsel %vm92, %v51, 0
    %v97 = vsel %vm92, %v52, 0
    %v100 = vsel %vm92, %v53, 0
    %vm102 = vcmask 1045504
    %v104 = vsel %vm102, %v86, 0
    %v107 = vsel %vm102, %v87, 0
    %v110 = vsel %vm102, %v88, 0
    %112 = vmatprep.subr.bf16.mxu0 0
    %113 = vmatpush1.bf16.msra.mxu0 0
    %114 = vmatprep.subr.bf16.mxu0 0
    %115 = vmatpush1.bf16.msra.mxu0 0
    %116 = vmatprep.subr.bf16.mxu0 0
    %117 = vmatpush1.bf16.msra.mxu0 0
    %118 = vmatprep.subr.bf16.mxu0 0
    %119 = vmatpush1.bf16.msra.mxu0 0
    %120 = vmatprep.subr.bf16.mxu0 0
    %121 = vmatpush1.bf16.msra.mxu0 0
    %122 = vmatprep.subr.bf16.mxu0 0
    %123 = vmatpush1.bf16.msra.mxu0 0
    %124 = vmatprep.subr.bf16.mxu0 %v107
    %125 = vmatpush1.bf16.msra.mxu0 %v104
    %126 = vmatprep.subr.bf16.mxu0 %v84
    %127 = vmatpush1.bf16.msra.mxu0 %v83
    %128 = vmatprep.subr.bf16.mxu0 0
    %129 = vmatpush2.bf16.msra.mxu0 0
    %130 = vmatprep.subr.bf16.mxu0 0
    %131 = vmatpush2.bf16.msra.mxu0 0
    %132 = vmatprep.subr.bf16.mxu0 0
    %133 = vmatpush2.bf16.msra.mxu0 0
    %134 = vmatprep.subr.bf16.mxu0 0
    %135 = vmatpush2.bf16.msra.mxu0 0
    %136 = vmatprep.subr.bf16.mxu0 0
    %137 = vmatpush2.bf16.msra.mxu0 0
    %138 = vmatprep.subr.bf16.mxu0 0
    %139 = vmatpush2.bf16.msra.mxu0 0
    %140 = vmatprep.subr.bf16.mxu0 0
    %141 = vmatpush2.bf16.msra.mxu0 0
    %142 = vmatprep.subr.bf16.mxu0 0
    %143 = vmatpush2.bf16.msra.mxu0 0
    %144 = vmatprep.mubr.bf16.mxu0 0
    %145 = vmatmul.mubr.bf16.gmra.mxu0 %v94
    %v146 = vpop.f32.mrf.mxu0
    %v147 = vadd.f32 0.0, %v146
    %v148 = vpop.f32.mrf.mxu0
    %v149 = vadd.f32 0.0, %v148
    %v150 = vpop.f32.mrf.mxu0
    %v151 = vadd.f32 0.0, %v150
    %v152 = vpop.f32.mrf.mxu0
    %v153 = vadd.f32 0.0, %v152
    %154 = vmatprep.mubr.bf16.mxu0 0
    %155 = vmatmul.mubr.bf16.gmra.mxu0 %v97
    %v156 = vpop.f32.mrf.mxu0
    %v157 = vadd.f32 0.0, %v156
    %v158 = vpop.f32.mrf.mxu0
    %v159 = vadd.f32 0.0, %v158
    %v160 = vpop.f32.mrf.mxu0
    %v161 = vadd.f32 0.0, %v160
    %v162 = vpop.f32.mrf.mxu0
    %v163 = vadd.f32 0.0, %v162
    %164 = vmatprep.mubr.bf16.mxu0 0
    %165 = vmatmul.mubr.bf16.gmra.mxu0 %v100
    %v166 = vpop.f32.mrf.mxu0
    %v167 = vadd.f32 0.0, %v166
    %v168 = vpop.f32.mrf.mxu0
    %v169 = vadd.f32 0.0, %v168
    %v170 = vpop.f32.mrf.mxu0
    %v171 = vadd.f32 0.0, %v170
    %v172 = vpop.f32.mrf.mxu0
    %v173 = vadd.f32 0.0, %v172
    %174 = vdwg.mxu0
    %175 = vmatprep.subr.bf16.mxu0 0
    %176 = vmatpush1.bf16.msra.mxu0 0
    %177 = vmatprep.subr.bf16.mxu0 0
    %178 = vmatpush1.bf16.msra.mxu0 0
    %179 = vmatprep.subr.bf16.mxu0 0
    %180 = vmatpush1.bf16.msra.mxu0 0
    %181 = vmatprep.subr.bf16.mxu0 0
    %182 = vmatpush1.bf16.msra.mxu0 0
    %183 = vmatprep.subr.bf16.mxu0 0
    %184 = vmatpush1.bf16.msra.mxu0 0
    %185 = vmatprep.subr.bf16.mxu0 0
    %186 = vmatpush1.bf16.msra.mxu0 0
    %187 = vmatprep.subr.bf16.mxu0 0
    %188 = vmatpush1.bf16.msra.mxu0 %v110
    %189 = vmatprep.subr.bf16.mxu0 0
    %190 = vmatpush1.bf16.msra.mxu0 %v85
    %191 = vmatprep.subr.bf16.mxu0 0
    %192 = vmatpush2.bf16.msra.mxu0 0
    %193 = vmatprep.subr.bf16.mxu0 0
    %194 = vmatpush2.bf16.msra.mxu0 0
    %195 = vmatprep.subr.bf16.mxu0 0
    %196 = vmatpush2.bf16.msra.mxu0 0
    %197 = vmatprep.subr.bf16.mxu0 0
    %198 = vmatpush2.bf16.msra.mxu0 0
    %199 = vmatprep.subr.bf16.mxu0 0
    %200 = vmatpush2.bf16.msra.mxu0 0
    %201 = vmatprep.subr.bf16.mxu0 0
    %202 = vmatpush2.bf16.msra.mxu0 0
    %203 = vmatprep.subr.bf16.mxu0 0
    %204 = vmatpush2.bf16.msra.mxu0 0
    %205 = vmatprep.subr.bf16.mxu0 0
    %206 = vmatpush2.bf16.msra.mxu0 0
    %207 = vmatprep.mubr.bf16.mxu0 0
    %208 = vmatmul.mubr.bf16.gmra.mxu0 %v94
    %v209 = vpop.f32.mrf.mxu0
    %v210 = vadd.f32 0.0, %v209
    %v211 = vpop.f32.mrf.mxu0
    %v212 = vpop.f32.mrf.mxu0
    %v213 = vadd.f32 0.0, %v212
    %v214 = vpop.f32.mrf.mxu0
    %215 = vmatprep.mubr.bf16.mxu0 0
    %216 = vmatmul.mubr.bf16.gmra.mxu0 %v97
    %v217 = vpop.f32.mrf.mxu0
    %v218 = vadd.f32 0.0, %v217
    %v219 = vpop.f32.mrf.mxu0
    %v220 = vpop.f32.mrf.mxu0
    %v221 = vadd.f32 0.0, %v220
    %v222 = vpop.f32.mrf.mxu0
    %223 = vmatprep.mubr.bf16.mxu0 0
    %224 = vmatmul.mubr.bf16.gmra.mxu0 %v100
    %v225 = vpop.f32.mrf.mxu0
    %v226 = vadd.f32 0.0, %v225
    %v227 = vpop.f32.mrf.mxu0
    %v228 = vpop.f32.mrf.mxu0
    %v229 = vadd.f32 0.0, %v228
    %v230 = vpop.f32.mrf.mxu0
    %231 = vdwg.mxu0
    %v240 = vunpack.c.l.b16 %v37
    %v241 = vunpack.c.h.b16 %v37
    %v242 = vunpack.c.l.b16 %v38
    %v243 = vunpack.c.l.b16 %v39
    %v244 = vunpack.c.h.b16 %v39
    %v245 = vunpack.c.l.b16 %v40
    %v246 = vunpack.c.l.b16 %v41
    %v247 = vunpack.c.h.b16 %v41
    %v248 = vunpack.c.l.b16 %v42
    %v249 = vunpack.c.l.b16 %v43
    %v250 = vunpack.c.h.b16 %v43
    %v251 = vunpack.c.l.b16 %v44
    %v252 = vpack.c.b16 %v243, %v240
    %v253 = vpack.c.b16 %v244, %v241
    %v254 = vpack.c.b16 %v245, %v242
    %v255 = vpack.c.b16 %v249, %v246
    %v256 = vpack.c.b16 %v250, %v247
    %v257 = vpack.c.b16 %v251, %v248
    %v262 = vsel %vm92, %v34, 0
    %v265 = vsel %vm92, %v35, 0
    %v268 = vsel %vm92, %v36, 0
    %v271 = vsel %vm102, %v255, 0
    %v274 = vsel %vm102, %v256, 0
    %v277 = vsel %vm102, %v257, 0
    %279 = vmatprep.subr.bf16.mxu0 0
    %280 = vmatpush1.bf16.msra.mxu0 0
    %281 = vmatprep.subr.bf16.mxu0 0
    %282 = vmatpush1.bf16.msra.mxu0 0
    %283 = vmatprep.subr.bf16.mxu0 0
    %284 = vmatpush1.bf16.msra.mxu0 0
    %285 = vmatprep.subr.bf16.mxu0 0
    %286 = vmatpush1.bf16.msra.mxu0 0
    %287 = vmatprep.subr.bf16.mxu0 0
    %288 = vmatpush1.bf16.msra.mxu0 0
    %289 = vmatprep.subr.bf16.mxu0 0
    %290 = vmatpush1.bf16.msra.mxu0 0
    %291 = vmatprep.subr.bf16.mxu0 %v274
    %292 = vmatpush1.bf16.msra.mxu0 %v271
    %293 = vmatprep.subr.bf16.mxu0 %v253
    %294 = vmatpush1.bf16.msra.mxu0 %v252
    %295 = vmatprep.subr.bf16.mxu0 0
    %296 = vmatpush2.bf16.msra.mxu0 0
    %297 = vmatprep.subr.bf16.mxu0 0
    %298 = vmatpush2.bf16.msra.mxu0 0
    %299 = vmatprep.subr.bf16.mxu0 0
    %300 = vmatpush2.bf16.msra.mxu0 0
    %301 = vmatprep.subr.bf16.mxu0 0
    %302 = vmatpush2.bf16.msra.mxu0 0
    %303 = vmatprep.subr.bf16.mxu0 0
    %304 = vmatpush2.bf16.msra.mxu0 0
    %305 = vmatprep.subr.bf16.mxu0 0
    %306 = vmatpush2.bf16.msra.mxu0 0
    %307 = vmatprep.subr.bf16.mxu0 0
    %308 = vmatpush2.bf16.msra.mxu0 0
    %309 = vmatprep.subr.bf16.mxu0 0
    %310 = vmatpush2.bf16.msra.mxu0 0
    %311 = vmatprep.mubr.bf16.mxu0 0
    %312 = vmatmul.mubr.bf16.gmra.mxu0 %v262
    %v313 = vpop.f32.mrf.mxu0
    %v314 = vadd.f32 %v147, %v313
    %v315 = vpop.f32.mrf.mxu0
    %v316 = vadd.f32 %v149, %v315
    %v317 = vpop.f32.mrf.mxu0
    %v318 = vadd.f32 %v151, %v317
    %v319 = vpop.f32.mrf.mxu0
    %v320 = vadd.f32 %v153, %v319
    %321 = vmatprep.mubr.bf16.mxu0 0
    %322 = vmatmul.mubr.bf16.gmra.mxu0 %v265
    %v323 = vpop.f32.mrf.mxu0
    %v324 = vadd.f32 %v157, %v323
    %v325 = vpop.f32.mrf.mxu0
    %v326 = vadd.f32 %v159, %v325
    %v327 = vpop.f32.mrf.mxu0
    %v328 = vadd.f32 %v161, %v327
    %v329 = vpop.f32.mrf.mxu0
    %v330 = vadd.f32 %v163, %v329
    %331 = vmatprep.mubr.bf16.mxu0 0
    %332 = vmatmul.mubr.bf16.gmra.mxu0 %v268
    %v333 = vpop.f32.mrf.mxu0
    %v334 = vadd.f32 %v167, %v333
    %v335 = vpop.f32.mrf.mxu0
    %v336 = vadd.f32 %v169, %v335
    %v337 = vpop.f32.mrf.mxu0
    %v338 = vadd.f32 %v171, %v337
    %v339 = vpop.f32.mrf.mxu0
    %v340 = vadd.f32 %v173, %v339
    %341 = vdwg.mxu0
    %342 = vmatprep.subr.bf16.mxu0 0
    %343 = vmatpush1.bf16.msra.mxu0 0
    %344 = vmatprep.subr.bf16.mxu0 0
    %345 = vmatpush1.bf16.msra.mxu0 0
    %346 = vmatprep.subr.bf16.mxu0 0
    %347 = vmatpush1.bf16.msra.mxu0 0
    %348 = vmatprep.subr.bf16.mxu0 0
    %349 = vmatpush1.bf16.msra.mxu0 0
    %350 = vmatprep.subr.bf16.mxu0 0
    %351 = vmatpush1.bf16.msra.mxu0 0
    %352 = vmatprep.subr.bf16.mxu0 0
    %353 = vmatpush1.bf16.msra.mxu0 0
    %354 = vmatprep.subr.bf16.mxu0 0
    %355 = vmatpush1.bf16.msra.mxu0 %v277
    %356 = vmatprep.subr.bf16.mxu0 0
    %357 = vmatpush1.bf16.msra.mxu0 %v254
    %358 = vmatprep.subr.bf16.mxu0 0
    %359 = vmatpush2.bf16.msra.mxu0 0
    %360 = vmatprep.subr.bf16.mxu0 0
    %361 = vmatpush2.bf16.msra.mxu0 0
    %362 = vmatprep.subr.bf16.mxu0 0
    %363 = vmatpush2.bf16.msra.mxu0 0
    %364 = vmatprep.subr.bf16.mxu0 0
    %365 = vmatpush2.bf16.msra.mxu0 0
    %366 = vmatprep.subr.bf16.mxu0 0
    %367 = vmatpush2.bf16.msra.mxu0 0
    %368 = vmatprep.subr.bf16.mxu0 0
    %369 = vmatpush2.bf16.msra.mxu0 0
    %370 = vmatprep.subr.bf16.mxu0 0
    %371 = vmatpush2.bf16.msra.mxu0 0
    %372 = vmatprep.subr.bf16.mxu0 0
    %373 = vmatpush2.bf16.msra.mxu0 0
    %374 = vmatprep.mubr.bf16.mxu0 0
    %375 = vmatmul.mubr.bf16.gmra.mxu0 %v262
    %v376 = vpop.f32.mrf.mxu0
    %v377 = vadd.f32 %v210, %v376
    %v378 = vpop.f32.mrf.mxu0
    %v379 = vpop.f32.mrf.mxu0
    %v380 = vadd.f32 %v213, %v379
    %v381 = vpop.f32.mrf.mxu0
    %382 = vmatprep.mubr.bf16.mxu0 0
    %383 = vmatmul.mubr.bf16.gmra.mxu0 %v265
    %v384 = vpop.f32.mrf.mxu0
    %v385 = vadd.f32 %v218, %v384
    %v386 = vpop.f32.mrf.mxu0
    %v387 = vpop.f32.mrf.mxu0
    %v388 = vadd.f32 %v221, %v387
    %v389 = vpop.f32.mrf.mxu0
    %390 = vmatprep.mubr.bf16.mxu0 0
    %391 = vmatmul.mubr.bf16.gmra.mxu0 %v268
    %v392 = vpop.f32.mrf.mxu0
    %v393 = vadd.f32 %v226, %v392
    %v394 = vpop.f32.mrf.mxu0
    %v395 = vpop.f32.mrf.mxu0
    %v396 = vadd.f32 %v229, %v395
    %v397 = vpop.f32.mrf.mxu0
    %398 = vdwg.mxu0
    %v399 = vld [vmem:[%s0 + $0x2] sm:$0xff]
    %v400 = vld [vmem:[%s0 + $0xa] sm:$0xff]
    %v401 = vld [vmem:[%s0 + $0x12] sm:$0xff]
    %v402 = vld [vmem:[%s0 + $0x22] sm:$0xff]
    %v403 = vld [vmem:[%s0 + $0x2a] sm:$0xff]
    %v404 = vld [vmem:[%s0 + $0x32] sm:$0xff]
    %v405 = vpack.c.bf16 %v400, %v399
    %v406 = vpack.c.bf16 %v402, %v401
    %v407 = vpack.c.bf16 %v404, %v403
    %s408 = scalar_lea.vmem %s1, 96
    %v409 = vld [vmem:[%s408] sm:$0xff]
    %v410 = vld [vmem:[%s408 + $0x8] sm:$0xf]
    %v411 = vld [vmem:[%s408 + $0xc] sm:$0xff]
    %v412 = vld [vmem:[%s408 + $0x14] sm:$0xf]
    %v413 = vld [vmem:[%s408 + $0x18] sm:$0xff]
    %v414 = vld [vmem:[%s408 + $0x20] sm:$0xf]
    %v415 = vld [vmem:[%s408 + $0x24] sm:$0x33]
    %v416 = vld [vmem:[%s408 + $0x2c] sm:$0x3]
    %v425 = vunpack.c.l.b16 %v409
    %v426 = vunpack.c.h.b16 %v409
    %v427 = vunpack.c.l.b16 %v410
    %v428 = vunpack.c.l.b16 %v411
    %v429 = vunpack.c.h.b16 %v411
    %v430 = vunpack.c.l.b16 %v412
    %v431 = vunpack.c.l.b16 %v413
    %v432 = vunpack.c.h.b16 %v413
    %v433 = vunpack.c.l.b16 %v414
    %v434 = vunpack.c.l.b16 %v415
    %v435 = vunpack.c.h.b16 %v415
    %v436 = vunpack.c.l.b16 %v416
    %v437 = vpack.c.b16 %v428, %v425
    %v438 = vpack.c.b16 %v429, %v426
    %v439 = vpack.c.b16 %v430, %v427
    %v440 = vpack.c.b16 %v434, %v431
    %v441 = vpack.c.b16 %v435, %v432
    %v442 = vpack.c.b16 %v436, %v433
    %v447 = vsel %vm92, %v405, 0
    %v450 = vsel %vm92, %v406, 0
    %v453 = vsel %vm92, %v407, 0
    %v456 = vsel %vm102, %v440, 0
    %v459 = vsel %vm102, %v441, 0
    %v462 = vsel %vm102, %v442, 0
    %464 = vmatprep.subr.bf16.mxu0 0
    %465 = vmatpush1.bf16.msra.mxu0 0
    %466 = vmatprep.subr.bf16.mxu0 0
    %467 = vmatpush1.bf16.msra.mxu0 0
    %468 = vmatprep.subr.bf16.mxu0 0
    %469 = vmatpush1.bf16.msra.mxu0 0
    %470 = vmatprep.subr.bf16.mxu0 0
    %471 = vmatpush1.bf16.msra.mxu0 0
    %472 = vmatprep.subr.bf16.mxu0 0
    %473 = vmatpush1.bf16.msra.mxu0 0
    %474 = vmatprep.subr.bf16.mxu0 0
    %475 = vmatpush1.bf16.msra.mxu0 0
    %476 = vmatprep.subr.bf16.mxu0 %v459
    %477 = vmatpush1.bf16.msra.mxu0 %v456
    %478 = vmatprep.subr.bf16.mxu0 %v438
    %479 = vmatpush1.bf16.msra.mxu0 %v437
    %480 = vmatprep.subr.bf16.mxu0 0
    %481 = vmatpush2.bf16.msra.mxu0 0
    %482 = vmatprep.subr.bf16.mxu0 0
    %483 = vmatpush2.bf16.msra.mxu0 0
    %484 = vmatprep.subr.bf16.mxu0 0
    %485 = vmatpush2.bf16.msra.mxu0 0
    %486 = vmatprep.subr.bf16.mxu0 0
    %487 = vmatpush2.bf16.msra.mxu0 0
    %488 = vmatprep.subr.bf16.mxu0 0
    %489 = vmatpush2.bf16.msra.mxu0 0
    %490 = vmatprep.subr.bf16.mxu0 0
    %491 = vmatpush2.bf16.msra.mxu0 0
    %492 = vmatprep.subr.bf16.mxu0 0
    %493 = vmatpush2.bf16.msra.mxu0 0
    %494 = vmatprep.subr.bf16.mxu0 0
    %495 = vmatpush2.bf16.msra.mxu0 0
    %496 = vmatprep.mubr.bf16.mxu0 0
    %497 = vmatmul.mubr.bf16.gmra.mxu0 %v447
    %v498 = vpop.f32.mrf.mxu0
    %v499 = vadd.f32 0.0, %v498
    %v500 = vpop.f32.mrf.mxu0
    %v501 = vadd.f32 0.0, %v500
    %v502 = vpop.f32.mrf.mxu0
    %v503 = vadd.f32 0.0, %v502
    %v504 = vpop.f32.mrf.mxu0
    %v505 = vadd.f32 0.0, %v504
    %506 = vmatprep.mubr.bf16.mxu0 0
    %507 = vmatmul.mubr.bf16.gmra.mxu0 %v450
    %v508 = vpop.f32.mrf.mxu0
    %v509 = vadd.f32 0.0, %v508
    %v510 = vpop.f32.mrf.mxu0
    %v511 = vadd.f32 0.0, %v510
    %v512 = vpop.f32.mrf.mxu0
    %v513 = vadd.f32 0.0, %v512
    %v514 = vpop.f32.mrf.mxu0
    %v515 = vadd.f32 0.0, %v514
    %516 = vmatprep.mubr.bf16.mxu0 0
    %517 = vmatmul.mubr.bf16.gmra.mxu0 %v453
    %v518 = vpop.f32.mrf.mxu0
    %v519 = vadd.f32 0.0, %v518
    %v520 = vpop.f32.mrf.mxu0
    %v521 = vadd.f32 0.0, %v520
    %v522 = vpop.f32.mrf.mxu0
    %v523 = vadd.f32 0.0, %v522
    %v524 = vpop.f32.mrf.mxu0
    %v525 = vadd.f32 0.0, %v524
    %526 = vdwg.mxu0
    %527 = vmatprep.subr.bf16.mxu0 0
    %528 = vmatpush1.bf16.msra.mxu0 0
    %529 = vmatprep.subr.bf16.mxu0 0
    %530 = vmatpush1.bf16.msra.mxu0 0
    %531 = vmatprep.subr.bf16.mxu0 0
    %532 = vmatpush1.bf16.msra.mxu0 0
    %533 = vmatprep.subr.bf16.mxu0 0
    %534 = vmatpush1.bf16.msra.mxu0 0
    %535 = vmatprep.subr.bf16.mxu0 0
    %536 = vmatpush1.bf16.msra.mxu0 0
    %537 = vmatprep.subr.bf16.mxu0 0
    %538 = vmatpush1.bf16.msra.mxu0 0
    %539 = vmatprep.subr.bf16.mxu0 0
    %540 = vmatpush1.bf16.msra.mxu0 %v462
    %541 = vmatprep.subr.bf16.mxu0 0
    %542 = vmatpush1.bf16.msra.mxu0 %v439
    %543 = vmatprep.subr.bf16.mxu0 0
    %544 = vmatpush2.bf16.msra.mxu0 0
    %545 = vmatprep.subr.bf16.mxu0 0
    %546 = vmatpush2.bf16.msra.mxu0 0
    %547 = vmatprep.subr.bf16.mxu0 0
    %548 = vmatpush2.bf16.msra.mxu0 0
    %549 = vmatprep.subr.bf16.mxu0 0
    %550 = vmatpush2.bf16.msra.mxu0 0
    %551 = vmatprep.subr.bf16.mxu0 0
    %552 = vmatpush2.bf16.msra.mxu0 0
    %553 = vmatprep.subr.bf16.mxu0 0
    %554 = vmatpush2.bf16.msra.mxu0 0
    %555 = vmatprep.subr.bf16.mxu0 0
    %556 = vmatpush2.bf16.msra.mxu0 0
    %557 = vmatprep.subr.bf16.mxu0 0
    %558 = vmatpush2.bf16.msra.mxu0 0
    %559 = vmatprep.mubr.bf16.mxu0 0
    %560 = vmatmul.mubr.bf16.gmra.mxu0 %v447
    %v561 = vpop.f32.mrf.mxu0
    %v562 = vadd.f32 0.0, %v561
    %v563 = vpop.f32.mrf.mxu0
    %v564 = vpop.f32.mrf.mxu0
    %v565 = vadd.f32 0.0, %v564
    %v566 = vpop.f32.mrf.mxu0
    %567 = vmatprep.mubr.bf16.mxu0 0
    %568 = vmatmul.mubr.bf16.gmra.mxu0 %v450
    %v569 = vpop.f32.mrf.mxu0
    %v570 = vadd.f32 0.0, %v569
    %v571 = vpop.f32.mrf.mxu0
    %v572 = vpop.f32.mrf.mxu0
    %v573 = vadd.f32 0.0, %v572
    %v574 = vpop.f32.mrf.mxu0
    %575 = vmatprep.mubr.bf16.mxu0 0
    %576 = vmatmul.mubr.bf16.gmra.mxu0 %v453
    %v577 = vpop.f32.mrf.mxu0
    %v578 = vadd.f32 0.0, %v577
    %v579 = vpop.f32.mrf.mxu0
    %v580 = vpop.f32.mrf.mxu0
    %v581 = vadd.f32 0.0, %v580
    %v582 = vpop.f32.mrf.mxu0
    %583 = vdwg.mxu0
    %v584 = vadd.f32 %v314, %v499
    %v585 = vadd.f32 %v316, %v501
    %v586 = vadd.f32 %v377, %v562
    %v587 = vadd.f32 %v318, %v503
    %v588 = vadd.f32 %v320, %v505
    %v589 = vadd.f32 %v380, %v565
    %v590 = vadd.f32 %v324, %v509
    %v591 = vadd.f32 %v326, %v511
    %v592 = vadd.f32 %v385, %v570
    %v593 = vadd.f32 %v328, %v513
    %v594 = vadd.f32 %v330, %v515
    %v595 = vadd.f32 %v388, %v573
    %v596 = vadd.f32 %v334, %v519
    %v597 = vadd.f32 %v336, %v521
    %v598 = vadd.f32 %v393, %v578
    %v599 = vadd.f32 %v338, %v523
    %v600 = vadd.f32 %v340, %v525
    %v601 = vadd.f32 %v396, %v581
    %v602 = vld [vmem:[%s0 + $0x3] sm:$0xff]
    %v603 = vld [vmem:[%s0 + $0xb] sm:$0xff]
    %v604 = vld [vmem:[%s0 + $0x13] sm:$0xff]
    %v605 = vld [vmem:[%s0 + $0x23] sm:$0xff]
    %v606 = vld [vmem:[%s0 + $0x2b] sm:$0xff]
    %v607 = vld [vmem:[%s0 + $0x33] sm:$0xff]
    %v608 = vpack.c.bf16 %v603, %v602
    %v609 = vpack.c.bf16 %v605, %v604
    %v610 = vpack.c.bf16 %v607, %v606
    %s611 = scalar_lea.vmem %s1, 144
    %v612 = vld [vmem:[%s611] sm:$0xff]
    %v613 = vld [vmem:[%s611 + $0x8] sm:$0xf]
    %v614 = vld [vmem:[%s611 + $0xc] sm:$0xff]
    %v615 = vld [vmem:[%s611 + $0x14] sm:$0xf]
    %v616 = vld [vmem:[%s611 + $0x18] sm:$0xff]
    %v617 = vld [vmem:[%s611 + $0x20] sm:$0xf]
    %v618 = vld [vmem:[%s611 + $0x24] sm:$0x33]
    %v619 = vld [vmem:[%s611 + $0x2c] sm:$0x3]
    %v628 = vunpack.c.l.b16 %v612
    %v629 = vunpack.c.h.b16 %v612
    %v630 = vunpack.c.l.b16 %v613
    %v631 = vunpack.c.l.b16 %v614
    %v632 = vunpack.c.h.b16 %v614
    %v633 = vunpack.c.l.b16 %v615
    %v634 = vunpack.c.l.b16 %v616
    %v635 = vunpack.c.h.b16 %v616
    %v636 = vunpack.c.l.b16 %v617
    %v637 = vunpack.c.l.b16 %v618
    %v638 = vunpack.c.h.b16 %v618
    %v639 = vunpack.c.l.b16 %v619
    %v640 = vpack.c.b16 %v631, %v628
    %v641 = vpack.c.b16 %v632, %v629
    %v642 = vpack.c.b16 %v633, %v630
    %v643 = vpack.c.b16 %v637, %v634
    %v644 = vpack.c.b16 %v638, %v635
    %v645 = vpack.c.b16 %v639, %v636
    %v650 = vsel %vm92, %v608, 0
    %v653 = vsel %vm92, %v609, 0
    %v656 = vsel %vm92, %v610, 0
    %v659 = vsel %vm102, %v643, 0
    %v662 = vsel %vm102, %v644, 0
    %v665 = vsel %vm102, %v645, 0
    %667 = vmatprep.subr.bf16.mxu0 0
    %668 = vmatpush1.bf16.msra.mxu0 0
    %669 = vmatprep.subr.bf16.mxu0 0
    %670 = vmatpush1.bf16.msra.mxu0 0
    %671 = vmatprep.subr.bf16.mxu0 0
    %672 = vmatpush1.bf16.msra.mxu0 0
    %673 = vmatprep.subr.bf16.mxu0 0
    %674 = vmatpush1.bf16.msra.mxu0 0
    %675 = vmatprep.subr.bf16.mxu0 0
    %676 = vmatpush1.bf16.msra.mxu0 0
    %677 = vmatprep.subr.bf16.mxu0 0
    %678 = vmatpush1.bf16.msra.mxu0 0
    %679 = vmatprep.subr.bf16.mxu0 %v662
    %680 = vmatpush1.bf16.msra.mxu0 %v659
    %681 = vmatprep.subr.bf16.mxu0 %v641
    %682 = vmatpush1.bf16.msra.mxu0 %v640
    %683 = vmatprep.subr.bf16.mxu0 0
    %684 = vmatpush2.bf16.msra.mxu0 0
    %685 = vmatprep.subr.bf16.mxu0 0
    %686 = vmatpush2.bf16.msra.mxu0 0
    %687 = vmatprep.subr.bf16.mxu0 0
    %688 = vmatpush2.bf16.msra.mxu0 0
    %689 = vmatprep.subr.bf16.mxu0 0
    %690 = vmatpush2.bf16.msra.mxu0 0
    %691 = vmatprep.subr.bf16.mxu0 0
    %692 = vmatpush2.bf16.msra.mxu0 0
    %693 = vmatprep.subr.bf16.mxu0 0
    %694 = vmatpush2.bf16.msra.mxu0 0
    %695 = vmatprep.subr.bf16.mxu0 0
    %696 = vmatpush2.bf16.msra.mxu0 0
    %697 = vmatprep.subr.bf16.mxu0 0
    %698 = vmatpush2.bf16.msra.mxu0 0
    %699 = vmatprep.mubr.bf16.mxu0 0
    %700 = vmatmul.mubr.bf16.gmra.mxu0 %v650
    %v701 = vpop.f32.mrf.mxu0
    %v702 = vadd.f32 0.0, %v701
    %v703 = vpop.f32.mrf.mxu0
    %v704 = vadd.f32 0.0, %v703
    %v705 = vpop.f32.mrf.mxu0
    %v706 = vadd.f32 0.0, %v705
    %v707 = vpop.f32.mrf.mxu0
    %v708 = vadd.f32 0.0, %v707
    %709 = vmatprep.mubr.bf16.mxu0 0
    %710 = vmatmul.mubr.bf16.gmra.mxu0 %v653
    %v711 = vpop.f32.mrf.mxu0
    %v712 = vadd.f32 0.0, %v711
    %v713 = vpop.f32.mrf.mxu0
    %v714 = vadd.f32 0.0, %v713
    %v715 = vpop.f32.mrf.mxu0
    %v716 = vadd.f32 0.0, %v715
    %v717 = vpop.f32.mrf.mxu0
    %v718 = vadd.f32 0.0, %v717
    %719 = vmatprep.mubr.bf16.mxu0 0
    %720 = vmatmul.mubr.bf16.gmra.mxu0 %v656
    %v721 = vpop.f32.mrf.mxu0
    %v722 = vadd.f32 0.0, %v721
    %v723 = vpop.f32.mrf.mxu0
    %v724 = vadd.f32 0.0, %v723
    %v725 = vpop.f32.mrf.mxu0
    %v726 = vadd.f32 0.0, %v725
    %v727 = vpop.f32.mrf.mxu0
    %v728 = vadd.f32 0.0, %v727
    %729 = vdwg.mxu0
    %730 = vmatprep.subr.bf16.mxu0 0
    %731 = vmatpush1.bf16.msra.mxu0 0
    %732 = vmatprep.subr.bf16.mxu0 0
    %733 = vmatpush1.bf16.msra.mxu0 0
    %734 = vmatprep.subr.bf16.mxu0 0
    %735 = vmatpush1.bf16.msra.mxu0 0
    %736 = vmatprep.subr.bf16.mxu0 0
    %737 = vmatpush1.bf16.msra.mxu0 0
    %738 = vmatprep.subr.bf16.mxu0 0
    %739 = vmatpush1.bf16.msra.mxu0 0
    %740 = vmatprep.subr.bf16.mxu0 0
    %741 = vmatpush1.bf16.msra.mxu0 0
    %742 = vmatprep.subr.bf16.mxu0 0
    %743 = vmatpush1.bf16.msra.mxu0 %v665
    %744 = vmatprep.subr.bf16.mxu0 0
    %745 = vmatpush1.bf16.msra.mxu0 %v642
    %746 = vmatprep.subr.bf16.mxu0 0
    %747 = vmatpush2.bf16.msra.mxu0 0
    %748 = vmatprep.subr.bf16.mxu0 0
    %749 = vmatpush2.bf16.msra.mxu0 0
    %750 = vmatprep.subr.bf16.mxu0 0
    %751 = vmatpush2.bf16.msra.mxu0 0
    %752 = vmatprep.subr.bf16.mxu0 0
    %753 = vmatpush2.bf16.msra.mxu0 0
    %754 = vmatprep.subr.bf16.mxu0 0
    %755 = vmatpush2.bf16.msra.mxu0 0
    %756 = vmatprep.subr.bf16.mxu0 0
    %757 = vmatpush2.bf16.msra.mxu0 0
    %758 = vmatprep.subr.bf16.mxu0 0
    %759 = vmatpush2.bf16.msra.mxu0 0
    %760 = vmatprep.subr.bf16.mxu0 0
    %761 = vmatpush2.bf16.msra.mxu0 0
    %762 = vmatprep.mubr.bf16.mxu0 0
    %763 = vmatmul.mubr.bf16.gmra.mxu0 %v650
    %v764 = vpop.f32.mrf.mxu0
    %v765 = vadd.f32 0.0, %v764
    %v766 = vpop.f32.mrf.mxu0
    %v767 = vpop.f32.mrf.mxu0
    %v768 = vadd.f32 0.0, %v767
    %v769 = vpop.f32.mrf.mxu0
    %770 = vmatprep.mubr.bf16.mxu0 0
    %771 = vmatmul.mubr.bf16.gmra.mxu0 %v653
    %v772 = vpop.f32.mrf.mxu0
    %v773 = vadd.f32 0.0, %v772
    %v774 = vpop.f32.mrf.mxu0
    %v775 = vpop.f32.mrf.mxu0
    %v776 = vadd.f32 0.0, %v775
    %v777 = vpop.f32.mrf.mxu0
    %778 = vmatprep.mubr.bf16.mxu0 0
    %779 = vmatmul.mubr.bf16.gmra.mxu0 %v656
    %v780 = vpop.f32.mrf.mxu0
    %v781 = vadd.f32 0.0, %v780
    %v782 = vpop.f32.mrf.mxu0
    %v783 = vpop.f32.mrf.mxu0
    %v784 = vadd.f32 0.0, %v783
    %v785 = vpop.f32.mrf.mxu0
    %786 = vdwg.mxu0
    %v787 = vadd.f32 %v584, %v702
    %v788 = vadd.f32 %v585, %v704
    %v789 = vadd.f32 %v586, %v765
    %v790 = vadd.f32 %v587, %v706
    %v791 = vadd.f32 %v588, %v708
    %v792 = vadd.f32 %v589, %v768
    %v793 = vadd.f32 %v590, %v712
    %v794 = vadd.f32 %v591, %v714
    %v795 = vadd.f32 %v592, %v773
    %v796 = vadd.f32 %v593, %v716
    %v797 = vadd.f32 %v594, %v718
    %v798 = vadd.f32 %v595, %v776
    %v799 = vadd.f32 %v596, %v722
    %v800 = vadd.f32 %v597, %v724
    %v801 = vadd.f32 %v598, %v781
    %v802 = vadd.f32 %v599, %v726
    %v803 = vadd.f32 %v600, %v728
    %v804 = vadd.f32 %v601, %v784
    %v805 = vld [vmem:[%s0 + $0x4] sm:$0xff]
    %v806 = vld [vmem:[%s0 + $0xc] sm:$0xff]
    %v807 = vld [vmem:[%s0 + $0x14] sm:$0xff]
    %v808 = vld [vmem:[%s0 + $0x24] sm:$0xff]
    %v809 = vld [vmem:[%s0 + $0x2c] sm:$0xff]
    %v810 = vld [vmem:[%s0 + $0x34] sm:$0xff]
    %v811 = vpack.c.bf16 %v806, %v805
    %v812 = vpack.c.bf16 %v808, %v807
    %v813 = vpack.c.bf16 %v810, %v809
    %s814 = scalar_lea.vmem %s1, 192
    %v815 = vld [vmem:[%s814] sm:$0xff]
    %v816 = vld [vmem:[%s814 + $0x8] sm:$0xf]
    %v817 = vld [vmem:[%s814 + $0xc] sm:$0xff]
    %v818 = vld [vmem:[%s814 + $0x14] sm:$0xf]
    %v819 = vld [vmem:[%s814 + $0x18] sm:$0xff]
    %v820 = vld [vmem:[%s814 + $0x20] sm:$0xf]
    %v821 = vld [vmem:[%s814 + $0x24] sm:$0x33]
    %v822 = vld [vmem:[%s814 + $0x2c] sm:$0x3]
    %v831 = vunpack.c.l.b16 %v815
    %v832 = vunpack.c.h.b16 %v815
    %v833 = vunpack.c.l.b16 %v816
    %v834 = vunpack.c.l.b16 %v817
    %v835 = vunpack.c.h.b16 %v817
    %v836 = vunpack.c.l.b16 %v818
    %v837 = vunpack.c.l.b16 %v819
    %v838 = vunpack.c.h.b16 %v819
    %v839 = vunpack.c.l.b16 %v820
    %v840 = vunpack.c.l.b16 %v821
    %v841 = vunpack.c.h.b16 %v821
    %v842 = vunpack.c.l.b16 %v822
    %v843 = vpack.c.b16 %v834, %v831
    %v844 = vpack.c.b16 %v835, %v832
    %v845 = vpack.c.b16 %v836, %v833
    %v846 = vpack.c.b16 %v840, %v837
    %v847 = vpack.c.b16 %v841, %v838
    %v848 = vpack.c.b16 %v842, %v839
    %v853 = vsel %vm92, %v811, 0
    %v856 = vsel %vm92, %v812, 0
    %v859 = vsel %vm92, %v813, 0
    %v862 = vsel %vm102, %v846, 0
    %v865 = vsel %vm102, %v847, 0
    %v868 = vsel %vm102, %v848, 0
    %870 = vmatprep.subr.bf16.mxu0 0
    %871 = vmatpush1.bf16.msra.mxu0 0
    %872 = vmatprep.subr.bf16.mxu0 0
    %873 = vmatpush1.bf16.msra.mxu0 0
    %874 = vmatprep.subr.bf16.mxu0 0
    %875 = vmatpush1.bf16.msra.mxu0 0
    %876 = vmatprep.subr.bf16.mxu0 0
    %877 = vmatpush1.bf16.msra.mxu0 0
    %878 = vmatprep.subr.bf16.mxu0 0
    %879 = vmatpush1.bf16.msra.mxu0 0
    %880 = vmatprep.subr.bf16.mxu0 0
    %881 = vmatpush1.bf16.msra.mxu0 0
    %882 = vmatprep.subr.bf16.mxu0 %v865
    %883 = vmatpush1.bf16.msra.mxu0 %v862
    %884 = vmatprep.subr.bf16.mxu0 %v844
    %885 = vmatpush1.bf16.msra.mxu0 %v843
    %886 = vmatprep.subr.bf16.mxu0 0
    %887 = vmatpush2.bf16.msra.mxu0 0
    %888 = vmatprep.subr.bf16.mxu0 0
    %889 = vmatpush2.bf16.msra.mxu0 0
    %890 = vmatprep.subr.bf16.mxu0 0
    %891 = vmatpush2.bf16.msra.mxu0 0
    %892 = vmatprep.subr.bf16.mxu0 0
    %893 = vmatpush2.bf16.msra.mxu0 0
    %894 = vmatprep.subr.bf16.mxu0 0
    %895 = vmatpush2.bf16.msra.mxu0 0
    %896 = vmatprep.subr.bf16.mxu0 0
    %897 = vmatpush2.bf16.msra.mxu0 0
    %898 = vmatprep.subr.bf16.mxu0 0
    %899 = vmatpush2.bf16.msra.mxu0 0
    %900 = vmatprep.subr.bf16.mxu0 0
    %901 = vmatpush2.bf16.msra.mxu0 0
    %902 = vmatprep.mubr.bf16.mxu0 0
    %903 = vmatmul.mubr.bf16.gmra.mxu0 %v853
    %v904 = vpop.f32.mrf.mxu0
    %v905 = vadd.f32 0.0, %v904
    %v906 = vpop.f32.mrf.mxu0
    %v907 = vadd.f32 0.0, %v906
    %v908 = vpop.f32.mrf.mxu0
    %v909 = vadd.f32 0.0, %v908
    %v910 = vpop.f32.mrf.mxu0
    %v911 = vadd.f32 0.0, %v910
    %912 = vmatprep.mubr.bf16.mxu0 0
    %913 = vmatmul.mubr.bf16.gmra.mxu0 %v856
    %v914 = vpop.f32.mrf.mxu0
    %v915 = vadd.f32 0.0, %v914
    %v916 = vpop.f32.mrf.mxu0
    %v917 = vadd.f32 0.0, %v916
    %v918 = vpop.f32.mrf.mxu0
    %v919 = vadd.f32 0.0, %v918
    %v920 = vpop.f32.mrf.mxu0
    %v921 = vadd.f32 0.0, %v920
    %922 = vmatprep.mubr.bf16.mxu0 0
    %923 = vmatmul.mubr.bf16.gmra.mxu0 %v859
    %v924 = vpop.f32.mrf.mxu0
    %v925 = vadd.f32 0.0, %v924
    %v926 = vpop.f32.mrf.mxu0
    %v927 = vadd.f32 0.0, %v926
    %v928 = vpop.f32.mrf.mxu0
    %v929 = vadd.f32 0.0, %v928
    %v930 = vpop.f32.mrf.mxu0
    %v931 = vadd.f32 0.0, %v930
    %932 = vdwg.mxu0
    %933 = vmatprep.subr.bf16.mxu0 0
    %934 = vmatpush1.bf16.msra.mxu0 0
    %935 = vmatprep.subr.bf16.mxu0 0
    %936 = vmatpush1.bf16.msra.mxu0 0
    %937 = vmatprep.subr.bf16.mxu0 0
    %938 = vmatpush1.bf16.msra.mxu0 0
    %939 = vmatprep.subr.bf16.mxu0 0
    %940 = vmatpush1.bf16.msra.mxu0 0
    %941 = vmatprep.subr.bf16.mxu0 0
    %942 = vmatpush1.bf16.msra.mxu0 0
    %943 = vmatprep.subr.bf16.mxu0 0
    %944 = vmatpush1.bf16.msra.mxu0 0
    %945 = vmatprep.subr.bf16.mxu0 0
    %946 = vmatpush1.bf16.msra.mxu0 %v868
    %947 = vmatprep.subr.bf16.mxu0 0
    %948 = vmatpush1.bf16.msra.mxu0 %v845
    %949 = vmatprep.subr.bf16.mxu0 0
    %950 = vmatpush2.bf16.msra.mxu0 0
    %951 = vmatprep.subr.bf16.mxu0 0
    %952 = vmatpush2.bf16.msra.mxu0 0
    %953 = vmatprep.subr.bf16.mxu0 0
    %954 = vmatpush2.bf16.msra.mxu0 0
    %955 = vmatprep.subr.bf16.mxu0 0
    %956 = vmatpush2.bf16.msra.mxu0 0
    %957 = vmatprep.subr.bf16.mxu0 0
    %958 = vmatpush2.bf16.msra.mxu0 0
    %959 = vmatprep.subr.bf16.mxu0 0
    %960 = vmatpush2.bf16.msra.mxu0 0
    %961 = vmatprep.subr.bf16.mxu0 0
    %962 = vmatpush2.bf16.msra.mxu0 0
    %963 = vmatprep.subr.bf16.mxu0 0
    %964 = vmatpush2.bf16.msra.mxu0 0
    %965 = vmatprep.mubr.bf16.mxu0 0
    %966 = vmatmul.mubr.bf16.gmra.mxu0 %v853
    %v967 = vpop.f32.mrf.mxu0
    %v968 = vadd.f32 0.0, %v967
    %v969 = vpop.f32.mrf.mxu0
    %v970 = vpop.f32.mrf.mxu0
    %v971 = vadd.f32 0.0, %v970
    %v972 = vpop.f32.mrf.mxu0
    %973 = vmatprep.mubr.bf16.mxu0 0
    %974 = vmatmul.mubr.bf16.gmra.mxu0 %v856
    %v975 = vpop.f32.mrf.mxu0
    %v976 = vadd.f32 0.0, %v975
    %v977 = vpop.f32.mrf.mxu0
    %v978 = vpop.f32.mrf.mxu0
    %v979 = vadd.f32 0.0, %v978
    %v980 = vpop.f32.mrf.mxu0
    %981 = vmatprep.mubr.bf16.mxu0 0
    %982 = vmatmul.mubr.bf16.gmra.mxu0 %v859
    %v983 = vpop.f32.mrf.mxu0
    %v984 = vadd.f32 0.0, %v983
    %v985 = vpop.f32.mrf.mxu0
    %v986 = vpop.f32.mrf.mxu0
    %v987 = vadd.f32 0.0, %v986
    %v988 = vpop.f32.mrf.mxu0
    %989 = vdwg.mxu0
    %v990 = vadd.f32 %v787, %v905
    %v991 = vadd.f32 %v788, %v907
    %v992 = vadd.f32 %v789, %v968
    %v993 = vadd.f32 %v790, %v909
    %v994 = vadd.f32 %v791, %v911
    %v995 = vadd.f32 %v792, %v971
    %v996 = vadd.f32 %v793, %v915
    %v997 = vadd.f32 %v794, %v917
    %v998 = vadd.f32 %v795, %v976
    %v999 = vadd.f32 %v796, %v919
    %v1000 = vadd.f32 %v797, %v921
    %v1001 = vadd.f32 %v798, %v979
    %v1002 = vadd.f32 %v799, %v925
    %v1003 = vadd.f32 %v800, %v927
    %v1004 = vadd.f32 %v801, %v984
    %v1005 = vadd.f32 %v802, %v929
    %v1006 = vadd.f32 %v803, %v931
    %v1007 = vadd.f32 %v804, %v987
    %v1008 = vld [vmem:[%s2] sm:$0x7]
    %v1010 = vlaneseq
    %v1011 = vshrl.u32 %v1010, 7
    %v1012 = vsub.s32 0, %v1011
    %v1013 = vrot.slane %v1008, %v1012
    %v1014 = vlaneseq
    %v1015 = vshrl.u32 %v1014, 7
    %v1016 = vsub.s32 1, %v1015
    %v1017 = vrot.slane %v1008, %v1016
    %v1018 = vlaneseq
    %v1019 = vshrl.u32 %v1018, 7
    %v1020 = vsub.s32 2, %v1019
    %v1021 = vrot.slane %v1008, %v1020
    %v1025 = vadd.f32 %v990, %v1013
    %v1026 = vadd.f32 %v991, %v1017
    %v1027 = vadd.f32 %v992, %v1021
    %v1028 = vadd.f32 %v993, %v1013
    %v1029 = vadd.f32 %v994, %v1017
    %v1030 = vadd.f32 %v995, %v1021
    %v1031 = vadd.f32 %v996, %v1013
    %v1032 = vadd.f32 %v997, %v1017
    %v1033 = vadd.f32 %v998, %v1021
    %v1034 = vadd.f32 %v999, %v1013
    %v1035 = vadd.f32 %v1000, %v1017
    %v1036 = vadd.f32 %v1001, %v1021
    %v1037 = vadd.f32 %v1002, %v1013
    %v1038 = vadd.f32 %v1003, %v1017
    %v1039 = vadd.f32 %v1004, %v1021
    %v1040 = vadd.f32 %v1005, %v1013
    %v1041 = vadd.f32 %v1006, %v1017
    %v1042 = vadd.f32 %v1007, %v1021
    %v1043 = vmax.f32 %v1025, 0.0
    %v1044 = vmax.f32 %v1026, 0.0
    %v1045 = vmax.f32 %v1027, 0.0
    %v1046 = vmax.f32 %v1028, 0.0
    %v1047 = vmax.f32 %v1029, 0.0
    %v1048 = vmax.f32 %v1030, 0.0
    %v1049 = vmax.f32 %v1031, 0.0
    %v1050 = vmax.f32 %v1032, 0.0
    %v1051 = vmax.f32 %v1033, 0.0
    %v1052 = vmax.f32 %v1034, 0.0
    %v1053 = vmax.f32 %v1035, 0.0
    %v1054 = vmax.f32 %v1036, 0.0
    %v1055 = vmax.f32 %v1037, 0.0
    %v1056 = vmax.f32 %v1038, 0.0
    %v1057 = vmax.f32 %v1039, 0.0
    %v1058 = vmax.f32 %v1040, 0.0
    %v1059 = vmax.f32 %v1041, 0.0
    %v1060 = vmax.f32 %v1042, 0.0
    %1061 = vst [vmem:[#allocation2] sm:$0xff] %v1043
    %1062 = vst [vmem:[#allocation2 + $0x8] sm:$0xff] %v1044
    %1063 = vst [vmem:[#allocation2 + $0x10] sm:$0xff] %v1045
    %1064 = vst [vmem:[#allocation2 + $0x18] sm:$0xff] %v1046
    %1065 = vst [vmem:[#allocation2 + $0x20] sm:$0xff] %v1047
    %1066 = vst [vmem:[#allocation2 + $0x28] sm:$0xff] %v1048
    %1067 = vst [vmem:[#allocation2 + $0x30] sm:$0xff] %v1049
    %1068 = vst [vmem:[#allocation2 + $0x38] sm:$0xff] %v1050
    %1069 = vst [vmem:[#allocation2 + $0x40] sm:$0xff] %v1051
    %1070 = vst [vmem:[#allocation2 + $0x48] sm:$0xff] %v1052
    %1071 = vst [vmem:[#allocation2 + $0x50] sm:$0xff] %v1053
    %1072 = vst [vmem:[#allocation2 + $0x58] sm:$0xff] %v1054
    %1073 = vst [vmem:[#allocation2 + $0x60] sm:$0xff] %v1055
    %1074 = vst [vmem:[#allocation2 + $0x68] sm:$0xff] %v1056
    %1075 = vst [vmem:[#allocation2 + $0x70] sm:$0xff] %v1057
    %1076 = vst [vmem:[#allocation2 + $0x78] sm:$0xff] %v1058
    %1077 = vst [vmem:[#allocation2 + $0x80] sm:$0xff] %v1059
    %1078 = vst [vmem:[#allocation2 + $0x88] sm:$0xff] %v1060
    %v1079 = vld [vmem:[#allocation2] ss:$8 sm:$0x7]
    %s1080 = scalar_lea.vmem [#allocation2], 72
    %v1081 = vld [vmem:[%s1080] ss:$8 sm:$0x7]
    %s1082 = scalar_lea.vmem [#allocation2], 1
    %v1083 = vld [vmem:[%s1082] ss:$8 sm:$0x7]
    %s1084 = scalar_lea.vmem [#allocation2], 73
    %v1085 = vld [vmem:[%s1084] ss:$8 sm:$0x7]
    %v1086 = vmax.f32 %v1079, %v1083
    %v1087 = vmax.f32 %v1081, %v1085
    %1090 = vrot.lane.b32.xlu0 %v1086, 112
    %v1091 = vpop.permute.xlu0 %1090
    %1092 = vrot.lane.b32.xlu0 %v1087, 112
    %v1093 = vpop.permute.xlu0 %1092
    %v1094 = vrot.slane %v1091, 1
    %v1095 = vrot.slane %v1093, 1
    %vm1096 = vcmask 916480
    %v1097 = vsel %vm1096, %v1091, %v1094
    %v1098 = vsel %vm1096, %v1093, %v1095
    %v1101 = vmax.f32 %v1086, %v1097
    %v1102 = vmax.f32 %v1087, %v1098
    %v1103 = vlaneseq
    %vm1104 = vcmp.ge.s32.totalorder %v1103, 0
    %vm1105 = vcmp.lt.s32.totalorder %v1103, 368
    %vm1106 = vmand %vm1104, %vm1105
    %1107 = vst.msk [vmem:[#allocation3] ss:$8 sm:$0x7] %vm1106, %v1101
    %1108 = vst.msk [vmem:[#allocation3] ss:$8 sm:$0x0] %vm1106, %v1101
    %s1109 = scalar_lea.vmem [#allocation3], 48
    %1110 = vst.msk [vmem:[%s1109] ss:$8 sm:$0x7] %vm1106, %v1102
    %1111 = vst.msk [vmem:[%s1109] ss:$8 sm:$0x0] %vm1106, %v1102
    %s1112 = scalar_lea.vmem [#allocation2], 2
    %v1113 = vld [vmem:[%s1112] ss:$8 sm:$0x7]
    %s1114 = scalar_lea.vmem [#allocation2], 74
    %v1115 = vld [vmem:[%s1114] ss:$8 sm:$0x7]
    %s1116 = scalar_lea.vmem [#allocation2], 3
    %v1117 = vld [vmem:[%s1116] ss:$8 sm:$0x7]
    %s1118 = scalar_lea.vmem [#allocation2], 75
    %v1119 = vld [vmem:[%s1118] ss:$8 sm:$0x7]
    %v1120 = vmax.f32 %v1113, %v1117
    %v1121 = vmax.f32 %v1115, %v1119
    %1124 = vrot.lane.b32.xlu0 %v1120, 112
    %v1125 = vpop.permute.xlu0 %1124
    %1126 = vrot.lane.b32.xlu0 %v1121, 112
    %v1127 = vpop.permute.xlu0 %1126
    %v1128 = vrot.slane %v1125, 1
    %v1129 = vrot.slane %v1127, 1
    %v1130 = vsel %vm1096, %v1125, %v1128
    %v1131 = vsel %vm1096, %v1127, %v1129
    %v1134 = vmax.f32 %v1120, %v1130
    %v1135 = vmax.f32 %v1121, %v1131
    %s1136 = scalar_lea.vmem [#allocation3], 1
    %1137 = vst.msk [vmem:[%s1136] ss:$8 sm:$0x7] %vm1106, %v1134
    %1138 = vst.msk [vmem:[%s1136] ss:$8 sm:$0x0] %vm1106, %v1134
    %s1139 = scalar_lea.vmem [#allocation3], 49
    %1140 = vst.msk [vmem:[%s1139] ss:$8 sm:$0x7] %vm1106, %v1135
    %1141 = vst.msk [vmem:[%s1139] ss:$8 sm:$0x0] %vm1106, %v1135
    %s1142 = scalar_lea.vmem [#allocation2], 4
    %v1143 = vld [vmem:[%s1142] ss:$8 sm:$0x7]
    %s1144 = scalar_lea.vmem [#allocation2], 76
    %v1145 = vld [vmem:[%s1144] ss:$8 sm:$0x7]
    %s1146 = scalar_lea.vmem [#allocation2], 5
    %v1147 = vld [vmem:[%s1146] ss:$8 sm:$0x7]
    %s1148 = scalar_lea.vmem [#allocation2], 77
    %v1149 = vld [vmem:[%s1148] ss:$8 sm:$0x7]
    %v1150 = vmax.f32 %v1143, %v1147
    %v1151 = vmax.f32 %v1145, %v1149
    %1154 = vrot.lane.b32.xlu0 %v1150, 112
    %v1155 = vpop.permute.xlu0 %1154
    %1156 = vrot.lane.b32.xlu0 %v1151, 112
    %v1157 = vpop.permute.xlu0 %1156
    %v1158 = vrot.slane %v1155, 1
    %v1159 = vrot.slane %v1157, 1
    %v1160 = vsel %vm1096, %v1155, %v1158
    %v1161 = vsel %vm1096, %v1157, %v1159
    %v1164 = vmax.f32 %v1150, %v1160
    %v1165 = vmax.f32 %v1151, %v1161
    %s1166 = scalar_lea.vmem [#allocation3], 2
    %1167 = vst.msk [vmem:[%s1166] ss:$8 sm:$0x7] %vm1106, %v1164
    %1168 = vst.msk [vmem:[%s1166] ss:$8 sm:$0x0] %vm1106, %v1164
    %s1169 = scalar_lea.vmem [#allocation3], 50
    %1170 = vst.msk [vmem:[%s1169] ss:$8 sm:$0x7] %vm1106, %v1165
    %1171 = vst.msk [vmem:[%s1169] ss:$8 sm:$0x0] %vm1106, %v1165
    %s1172 = scalar_lea.vmem [#allocation2], 6
    %v1173 = vld [vmem:[%s1172] ss:$8 sm:$0x7]
    %s1174 = scalar_lea.vmem [#allocation2], 78
    %v1175 = vld [vmem:[%s1174] ss:$8 sm:$0x7]
    %s1176 = scalar_lea.vmem [#allocation2], 7
    %v1177 = vld [vmem:[%s1176] ss:$8 sm:$0x7]
    %s1178 = scalar_lea.vmem [#allocation2], 79
    %v1179 = vld [vmem:[%s1178] ss:$8 sm:$0x7]
    %v1180 = vmax.f32 %v1173, %v1177
    %v1181 = vmax.f32 %v1175, %v1179
    %1184 = vrot.lane.b32.xlu0 %v1180, 112
    %v1185 = vpop.permute.xlu0 %1184
    %1186 = vrot.lane.b32.xlu0 %v1181, 112
    %v1187 = vpop.permute.xlu0 %1186
    %v1188 = vrot.slane %v1185, 1
    %v1189 = vrot.slane %v1187, 1
    %v1190 = vsel %vm1096, %v1185, %v1188
    %v1191 = vsel %vm1096, %v1187, %v1189
    %v1194 = vmax.f32 %v1180, %v1190
    %v1195 = vmax.f32 %v1181, %v1191
    %s1196 = scalar_lea.vmem [#allocation3], 3
    %1197 = vst.msk [vmem:[%s1196] ss:$8 sm:$0x7] %vm1106, %v1194
    %1198 = vst.msk [vmem:[%s1196] ss:$8 sm:$0x0] %vm1106, %v1194
    %s1199 = scalar_lea.vmem [#allocation3], 51
    %1200 = vst.msk [vmem:[%s1199] ss:$8 sm:$0x7] %vm1106, %v1195
    %1201 = vst.msk [vmem:[%s1199] ss:$8 sm:$0x0] %vm1106, %v1195
    %s1202 = scalar_lea.vmem [#allocation2], 24
    %v1203 = vld [vmem:[%s1202] ss:$8 sm:$0x7]
    %s1204 = scalar_lea.vmem [#allocation2], 96
    %v1205 = vld [vmem:[%s1204] ss:$8 sm:$0x7]
    %s1206 = scalar_lea.vmem [#allocation2], 25
    %v1207 = vld [vmem:[%s1206] ss:$8 sm:$0x7]
    %s1208 = scalar_lea.vmem [#allocation2], 97
    %v1209 = vld [vmem:[%s1208] ss:$8 sm:$0x7]
    %v1210 = vmax.f32 %v1203, %v1207
    %v1211 = vmax.f32 %v1205, %v1209
    %1214 = vrot.lane.b32.xlu0 %v1210, 112
    %v1215 = vpop.permute.xlu0 %1214
    %1216 = vrot.lane.b32.xlu0 %v1211, 112
    %v1217 = vpop.permute.xlu0 %1216
    %v1218 = vrot.slane %v1215, 1
    %v1219 = vrot.slane %v1217, 1
    %v1220 = vsel %vm1096, %v1215, %v1218
    %v1221 = vsel %vm1096, %v1217, %v1219
    %v1224 = vmax.f32 %v1210, %v1220
    %v1225 = vmax.f32 %v1211, %v1221
    %s1226 = scalar_lea.vmem [#allocation3], 4
    %1227 = vst.msk [vmem:[%s1226] ss:$8 sm:$0x7] %vm1106, %v1224
    %1228 = vst.msk [vmem:[%s1226] ss:$8 sm:$0x0] %vm1106, %v1224
    %s1229 = scalar_lea.vmem [#allocation3], 52
    %1230 = vst.msk [vmem:[%s1229] ss:$8 sm:$0x7] %vm1106, %v1225
    %1231 = vst.msk [vmem:[%s1229] ss:$8 sm:$0x0] %vm1106, %v1225
    %s1232 = scalar_lea.vmem [#allocation2], 26
    %v1233 = vld [vmem:[%s1232] ss:$8 sm:$0x7]
    %s1234 = scalar_lea.vmem [#allocation2], 98
    %v1235 = vld [vmem:[%s1234] ss:$8 sm:$0x7]
    %s1236 = scalar_lea.vmem [#allocation2], 27
    %v1237 = vld [vmem:[%s1236] ss:$8 sm:$0x7]
    %s1238 = scalar_lea.vmem [#allocation2], 99
    %v1239 = vld [vmem:[%s1238] ss:$8 sm:$0x7]
    %v1240 = vmax.f32 %v1233, %v1237
    %v1241 = vmax.f32 %v1235, %v1239
    %1244 = vrot.lane.b32.xlu0 %v1240, 112
    %v1245 = vpop.permute.xlu0 %1244
    %1246 = vrot.lane.b32.xlu0 %v1241, 112
    %v1247 = vpop.permute.xlu0 %1246
    %v1248 = vrot.slane %v1245, 1
    %v1249 = vrot.slane %v1247, 1
    %v1250 = vsel %vm1096, %v1245, %v1248
    %v1251 = vsel %vm1096, %v1247, %v1249
    %v1254 = vmax.f32 %v1240, %v1250
    %v1255 = vmax.f32 %v1241, %v1251
    %s1256 = scalar_lea.vmem [#allocation3], 5
    %1257 = vst.msk [vmem:[%s1256] ss:$8 sm:$0x7] %vm1106, %v1254
    %1258 = vst.msk [vmem:[%s1256] ss:$8 sm:$0x0] %vm1106, %v1254
    %s1259 = scalar_lea.vmem [#allocation3], 53
    %1260 = vst.msk [vmem:[%s1259] ss:$8 sm:$0x7] %vm1106, %v1255
    %1261 = vst.msk [vmem:[%s1259] ss:$8 sm:$0x0] %vm1106, %v1255
    %s1262 = scalar_lea.vmem [#allocation2], 28
    %v1263 = vld [vmem:[%s1262] ss:$8 sm:$0x7]
    %s1264 = scalar_lea.vmem [#allocation2], 100
    %v1265 = vld [vmem:[%s1264] ss:$8 sm:$0x7]
    %s1266 = scalar_lea.vmem [#allocation2], 29
    %v1267 = vld [vmem:[%s1266] ss:$8 sm:$0x7]
    %s1268 = scalar_lea.vmem [#allocation2], 101
    %v1269 = vld [vmem:[%s1268] ss:$8 sm:$0x7]
    %v1270 = vmax.f32 %v1263, %v1267
    %v1271 = vmax.f32 %v1265, %v1269
    %1274 = vrot.lane.b32.xlu0 %v1270, 112
    %v1275 = vpop.permute.xlu0 %1274
    %1276 = vrot.lane.b32.xlu0 %v1271, 112
    %v1277 = vpop.permute.xlu0 %1276
    %v1278 = vrot.slane %v1275, 1
    %v1279 = vrot.slane %v1277, 1
    %v1280 = vsel %vm1096, %v1275, %v1278
    %v1281 = vsel %vm1096, %v1277, %v1279
    %v1284 = vmax.f32 %v1270, %v1280
    %v1285 = vmax.f32 %v1271, %v1281
    %s1286 = scalar_lea.vmem [#allocation3], 6
    %1287 = vst.msk [vmem:[%s1286] ss:$8 sm:$0x7] %vm1106, %v1284
    %1288 = vst.msk [vmem:[%s1286] ss:$8 sm:$0x0] %vm1106, %v1284
    %s1289 = scalar_lea.vmem [#allocation3], 54
    %1290 = vst.msk [vmem:[%s1289] ss:$8 sm:$0x7] %vm1106, %v1285
    %1291 = vst.msk [vmem:[%s1289] ss:$8 sm:$0x0] %vm1106, %v1285
    %s1292 = scalar_lea.vmem [#allocation2], 30
    %v1293 = vld [vmem:[%s1292] ss:$8 sm:$0x7]
    %s1294 = scalar_lea.vmem [#allocation2], 102
    %v1295 = vld [vmem:[%s1294] ss:$8 sm:$0x7]
    %s1296 = scalar_lea.vmem [#allocation2], 31
    %v1297 = vld [vmem:[%s1296] ss:$8 sm:$0x7]
    %s1298 = scalar_lea.vmem [#allocation2], 103
    %v1299 = vld [vmem:[%s1298] ss:$8 sm:$0x7]
    %v1300 = vmax.f32 %v1293, %v1297
    %v1301 = vmax.f32 %v1295, %v1299
    %1304 = vrot.lane.b32.xlu0 %v1300, 112
    %v1305 = vpop.permute.xlu0 %1304
    %1306 = vrot.lane.b32.xlu0 %v1301, 112
    %v1307 = vpop.permute.xlu0 %1306
    %v1308 = vrot.slane %v1305, 1
    %v1309 = vrot.slane %v1307, 1
    %v1310 = vsel %vm1096, %v1305, %v1308
    %v1311 = vsel %vm1096, %v1307, %v1309
    %v1314 = vmax.f32 %v1300, %v1310
    %v1315 = vmax.f32 %v1301, %v1311
    %s1316 = scalar_lea.vmem [#allocation3], 7
    %1317 = vst.msk [vmem:[%s1316] ss:$8 sm:$0x7] %vm1106, %v1314
    %1318 = vst.msk [vmem:[%s1316] ss:$8 sm:$0x0] %vm1106, %v1314
    %s1319 = scalar_lea.vmem [#allocation3], 55
    %1320 = vst.msk [vmem:[%s1319] ss:$8 sm:$0x7] %vm1106, %v1315
    %1321 = vst.msk [vmem:[%s1319] ss:$8 sm:$0x0] %vm1106, %v1315
    %s1322 = scalar_lea.vmem [#allocation2], 48
    %v1323 = vld [vmem:[%s1322] ss:$8 sm:$0x7]
    %s1324 = scalar_lea.vmem [#allocation2], 120
    %v1325 = vld [vmem:[%s1324] ss:$8 sm:$0x7]
    %s1326 = scalar_lea.vmem [#allocation2], 49
    %v1327 = vld [vmem:[%s1326] ss:$8 sm:$0x7]
    %s1328 = scalar_lea.vmem [#allocation2], 121
    %v1329 = vld [vmem:[%s1328] ss:$8 sm:$0x7]
    %v1330 = vmax.f32 %v1323, %v1327
    %v1331 = vmax.f32 %v1325, %v1329
    %1334 = vrot.lane.b32.xlu0 %v1330, 112
    %v1335 = vpop.permute.xlu0 %1334
    %1336 = vrot.lane.b32.xlu0 %v1331, 112
    %v1337 = vpop.permute.xlu0 %1336
    %v1338 = vrot.slane %v1335, 1
    %v1339 = vrot.slane %v1337, 1
    %v1340 = vsel %vm1096, %v1335, %v1338
    %v1341 = vsel %vm1096, %v1337, %v1339
    %v1344 = vmax.f32 %v1330, %v1340
    %v1345 = vmax.f32 %v1331, %v1341
    %s1346 = scalar_lea.vmem [#allocation3], 24
    %1347 = vst.msk [vmem:[%s1346] ss:$8 sm:$0x7] %vm1106, %v1344
    %1348 = vst.msk [vmem:[%s1346] ss:$8 sm:$0x0] %vm1106, %v1344
    %s1349 = scalar_lea.vmem [#allocation3], 72
    %1350 = vst.msk [vmem:[%s1349] ss:$8 sm:$0x7] %vm1106, %v1345
    %1351 = vst.msk [vmem:[%s1349] ss:$8 sm:$0x0] %vm1106, %v1345
    %s1352 = scalar_lea.vmem [#allocation2], 50
    %v1353 = vld [vmem:[%s1352] ss:$8 sm:$0x7]
    %s1354 = scalar_lea.vmem [#allocation2], 122
    %v1355 = vld [vmem:[%s1354] ss:$8 sm:$0x7]
    %s1356 = scalar_lea.vmem [#allocation2], 51
    %v1357 = vld [vmem:[%s1356] ss:$8 sm:$0x7]
    %s1358 = scalar_lea.vmem [#allocation2], 123
    %v1359 = vld [vmem:[%s1358] ss:$8 sm:$0x7]
    %v1360 = vmax.f32 %v1353, %v1357
    %v1361 = vmax.f32 %v1355, %v1359
    %1364 = vrot.lane.b32.xlu0 %v1360, 112
    %v1365 = vpop.permute.xlu0 %1364
    %1366 = vrot.lane.b32.xlu0 %v1361, 112
    %v1367 = vpop.permute.xlu0 %1366
    %v1368 = vrot.slane %v1365, 1
    %v1369 = vrot.slane %v1367, 1
    %v1370 = vsel %vm1096, %v1365, %v1368
    %v1371 = vsel %vm1096, %v1367, %v1369
    %v1374 = vmax.f32 %v1360, %v1370
    %v1375 = vmax.f32 %v1361, %v1371
    %s1376 = scalar_lea.vmem [#allocation3], 25
    %1377 = vst.msk [vmem:[%s1376] ss:$8 sm:$0x7] %vm1106, %v1374
    %1378 = vst.msk [vmem:[%s1376] ss:$8 sm:$0x0] %vm1106, %v1374
    %s1379 = scalar_lea.vmem [#allocation3], 73
    %1380 = vst.msk [vmem:[%s1379] ss:$8 sm:$0x7] %vm1106, %v1375
    %1381 = vst.msk [vmem:[%s1379] ss:$8 sm:$0x0] %vm1106, %v1375
    %s1382 = scalar_lea.vmem [#allocation2], 52
    %v1383 = vld [vmem:[%s1382] ss:$8 sm:$0x7]
    %s1384 = scalar_lea.vmem [#allocation2], 124
    %v1385 = vld [vmem:[%s1384] ss:$8 sm:$0x7]
    %s1386 = scalar_lea.vmem [#allocation2], 53
    %v1387 = vld [vmem:[%s1386] ss:$8 sm:$0x7]
    %s1388 = scalar_lea.vmem [#allocation2], 125
    %v1389 = vld [vmem:[%s1388] ss:$8 sm:$0x7]
    %v1390 = vmax.f32 %v1383, %v1387
    %v1391 = vmax.f32 %v1385, %v1389
    %1394 = vrot.lane.b32.xlu0 %v1390, 112
    %v1395 = vpop.permute.xlu0 %1394
    %1396 = vrot.lane.b32.xlu0 %v1391, 112
    %v1397 = vpop.permute.xlu0 %1396
    %v1398 = vrot.slane %v1395, 1
    %v1399 = vrot.slane %v1397, 1
    %v1400 = vsel %vm1096, %v1395, %v1398
    %v1401 = vsel %vm1096, %v1397, %v1399
    %v1404 = vmax.f32 %v1390, %v1400
    %v1405 = vmax.f32 %v1391, %v1401
    %s1406 = scalar_lea.vmem [#allocation3], 26
    %1407 = vst.msk [vmem:[%s1406] ss:$8 sm:$0x7] %vm1106, %v1404
    %1408 = vst.msk [vmem:[%s1406] ss:$8 sm:$0x0] %vm1106, %v1404
    %s1409 = scalar_lea.vmem [#allocation3], 74
    %1410 = vst.msk [vmem:[%s1409] ss:$8 sm:$0x7] %vm1106, %v1405
    %1411 = vst.msk [vmem:[%s1409] ss:$8 sm:$0x0] %vm1106, %v1405
    %s1412 = scalar_lea.vmem [#allocation2], 54
    %v1413 = vld [vmem:[%s1412] ss:$8 sm:$0x7]
    %s1414 = scalar_lea.vmem [#allocation2], 126
    %v1415 = vld [vmem:[%s1414] ss:$8 sm:$0x7]
    %s1416 = scalar_lea.vmem [#allocation2], 55
    %v1417 = vld [vmem:[%s1416] ss:$8 sm:$0x7]
    %s1418 = scalar_lea.vmem [#allocation2], 127
    %v1419 = vld [vmem:[%s1418] ss:$8 sm:$0x7]
    %v1420 = vmax.f32 %v1413, %v1417
    %v1421 = vmax.f32 %v1415, %v1419
    %1424 = vrot.lane.b32.xlu0 %v1420, 112
    %v1425 = vpop.permute.xlu0 %1424
    %1426 = vrot.lane.b32.xlu0 %v1421, 112
    %v1427 = vpop.permute.xlu0 %1426
    %v1428 = vrot.slane %v1425, 1
    %v1429 = vrot.slane %v1427, 1
    %v1430 = vsel %vm1096, %v1425, %v1428
    %v1431 = vsel %vm1096, %v1427, %v1429
    %v1434 = vmax.f32 %v1420, %v1430
    %v1435 = vmax.f32 %v1421, %v1431
    %s1436 = scalar_lea.vmem [#allocation3], 27
    %1437 = vst.msk [vmem:[%s1436] ss:$8 sm:$0x7] %vm1106, %v1434
    %1438 = vst.msk [vmem:[%s1436] ss:$8 sm:$0x0] %vm1106, %v1434
    %s1439 = scalar_lea.vmem [#allocation3], 75
    %1440 = vst.msk [vmem:[%s1439] ss:$8 sm:$0x7] %vm1106, %v1435
    %1441 = vst.msk [vmem:[%s1439] ss:$8 sm:$0x0] %vm1106, %v1435
    %v1442 = vld [vmem:[#allocation3] sm:$0xff]
    %v1443 = vld [vmem:[#allocation3 + $0x8] sm:$0xff]
    %v1444 = vld [vmem:[#allocation3 + $0x10] sm:$0xff]
    %v1445 = vld [vmem:[#allocation3 + $0x30] sm:$0xff]
    %v1446 = vld [vmem:[#allocation3 + $0x38] sm:$0xff]
    %v1447 = vld [vmem:[#allocation3 + $0x40] sm:$0xff]
    %v1448 = vpack.c.bf16 %v1445, %v1442
    %v1449 = vpack.c.bf16 %v1446, %v1443
    %v1450 = vpack.c.bf16 %v1447, %v1444
    %v1451 = vld [vmem:[%s3] sm:$0xff]
    %v1452 = vld [vmem:[%s3 + $0x8] sm:$0xff]
    %v1453 = vld [vmem:[%s3 + $0x10] sm:$0xff]
    %v1454 = vld [vmem:[%s3 + $0x18] sm:$0xff]
    %v1455 = vld [vmem:[%s3 + $0x20] sm:$0xff]
    %v1456 = vld [vmem:[%s3 + $0x28] sm:$0xff]
    %v1457 = vld [vmem:[%s3 + $0x30] sm:$0xff]
    %v1458 = vld [vmem:[%s3 + $0x38] sm:$0xff]
    %v1459 = vld [vmem:[%s3 + $0x40] sm:$0xff]
    %v1460 = vld [vmem:[%s3 + $0x48] sm:$0xff]
    %v1461 = vld [vmem:[%s3 + $0x50] sm:$0xff]
    %v1462 = vld [vmem:[%s3 + $0x58] sm:$0xff]
    %v1463 = vld [vmem:[%s3 + $0x60] sm:$0xff]
    %v1464 = vld [vmem:[%s3 + $0x68] sm:$0xff]
    %v1465 = vld [vmem:[%s3 + $0x70] sm:$0xff]
    %v1466 = vld [vmem:[%s3 + $0x78] sm:$0xff]
    %v1467 = vld [vmem:[%s3 + $0x80] sm:$0xff]
    %v1468 = vld [vmem:[%s3 + $0x88] sm:$0xff]
    %v1469 = vld [vmem:[%s3 + $0x90] sm:$0xff]
    %v1470 = vld [vmem:[%s3 + $0x98] sm:$0xff]
    %v1471 = vld [vmem:[%s3 + $0xa0] sm:$0xff]
    %v1472 = vld [vmem:[%s3 + $0xa8] sm:$0xff]
    %v1473 = vld [vmem:[%s3 + $0xb0] sm:$0xff]
    %v1474 = vld [vmem:[%s3 + $0xb8] sm:$0xff]
    %v1475 = vld [vmem:[%s3 + $0xc0] sm:$0xff]
    %v1476 = vld [vmem:[%s3 + $0xc8] sm:$0xff]
    %v1477 = vld [vmem:[%s3 + $0xd0] sm:$0xff]
    %v1478 = vld [vmem:[%s3 + $0xd8] sm:$0xff]
    %v1479 = vld [vmem:[%s3 + $0xe0] sm:$0xff]
    %v1480 = vld [vmem:[%s3 + $0xe8] sm:$0xff]
    %v1481 = vld [vmem:[%s3 + $0xf0] sm:$0xff]
    %v1482 = vld [vmem:[%s3 + $0xf8] sm:$0xff]
    %v1483 = vld [vmem:[%s3 + $0x100] sm:$0xff]
    %v1484 = vld [vmem:[%s3 + $0x108] sm:$0xff]
    %v1485 = vld [vmem:[%s3 + $0x110] sm:$0xff]
    %v1486 = vld [vmem:[%s3 + $0x118] sm:$0xff]
    %v1487 = vld [vmem:[%s3 + $0x120] sm:$0xff]
    %v1488 = vld [vmem:[%s3 + $0x128] sm:$0xff]
    %v1489 = vld [vmem:[%s3 + $0x130] sm:$0xff]
    %v1490 = vld [vmem:[%s3 + $0x138] sm:$0xff]
    %v1491 = vld [vmem:[%s3 + $0x140] sm:$0xff]
    %v1492 = vld [vmem:[%s3 + $0x148] sm:$0xff]
    %v1493 = vld [vmem:[%s3 + $0x150] sm:$0xff]
    %v1494 = vld [vmem:[%s3 + $0x158] sm:$0xff]
    %v1495 = vld [vmem:[%s3 + $0x160] sm:$0xff]
    %v1496 = vld [vmem:[%s3 + $0x168] sm:$0xff]
    %v1497 = vld [vmem:[#allocation3] sm:$0xfe]
    %v1498 = vld [vmem:[#allocation3 + $0x8] sm:$0xfe]
    %v1499 = vld [vmem:[#allocation3 + $0x10] sm:$0xfe]
    %v1500 = vld [vmem:[#allocation3 + $0x18] sm:$0x1]
    %v1501 = vld [vmem:[#allocation3 + $0x20] sm:$0x1]
    %v1502 = vld [vmem:[#allocation3 + $0x28] sm:$0x1]
    %v1503 = vld [vmem:[#allocation3 + $0x30] sm:$0xfe]
    %v1504 = vld [vmem:[#allocation3 + $0x38] sm:$0xfe]
    %v1505 = vld [vmem:[#allocation3 + $0x40] sm:$0xfe]
    %v1506 = vld [vmem:[#allocation3 + $0x48] sm:$0x1]
    %v1507 = vld [vmem:[#allocation3 + $0x50] sm:$0x1]
    %v1508 = vld [vmem:[#allocation3 + $0x58] sm:$0x1]
    %vm1521 = vcmask 1046528
    %v1522 = vrot.slane %v1497, 1
    %v1523 = vrot.slane %v1500, 1
    %v1524 = vsel %vm1521, %v1522, %v1523
    %v1525 = vrot.slane %v1498, 1
    %v1526 = vrot.slane %v1501, 1
    %v1527 = vsel %vm1521, %v1525, %v1526
    %v1528 = vrot.slane %v1499, 1
    %v1529 = vrot.slane %v1502, 1
    %v1530 = vsel %vm1521, %v1528, %v1529
    %v1531 = vrot.slane %v1503, 1
    %v1532 = vrot.slane %v1506, 1
    %v1533 = vsel %vm1521, %v1531, %v1532
    %v1534 = vrot.slane %v1504, 1
    %v1535 = vrot.slane %v1507, 1
    %v1536 = vsel %vm1521, %v1534, %v1535
    %v1537 = vrot.slane %v1505, 1
    %v1538 = vrot.slane %v1508, 1
    %v1539 = vsel %vm1521, %v1537, %v1538
    %v1546 = vpack.c.bf16 %v1533, %v1524
    %v1547 = vpack.c.bf16 %v1536, %v1527
    %v1548 = vpack.c.bf16 %v1539, %v1530
    %s1549 = scalar_lea.vmem %s3, 368
    %v1550 = vld [vmem:[%s1549] sm:$0xff]
    %v1551 = vld [vmem:[%s1549 + $0x8] sm:$0xff]
    %v1552 = vld [vmem:[%s1549 + $0x10] sm:$0xff]
    %v1553 = vld [vmem:[%s1549 + $0x18] sm:$0xff]
    %v1554 = vld [vmem:[%s1549 + $0x20] sm:$0xff]
    %v1555 = vld [vmem:[%s1549 + $0x28] sm:$0xff]
    %v1556 = vld [vmem:[%s1549 + $0x30] sm:$0xff]
    %v1557 = vld [vmem:[%s1549 + $0x38] sm:$0xff]
    %v1558 = vld [vmem:[%s1549 + $0x40] sm:$0xff]
    %v1559 = vld [vmem:[%s1549 + $0x48] sm:$0xff]
    %v1560 = vld [vmem:[%s1549 + $0x50] sm:$0xff]
    %v1561 = vld [vmem:[%s1549 + $0x58] sm:$0xff]
    %v1562 = vld [vmem:[%s1549 + $0x60] sm:$0xff]
    %v1563 = vld [vmem:[%s1549 + $0x68] sm:$0xff]
    %v1564 = vld [vmem:[%s1549 + $0x70] sm:$0xff]
    %v1565 = vld [vmem:[%s1549 + $0x78] sm:$0xff]
    %v1566 = vld [vmem:[%s1549 + $0x80] sm:$0xff]
    %v1567 = vld [vmem:[%s1549 + $0x88] sm:$0xff]
    %v1568 = vld [vmem:[%s1549 + $0x90] sm:$0xff]
    %v1569 = vld [vmem:[%s1549 + $0x98] sm:$0xff]
    %v1570 = vld [vmem:[%s1549 + $0xa0] sm:$0xff]
    %v1571 = vld [vmem:[%s1549 + $0xa8] sm:$0xff]
    %v1572 = vld [vmem:[%s1549 + $0xb0] sm:$0xff]
    %v1573 = vld [vmem:[%s1549 + $0xb8] sm:$0xff]
    %v1574 = vld [vmem:[%s1549 + $0xc0] sm:$0xff]
    %v1575 = vld [vmem:[%s1549 + $0xc8] sm:$0xff]
    %v1576 = vld [vmem:[%s1549 + $0xd0] sm:$0xff]
    %v1577 = vld [vmem:[%s1549 + $0xd8] sm:$0xff]
    %v1578 = vld [vmem:[%s1549 + $0xe0] sm:$0xff]
    %v1579 = vld [vmem:[%s1549 + $0xe8] sm:$0xff]
    %v1580 = vld [vmem:[%s1549 + $0xf0] sm:$0xff]
    %v1581 = vld [vmem:[%s1549 + $0xf8] sm:$0xff]
    %v1582 = vld [vmem:[%s1549 + $0x100] sm:$0xff]
    %v1583 = vld [vmem:[%s1549 + $0x108] sm:$0xff]
    %v1584 = vld [vmem:[%s1549 + $0x110] sm:$0xff]
    %v1585 = vld [vmem:[%s1549 + $0x118] sm:$0xff]
    %v1586 = vld [vmem:[%s1549 + $0x120] sm:$0xff]
    %v1587 = vld [vmem:[%s1549 + $0x128] sm:$0xff]
    %v1588 = vld [vmem:[%s1549 + $0x130] sm:$0xff]
    %v1589 = vld [vmem:[%s1549 + $0x138] sm:$0xff]
    %v1590 = vld [vmem:[%s1549 + $0x140] sm:$0xff]
    %v1591 = vld [vmem:[%s1549 + $0x148] sm:$0xff]
    %v1592 = vld [vmem:[%s1549 + $0x150] sm:$0xff]
    %v1593 = vld [vmem:[%s1549 + $0x158] sm:$0xff]
    %v1594 = vld [vmem:[%s1549 + $0x160] sm:$0xff]
    %v1595 = vld [vmem:[%s1549 + $0x168] sm:$0xff]
    %v1642 = vunpack.c.l.b16 %v1550
    %v1643 = vunpack.c.h.b16 %v1550
    %v1644 = vunpack.c.l.b16 %v1551
    %v1645 = vunpack.c.h.b16 %v1551
    %v1646 = vunpack.c.l.b16 %v1552
    %v1647 = vunpack.c.h.b16 %v1552
    %v1648 = vunpack.c.l.b16 %v1553
    %v1649 = vunpack.c.h.b16 %v1553
    %v1650 = vunpack.c.l.b16 %v1554
    %v1651 = vunpack.c.h.b16 %v1554
    %v1652 = vunpack.c.l.b16 %v1555
    %v1653 = vunpack.c.h.b16 %v1555
    %v1654 = vunpack.c.l.b16 %v1556
    %v1655 = vunpack.c.h.b16 %v1556
    %v1656 = vunpack.c.l.b16 %v1557
    %v1657 = vunpack.c.h.b16 %v1557
    %v1658 = vunpack.c.l.b16 %v1558
    %v1659 = vunpack.c.h.b16 %v1558
    %v1660 = vunpack.c.l.b16 %v1559
    %v1661 = vunpack.c.h.b16 %v1559
    %v1662 = vunpack.c.l.b16 %v1560
    %v1663 = vunpack.c.h.b16 %v1560
    %v1664 = vunpack.c.l.b16 %v1561
    %v1665 = vunpack.c.h.b16 %v1561
    %v1666 = vunpack.c.l.b16 %v1562
    %v1667 = vunpack.c.h.b16 %v1562
    %v1668 = vunpack.c.l.b16 %v1563
    %v1669 = vunpack.c.h.b16 %v1563
    %v1670 = vunpack.c.l.b16 %v1564
    %v1671 = vunpack.c.h.b16 %v1564
    %v1672 = vunpack.c.l.b16 %v1565
    %v1673 = vunpack.c.h.b16 %v1565
    %v1674 = vunpack.c.l.b16 %v1566
    %v1675 = vunpack.c.h.b16 %v1566
    %v1676 = vunpack.c.l.b16 %v1567
    %v1677 = vunpack.c.h.b16 %v1567
    %v1678 = vunpack.c.l.b16 %v1568
    %v1679 = vunpack.c.h.b16 %v1568
    %v1680 = vunpack.c.l.b16 %v1569
    %v1681 = vunpack.c.h.b16 %v1569
    %v1682 = vunpack.c.l.b16 %v1570
    %v1683 = vunpack.c.h.b16 %v1570
    %v1684 = vunpack.c.l.b16 %v1571
    %v1685 = vunpack.c.h.b16 %v1571
    %v1686 = vunpack.c.l.b16 %v1572
    %v1687 = vunpack.c.h.b16 %v1572
    %v1688 = vunpack.c.l.b16 %v1573
    %v1689 = vunpack.c.h.b16 %v1573
    %v1690 = vunpack.c.l.b16 %v1574
    %v1691 = vunpack.c.h.b16 %v1574
    %v1692 = vunpack.c.l.b16 %v1575
    %v1693 = vunpack.c.h.b16 %v1575
    %v1694 = vunpack.c.l.b16 %v1576
    %v1695 = vunpack.c.h.b16 %v1576
    %v1696 = vunpack.c.l.b16 %v1577
    %v1697 = vunpack.c.h.b16 %v1577
    %v1698 = vunpack.c.l.b16 %v1578
    %v1699 = vunpack.c.h.b16 %v1578
    %v1700 = vunpack.c.l.b16 %v1579
    %v1701 = vunpack.c.h.b16 %v1579
    %v1702 = vunpack.c.l.b16 %v1580
    %v1703 = vunpack.c.h.b16 %v1580
    %v1704 = vunpack.c.l.b16 %v1581
    %v1705 = vunpack.c.h.b16 %v1581
    %v1706 = vunpack.c.l.b16 %v1582
    %v1707 = vunpack.c.h.b16 %v1582
    %v1708 = vunpack.c.l.b16 %v1583
    %v1709 = vunpack.c.h.b16 %v1583
    %v1710 = vunpack.c.l.b16 %v1584
    %v1711 = vunpack.c.h.b16 %v1584
    %v1712 = vunpack.c.l.b16 %v1585
    %v1713 = vunpack.c.h.b16 %v1585
    %v1714 = vunpack.c.l.b16 %v1586
    %v1715 = vunpack.c.h.b16 %v1586
    %v1716 = vunpack.c.l.b16 %v1587
    %v1717 = vunpack.c.h.b16 %v1587
    %v1718 = vunpack.c.l.b16 %v1588
    %v1719 = vunpack.c.h.b16 %v1588
    %v1720 = vunpack.c.l.b16 %v1589
    %v1721 = vunpack.c.h.b16 %v1589
    %v1722 = vunpack.c.l.b16 %v1590
    %v1723 = vunpack.c.h.b16 %v1590
    %v1724 = vunpack.c.l.b16 %v1591
    %v1725 = vunpack.c.h.b16 %v1591
    %v1726 = vunpack.c.l.b16 %v1592
    %v1727 = vunpack.c.h.b16 %v1592
    %v1728 = vunpack.c.l.b16 %v1593
    %v1729 = vunpack.c.h.b16 %v1593
    %v1730 = vunpack.c.l.b16 %v1594
    %v1731 = vunpack.c.h.b16 %v1594
    %v1732 = vunpack.c.l.b16 %v1595
    %v1733 = vunpack.c.h.b16 %v1595
    %v1734 = vpack.c.b16 %v1644, %v1642
    %v1735 = vpack.c.b16 %v1645, %v1643
    %v1736 = vpack.c.b16 %v1648, %v1646
    %v1737 = vpack.c.b16 %v1649, %v1647
    %v1738 = vpack.c.b16 %v1652, %v1650
    %v1739 = vpack.c.b16 %v1653, %v1651
    %v1740 = vpack.c.b16 %v1656, %v1654
    %v1741 = vpack.c.b16 %v1657, %v1655
    %v1742 = vpack.c.b16 %v1660, %v1658
    %v1743 = vpack.c.b16 %v1661, %v1659
    %v1744 = vpack.c.b16 %v1664, %v1662
    %v1745 = vpack.c.b16 %v1665, %v1663
    %v1746 = vpack.c.b16 %v1668, %v1666
    %v1747 = vpack.c.b16 %v1669, %v1667
    %v1748 = vpack.c.b16 %v1672, %v1670
    %v1749 = vpack.c.b16 %v1673, %v1671
    %v1750 = vpack.c.b16 %v1676, %v1674
    %v1751 = vpack.c.b16 %v1677, %v1675
    %v1752 = vpack.c.b16 %v1680, %v1678
    %v1753 = vpack.c.b16 %v1681, %v1679
    %v1754 = vpack.c.b16 %v1684, %v1682
    %v1755 = vpack.c.b16 %v1685, %v1683
    %v1756 = vpack.c.b16 %v1688, %v1686
    %v1757 = vpack.c.b16 %v1689, %v1687
    %v1758 = vpack.c.b16 %v1692, %v1690
    %v1759 = vpack.c.b16 %v1693, %v1691
    %v1760 = vpack.c.b16 %v1696, %v1694
    %v1761 = vpack.c.b16 %v1697, %v1695
    %v1762 = vpack.c.b16 %v1700, %v1698
    %v1763 = vpack.c.b16 %v1701, %v1699
    %v1764 = vpack.c.b16 %v1704, %v1702
    %v1765 = vpack.c.b16 %v1705, %v1703
    %v1766 = vpack.c.b16 %v1708, %v1706
    %v1767 = vpack.c.b16 %v1709, %v1707
    %v1768 = vpack.c.b16 %v1712, %v1710
    %v1769 = vpack.c.b16 %v1713, %v1711
    %v1770 = vpack.c.b16 %v1716, %v1714
    %v1771 = vpack.c.b16 %v1717, %v1715
    %v1772 = vpack.c.b16 %v1720, %v1718
    %v1773 = vpack.c.b16 %v1721, %v1719
    %v1774 = vpack.c.b16 %v1724, %v1722
    %v1775 = vpack.c.b16 %v1725, %v1723
    %v1776 = vpack.c.b16 %v1728, %v1726
    %v1777 = vpack.c.b16 %v1729, %v1727
    %v1778 = vpack.c.b16 %v1732, %v1730
    %v1779 = vpack.c.b16 %v1733, %v1731
    %v1827 = vsel %vm1096, %v1548, 0
    %1829 = vmatprep.subr.bf16.mxu0 %v1749
    %1830 = vmatpush1.bf16.msra.mxu0 %v1748
    %1831 = vmatprep.subr.bf16.mxu0 %v1747
    %1832 = vmatpush1.bf16.msra.mxu0 %v1746
    %1833 = vmatprep.subr.bf16.mxu0 %v1745
    %1834 = vmatpush1.bf16.msra.mxu0 %v1744
    %1835 = vmatprep.subr.bf16.mxu0 %v1743
    %1836 = vmatpush1.bf16.msra.mxu0 %v1742
    %1837 = vmatprep.subr.bf16.mxu0 %v1741
    %1838 = vmatpush1.bf16.msra.mxu0 %v1740
    %1839 = vmatprep.subr.bf16.mxu0 %v1739
    %1840 = vmatpush1.bf16.msra.mxu0 %v1738
    %1841 = vmatprep.subr.bf16.mxu0 %v1737
    %1842 = vmatpush1.bf16.msra.mxu0 %v1736
    %1843 = vmatprep.subr.bf16.mxu0 %v1735
    %1844 = vmatpush1.bf16.msra.mxu0 %v1734
    %1845 = vmatprep.subr.bf16.mxu0 %v1765
    %1846 = vmatpush2.bf16.msra.mxu0 %v1764
    %1847 = vmatprep.subr.bf16.mxu0 %v1763
    %1848 = vmatpush2.bf16.msra.mxu0 %v1762
    %1849 = vmatprep.subr.bf16.mxu0 %v1761
    %1850 = vmatpush2.bf16.msra.mxu0 %v1760
    %1851 = vmatprep.subr.bf16.mxu0 %v1759
    %1852 = vmatpush2.bf16.msra.mxu0 %v1758
    %1853 = vmatprep.subr.bf16.mxu0 %v1757
    %1854 = vmatpush2.bf16.msra.mxu0 %v1756
    %1855 = vmatprep.subr.bf16.mxu0 %v1755
    %1856 = vmatpush2.bf16.msra.mxu0 %v1754
    %1857 = vmatprep.subr.bf16.mxu0 %v1753
    %1858 = vmatpush2.bf16.msra.mxu0 %v1752
    %1859 = vmatprep.subr.bf16.mxu0 %v1751
    %1860 = vmatpush2.bf16.msra.mxu0 %v1750
    %1861 = vmatprep.mubr.bf16.mxu0 %v1547
    %1862 = vmatmul.mubr.bf16.gmra.mxu0 %v1546
    %v1863 = vpop.f32.mrf.mxu0
    %v1864 = vadd.f32 0.0, %v1863
    %v1865 = vpop.f32.mrf.mxu0
    %v1866 = vadd.f32 0.0, %v1865
    %v1867 = vpop.f32.mrf.mxu0
    %v1868 = vadd.f32 0.0, %v1867
    %v1869 = vpop.f32.mrf.mxu0
    %v1870 = vadd.f32 0.0, %v1869
    %1871 = vdwg.mxu0
    %1872 = vmatprep.subr.bf16.mxu0 0
    %1873 = vmatpush1.bf16.msra.mxu0 0
    %1874 = vmatprep.subr.bf16.mxu0 %v1779
    %1875 = vmatpush1.bf16.msra.mxu0 %v1778
    %1876 = vmatprep.subr.bf16.mxu0 %v1777
    %1877 = vmatpush1.bf16.msra.mxu0 %v1776
    %1878 = vmatprep.subr.bf16.mxu0 %v1775
    %1879 = vmatpush1.bf16.msra.mxu0 %v1774
    %1880 = vmatprep.subr.bf16.mxu0 %v1773
    %1881 = vmatpush1.bf16.msra.mxu0 %v1772
    %1882 = vmatprep.subr.bf16.mxu0 %v1771
    %1883 = vmatpush1.bf16.msra.mxu0 %v1770
    %1884 = vmatprep.subr.bf16.mxu0 %v1769
    %1885 = vmatpush1.bf16.msra.mxu0 %v1768
    %1886 = vmatprep.subr.bf16.mxu0 %v1767
    %1887 = vmatpush1.bf16.msra.mxu0 %v1766
    %1888 = vmatprep.subr.bf16.mxu0 0
    %1889 = vmatpush2.bf16.msra.mxu0 0
    %1890 = vmatprep.subr.bf16.mxu0 0
    %1891 = vmatpush2.bf16.msra.mxu0 0
    %1892 = vmatprep.subr.bf16.mxu0 0
    %1893 = vmatpush2.bf16.msra.mxu0 0
    %1894 = vmatprep.subr.bf16.mxu0 0
    %1895 = vmatpush2.bf16.msra.mxu0 0
    %1896 = vmatprep.subr.bf16.mxu0 0
    %1897 = vmatpush2.bf16.msra.mxu0 0
    %1898 = vmatprep.subr.bf16.mxu0 0
    %1899 = vmatpush2.bf16.msra.mxu0 0
    %1900 = vmatprep.subr.bf16.mxu0 0
    %1901 = vmatpush2.bf16.msra.mxu0 0
    %1902 = vmatprep.subr.bf16.mxu0 0
    %1903 = vmatpush2.bf16.msra.mxu0 0
    %1904 = vmatprep.mubr.bf16.mxu0 0
    %1905 = vmatmul.mubr.bf16.gmra.mxu0 %v1827
    %v1906 = vpop.f32.mrf.mxu0
    %v1907 = vadd.f32 %v1864, %v1906
    %v1908 = vpop.f32.mrf.mxu0
    %v1909 = vadd.f32 %v1866, %v1908
    %v1910 = vpop.f32.mrf.mxu0
    %v1911 = vadd.f32 %v1868, %v1910
    %v1912 = vpop.f32.mrf.mxu0
    %v1913 = vadd.f32 %v1870, %v1912
    %1914 = vdwg.mxu0
    %v1961 = vunpack.c.l.b16 %v1451
    %v1962 = vunpack.c.h.b16 %v1451
    %v1963 = vunpack.c.l.b16 %v1452
    %v1964 = vunpack.c.h.b16 %v1452
    %v1965 = vunpack.c.l.b16 %v1453
    %v1966 = vunpack.c.h.b16 %v1453
    %v1967 = vunpack.c.l.b16 %v1454
    %v1968 = vunpack.c.h.b16 %v1454
    %v1969 = vunpack.c.l.b16 %v1455
    %v1970 = vunpack.c.h.b16 %v1455
    %v1971 = vunpack.c.l.b16 %v1456
    %v1972 = vunpack.c.h.b16 %v1456
    %v1973 = vunpack.c.l.b16 %v1457
    %v1974 = vunpack.c.h.b16 %v1457
    %v1975 = vunpack.c.l.b16 %v1458
    %v1976 = vunpack.c.h.b16 %v1458
    %v1977 = vunpack.c.l.b16 %v1459
    %v1978 = vunpack.c.h.b16 %v1459
    %v1979 = vunpack.c.l.b16 %v1460
    %v1980 = vunpack.c.h.b16 %v1460
    %v1981 = vunpack.c.l.b16 %v1461
    %v1982 = vunpack.c.h.b16 %v1461
    %v1983 = vunpack.c.l.b16 %v1462
    %v1984 = vunpack.c.h.b16 %v1462
    %v1985 = vunpack.c.l.b16 %v1463
    %v1986 = vunpack.c.h.b16 %v1463
    %v1987 = vunpack.c.l.b16 %v1464
    %v1988 = vunpack.c.h.b16 %v1464
    %v1989 = vunpack.c.l.b16 %v1465
    %v1990 = vunpack.c.h.b16 %v1465
    %v1991 = vunpack.c.l.b16 %v1466
    %v1992 = vunpack.c.h.b16 %v1466
    %v1993 = vunpack.c.l.b16 %v1467
    %v1994 = vunpack.c.h.b16 %v1467
    %v1995 = vunpack.c.l.b16 %v1468
    %v1996 = vunpack.c.h.b16 %v1468
    %v1997 = vunpack.c.l.b16 %v1469
    %v1998 = vunpack.c.h.b16 %v1469
    %v1999 = vunpack.c.l.b16 %v1470
    %v2000 = vunpack.c.h.b16 %v1470
    %v2001 = vunpack.c.l.b16 %v1471
    %v2002 = vunpack.c.h.b16 %v1471
    %v2003 = vunpack.c.l.b16 %v1472
    %v2004 = vunpack.c.h.b16 %v1472
    %v2005 = vunpack.c.l.b16 %v1473
    %v2006 = vunpack.c.h.b16 %v1473
    %v2007 = vunpack.c.l.b16 %v1474
    %v2008 = vunpack.c.h.b16 %v1474
    %v2009 = vunpack.c.l.b16 %v1475
    %v2010 = vunpack.c.h.b16 %v1475
    %v2011 = vunpack.c.l.b16 %v1476
    %v2012 = vunpack.c.h.b16 %v1476
    %v2013 = vunpack.c.l.b16 %v1477
    %v2014 = vunpack.c.h.b16 %v1477
    %v2015 = vunpack.c.l.b16 %v1478
    %v2016 = vunpack.c.h.b16 %v1478
    %v2017 = vunpack.c.l.b16 %v1479
    %v2018 = vunpack.c.h.b16 %v1479
    %v2019 = vunpack.c.l.b16 %v1480
    %v2020 = vunpack.c.h.b16 %v1480
    %v2021 = vunpack.c.l.b16 %v1481
    %v2022 = vunpack.c.h.b16 %v1481
    %v2023 = vunpack.c.l.b16 %v1482
    %v2024 = vunpack.c.h.b16 %v1482
    %v2025 = vunpack.c.l.b16 %v1483
    %v2026 = vunpack.c.h.b16 %v1483
    %v2027 = vunpack.c.l.b16 %v1484
    %v2028 = vunpack.c.h.b16 %v1484
    %v2029 = vunpack.c.l.b16 %v1485
    %v2030 = vunpack.c.h.b16 %v1485
    %v2031 = vunpack.c.l.b16 %v1486
    %v2032 = vunpack.c.h.b16 %v1486
    %v2033 = vunpack.c.l.b16 %v1487
    %v2034 = vunpack.c.h.b16 %v1487
    %v2035 = vunpack.c.l.b16 %v1488
    %v2036 = vunpack.c.h.b16 %v1488
    %v2037 = vunpack.c.l.b16 %v1489
    %v2038 = vunpack.c.h.b16 %v1489
    %v2039 = vunpack.c.l.b16 %v1490
    %v2040 = vunpack.c.h.b16 %v1490
    %v2041 = vunpack.c.l.b16 %v1491
    %v2042 = vunpack.c.h.b16 %v1491
    %v2043 = vunpack.c.l.b16 %v1492
    %v2044 = vunpack.c.h.b16 %v1492
    %v2045 = vunpack.c.l.b16 %v1493
    %v2046 = vunpack.c.h.b16 %v1493
    %v2047 = vunpack.c.l.b16 %v1494
    %v2048 = vunpack.c.h.b16 %v1494
    %v2049 = vunpack.c.l.b16 %v1495
    %v2050 = vunpack.c.h.b16 %v1495
    %v2051 = vunpack.c.l.b16 %v1496
    %v2052 = vunpack.c.h.b16 %v1496
    %v2053 = vpack.c.b16 %v1963, %v1961
    %v2054 = vpack.c.b16 %v1964, %v1962
    %v2055 = vpack.c.b16 %v1967, %v1965
    %v2056 = vpack.c.b16 %v1968, %v1966
    %v2057 = vpack.c.b16 %v1971, %v1969
    %v2058 = vpack.c.b16 %v1972, %v1970
    %v2059 = vpack.c.b16 %v1975, %v1973
    %v2060 = vpack.c.b16 %v1976, %v1974
    %v2061 = vpack.c.b16 %v1979, %v1977
    %v2062 = vpack.c.b16 %v1980, %v1978
    %v2063 = vpack.c.b16 %v1983, %v1981
    %v2064 = vpack.c.b16 %v1984, %v1982
    %v2065 = vpack.c.b16 %v1987, %v1985
    %v2066 = vpack.c.b16 %v1988, %v1986
    %v2067 = vpack.c.b16 %v1991, %v1989
    %v2068 = vpack.c.b16 %v1992, %v1990
    %v2069 = vpack.c.b16 %v1995, %v1993
    %v2070 = vpack.c.b16 %v1996, %v1994
    %v2071 = vpack.c.b16 %v1999, %v1997
    %v2072 = vpack.c.b16 %v2000, %v1998
    %v2073 = vpack.c.b16 %v2003, %v2001
    %v2074 = vpack.c.b16 %v2004, %v2002
    %v2075 = vpack.c.b16 %v2007, %v2005
    %v2076 = vpack.c.b16 %v2008, %v2006
    %v2077 = vpack.c.b16 %v2011, %v2009
    %v2078 = vpack.c.b16 %v2012, %v2010
    %v2079 = vpack.c.b16 %v2015, %v2013
    %v2080 = vpack.c.b16 %v2016, %v2014
    %v2081 = vpack.c.b16 %v2019, %v2017
    %v2082 = vpack.c.b16 %v2020, %v2018
    %v2083 = vpack.c.b16 %v2023, %v2021
    %v2084 = vpack.c.b16 %v2024, %v2022
    %v2085 = vpack.c.b16 %v2027, %v2025
    %v2086 = vpack.c.b16 %v2028, %v2026
    %v2087 = vpack.c.b16 %v2031, %v2029
    %v2088 = vpack.c.b16 %v2032, %v2030
    %v2089 = vpack.c.b16 %v2035, %v2033
    %v2090 = vpack.c.b16 %v2036, %v2034
    %v2091 = vpack.c.b16 %v2039, %v2037
    %v2092 = vpack.c.b16 %v2040, %v2038
    %v2093 = vpack.c.b16 %v2043, %v2041
    %v2094 = vpack.c.b16 %v2044, %v2042
    %v2095 = vpack.c.b16 %v2047, %v2045
    %v2096 = vpack.c.b16 %v2048, %v2046
    %v2097 = vpack.c.b16 %v2051, %v2049
    %v2098 = vpack.c.b16 %v2052, %v2050
    %v2146 = vsel %vm1096, %v1450, 0
    %2148 = vmatprep.subr.bf16.mxu0 %v2068
    %2149 = vmatpush1.bf16.msra.mxu0 %v2067
    %2150 = vmatprep.subr.bf16.mxu0 %v2066
    %2151 = vmatpush1.bf16.msra.mxu0 %v2065
    %2152 = vmatprep.subr.bf16.mxu0 %v2064
    %2153 = vmatpush1.bf16.msra.mxu0 %v2063
    %2154 = vmatprep.subr.bf16.mxu0 %v2062
    %2155 = vmatpush1.bf16.msra.mxu0 %v2061
    %2156 = vmatprep.subr.bf16.mxu0 %v2060
    %2157 = vmatpush1.bf16.msra.mxu0 %v2059
    %2158 = vmatprep.subr.bf16.mxu0 %v2058
    %2159 = vmatpush1.bf16.msra.mxu0 %v2057
    %2160 = vmatprep.subr.bf16.mxu0 %v2056
    %2161 = vmatpush1.bf16.msra.mxu0 %v2055
    %2162 = vmatprep.subr.bf16.mxu0 %v2054
    %2163 = vmatpush1.bf16.msra.mxu0 %v2053
    %2164 = vmatprep.subr.bf16.mxu0 %v2084
    %2165 = vmatpush2.bf16.msra.mxu0 %v2083
    %2166 = vmatprep.subr.bf16.mxu0 %v2082
    %2167 = vmatpush2.bf16.msra.mxu0 %v2081
    %2168 = vmatprep.subr.bf16.mxu0 %v2080
    %2169 = vmatpush2.bf16.msra.mxu0 %v2079
    %2170 = vmatprep.subr.bf16.mxu0 %v2078
    %2171 = vmatpush2.bf16.msra.mxu0 %v2077
    %2172 = vmatprep.subr.bf16.mxu0 %v2076
    %2173 = vmatpush2.bf16.msra.mxu0 %v2075
    %2174 = vmatprep.subr.bf16.mxu0 %v2074
    %2175 = vmatpush2.bf16.msra.mxu0 %v2073
    %2176 = vmatprep.subr.bf16.mxu0 %v2072
    %2177 = vmatpush2.bf16.msra.mxu0 %v2071
    %2178 = vmatprep.subr.bf16.mxu0 %v2070
    %2179 = vmatpush2.bf16.msra.mxu0 %v2069
    %2180 = vmatprep.mubr.bf16.mxu0 %v1449
    %2181 = vmatmul.mubr.bf16.gmra.mxu0 %v1448
    %v2182 = vpop.f32.mrf.mxu0
    %v2183 = vadd.f32 %v1907, %v2182
    %v2184 = vpop.f32.mrf.mxu0
    %v2185 = vadd.f32 %v1909, %v2184
    %v2186 = vpop.f32.mrf.mxu0
    %v2187 = vadd.f32 %v1911, %v2186
    %v2188 = vpop.f32.mrf.mxu0
    %v2189 = vadd.f32 %v1913, %v2188
    %2190 = vdwg.mxu0
    %2191 = vmatprep.subr.bf16.mxu0 0
    %2192 = vmatpush1.bf16.msra.mxu0 0
    %2193 = vmatprep.subr.bf16.mxu0 %v2098
    %2194 = vmatpush1.bf16.msra.mxu0 %v2097
    %2195 = vmatprep.subr.bf16.mxu0 %v2096
    %2196 = vmatpush1.bf16.msra.mxu0 %v2095
    %2197 = vmatprep.subr.bf16.mxu0 %v2094
    %2198 = vmatpush1.bf16.msra.mxu0 %v2093
    %2199 = vmatprep.subr.bf16.mxu0 %v2092
    %2200 = vmatpush1.bf16.msra.mxu0 %v2091
    %2201 = vmatprep.subr.bf16.mxu0 %v2090
    %2202 = vmatpush1.bf16.msra.mxu0 %v2089
    %2203 = vmatprep.subr.bf16.mxu0 %v2088
    %2204 = vmatpush1.bf16.msra.mxu0 %v2087
    %2205 = vmatprep.subr.bf16.mxu0 %v2086
    %2206 = vmatpush1.bf16.msra.mxu0 %v2085
    %2207 = vmatprep.subr.bf16.mxu0 0
    %2208 = vmatpush2.bf16.msra.mxu0 0
    %2209 = vmatprep.subr.bf16.mxu0 0
    %2210 = vmatpush2.bf16.msra.mxu0 0
    %2211 = vmatprep.subr.bf16.mxu0 0
    %2212 = vmatpush2.bf16.msra.mxu0 0
    %2213 = vmatprep.subr.bf16.mxu0 0
    %2214 = vmatpush2.bf16.msra.mxu0 0
    %2215 = vmatprep.subr.bf16.mxu0 0
    %2216 = vmatpush2.bf16.msra.mxu0 0
    %2217 = vmatprep.subr.bf16.mxu0 0
    %2218 = vmatpush2.bf16.msra.mxu0 0
    %2219 = vmatprep.subr.bf16.mxu0 0
    %2220 = vmatpush2.bf16.msra.mxu0 0
    %2221 = vmatprep.subr.bf16.mxu0 0
    %2222 = vmatpush2.bf16.msra.mxu0 0
    %2223 = vmatprep.mubr.bf16.mxu0 0
    %2224 = vmatmul.mubr.bf16.gmra.mxu0 %v2146
    %v2225 = vpop.f32.mrf.mxu0
    %v2226 = vadd.f32 %v2183, %v2225
    %v2227 = vpop.f32.mrf.mxu0
    %v2228 = vadd.f32 %v2185, %v2227
    %v2229 = vpop.f32.mrf.mxu0
    %v2230 = vadd.f32 %v2187, %v2229
    %v2231 = vpop.f32.mrf.mxu0
    %v2232 = vadd.f32 %v2189, %v2231
    %2233 = vdwg.mxu0
    %v2234 = vld [vmem:[#allocation3] sm:$0xfc]
    %v2235 = vld [vmem:[#allocation3 + $0x8] sm:$0xfc]
    %v2236 = vld [vmem:[#allocation3 + $0x10] sm:$0xfc]
    %v2237 = vld [vmem:[#allocation3 + $0x18] sm:$0x3]
    %v2238 = vld [vmem:[#allocation3 + $0x20] sm:$0x3]
    %v2239 = vld [vmem:[#allocation3 + $0x28] sm:$0x3]
    %v2240 = vld [vmem:[#allocation3 + $0x30] sm:$0xfc]
    %v2241 = vld [vmem:[#allocation3 + $0x38] sm:$0xfc]
    %v2242 = vld [vmem:[#allocation3 + $0x40] sm:$0xfc]
    %v2243 = vld [vmem:[#allocation3 + $0x48] sm:$0x3]
    %v2244 = vld [vmem:[#allocation3 + $0x50] sm:$0x3]
    %v2245 = vld [vmem:[#allocation3 + $0x58] sm:$0x3]
    %v2258 = vrot.slane %v2234, 2
    %v2259 = vrot.slane %v2237, 2
    %v2260 = vsel %vm102, %v2258, %v2259
    %v2261 = vrot.slane %v2235, 2
    %v2262 = vrot.slane %v2238, 2
    %v2263 = vsel %vm102, %v2261, %v2262
    %v2264 = vrot.slane %v2236, 2
    %v2265 = vrot.slane %v2239, 2
    %v2266 = vsel %vm102, %v2264, %v2265
    %v2267 = vrot.slane %v2240, 2
    %v2268 = vrot.slane %v2243, 2
    %v2269 = vsel %vm102, %v2267, %v2268
    %v2270 = vrot.slane %v2241, 2
    %v2271 = vrot.slane %v2244, 2
    %v2272 = vsel %vm102, %v2270, %v2271
    %v2273 = vrot.slane %v2242, 2
    %v2274 = vrot.slane %v2245, 2
    %v2275 = vsel %vm102, %v2273, %v2274
    %v2282 = vpack.c.bf16 %v2269, %v2260
    %v2283 = vpack.c.bf16 %v2272, %v2263
    %v2284 = vpack.c.bf16 %v2275, %v2266
    %s2285 = scalar_lea.vmem %s3, 736
    %v2286 = vld [vmem:[%s2285] sm:$0xff]
    %v2287 = vld [vmem:[%s2285 + $0x8] sm:$0xff]
    %v2288 = vld [vmem:[%s2285 + $0x10] sm:$0xff]
    %v2289 = vld [vmem:[%s2285 + $0x18] sm:$0xff]
    %v2290 = vld [vmem:[%s2285 + $0x20] sm:$0xff]
    %v2291 = vld [vmem:[%s2285 + $0x28] sm:$0xff]
    %v2292 = vld [vmem:[%s2285 + $0x30] sm:$0xff]
    %v2293 = vld [vmem:[%s2285 + $0x38] sm:$0xff]
    %v2294 = vld [vmem:[%s2285 + $0x40] sm:$0xff]
    %v2295 = vld [vmem:[%s2285 + $0x48] sm:$0xff]
    %v2296 = vld [vmem:[%s2285 + $0x50] sm:$0xff]
    %v2297 = vld [vmem:[%s2285 + $0x58] sm:$0xff]
    %v2298 = vld [vmem:[%s2285 + $0x60] sm:$0xff]
    %v2299 = vld [vmem:[%s2285 + $0x68] sm:$0xff]
    %v2300 = vld [vmem:[%s2285 + $0x70] sm:$0xff]
    %v2301 = vld [vmem:[%s2285 + $0x78] sm:$0xff]
    %v2302 = vld [vmem:[%s2285 + $0x80] sm:$0xff]
    %v2303 = vld [vmem:[%s2285 + $0x88] sm:$0xff]
    %v2304 = vld [vmem:[%s2285 + $0x90] sm:$0xff]
    %v2305 = vld [vmem:[%s2285 + $0x98] sm:$0xff]
    %v2306 = vld [vmem:[%s2285 + $0xa0] sm:$0xff]
    %v2307 = vld [vmem:[%s2285 + $0xa8] sm:$0xff]
    %v2308 = vld [vmem:[%s2285 + $0xb0] sm:$0xff]
    %v2309 = vld [vmem:[%s2285 + $0xb8] sm:$0xff]
    %v2310 = vld [vmem:[%s2285 + $0xc0] sm:$0xff]
    %v2311 = vld [vmem:[%s2285 + $0xc8] sm:$0xff]
    %v2312 = vld [vmem:[%s2285 + $0xd0] sm:$0xff]
    %v2313 = vld [vmem:[%s2285 + $0xd8] sm:$0xff]
    %v2314 = vld [vmem:[%s2285 + $0xe0] sm:$0xff]
    %v2315 = vld [vmem:[%s2285 + $0xe8] sm:$0xff]
    %v2316 = vld [vmem:[%s2285 + $0xf0] sm:$0xff]
    %v2317 = vld [vmem:[%s2285 + $0xf8] sm:$0xff]
    %v2318 = vld [vmem:[%s2285 + $0x100] sm:$0xff]
    %v2319 = vld [vmem:[%s2285 + $0x108] sm:$0xff]
    %v2320 = vld [vmem:[%s2285 + $0x110] sm:$0xff]
    %v2321 = vld [vmem:[%s2285 + $0x118] sm:$0xff]
    %v2322 = vld [vmem:[%s2285 + $0x120] sm:$0xff]
    %v2323 = vld [vmem:[%s2285 + $0x128] sm:$0xff]
    %v2324 = vld [vmem:[%s2285 + $0x130] sm:$0xff]
    %v2325 = vld [vmem:[%s2285 + $0x138] sm:$0xff]
    %v2326 = vld [vmem:[%s2285 + $0x140] sm:$0xff]
    %v2327 = vld [vmem:[%s2285 + $0x148] sm:$0xff]
    %v2328 = vld [vmem:[%s2285 + $0x150] sm:$0xff]
    %v2329 = vld [vmem:[%s2285 + $0x158] sm:$0xff]
    %v2330 = vld [vmem:[%s2285 + $0x160] sm:$0xff]
    %v2331 = vld [vmem:[%s2285 + $0x168] sm:$0xff]
    %v2378 = vunpack.c.l.b16 %v2286
    %v2379 = vunpack.c.h.b16 %v2286
    %v2380 = vunpack.c.l.b16 %v2287
    %v2381 = vunpack.c.h.b16 %v2287
    %v2382 = vunpack.c.l.b16 %v2288
    %v2383 = vunpack.c.h.b16 %v2288
    %v2384 = vunpack.c.l.b16 %v2289
    %v2385 = vunpack.c.h.b16 %v2289
    %v2386 = vunpack.c.l.b16 %v2290
    %v2387 = vunpack.c.h.b16 %v2290
    %v2388 = vunpack.c.l.b16 %v2291
    %v2389 = vunpack.c.h.b16 %v2291
    %v2390 = vunpack.c.l.b16 %v2292
    %v2391 = vunpack.c.h.b16 %v2292
    %v2392 = vunpack.c.l.b16 %v2293
    %v2393 = vunpack.c.h.b16 %v2293
    %v2394 = vunpack.c.l.b16 %v2294
    %v2395 = vunpack.c.h.b16 %v2294
    %v2396 = vunpack.c.l.b16 %v2295
    %v2397 = vunpack.c.h.b16 %v2295
    %v2398 = vunpack.c.l.b16 %v2296
    %v2399 = vunpack.c.h.b16 %v2296
    %v2400 = vunpack.c.l.b16 %v2297
    %v2401 = vunpack.c.h.b16 %v2297
    %v2402 = vunpack.c.l.b16 %v2298
    %v2403 = vunpack.c.h.b16 %v2298
    %v2404 = vunpack.c.l.b16 %v2299
    %v2405 = vunpack.c.h.b16 %v2299
    %v2406 = vunpack.c.l.b16 %v2300
    %v2407 = vunpack.c.h.b16 %v2300
    %v2408 = vunpack.c.l.b16 %v2301
    %v2409 = vunpack.c.h.b16 %v2301
    %v2410 = vunpack.c.l.b16 %v2302
    %v2411 = vunpack.c.h.b16 %v2302
    %v2412 = vunpack.c.l.b16 %v2303
    %v2413 = vunpack.c.h.b16 %v2303
    %v2414 = vunpack.c.l.b16 %v2304
    %v2415 = vunpack.c.h.b16 %v2304
    %v2416 = vunpack.c.l.b16 %v2305
    %v2417 = vunpack.c.h.b16 %v2305
    %v2418 = vunpack.c.l.b16 %v2306
    %v2419 = vunpack.c.h.b16 %v2306
    %v2420 = vunpack.c.l.b16 %v2307
    %v2421 = vunpack.c.h.b16 %v2307
    %v2422 = vunpack.c.l.b16 %v2308
    %v2423 = vunpack.c.h.b16 %v2308
    %v2424 = vunpack.c.l.b16 %v2309
    %v2425 = vunpack.c.h.b16 %v2309
    %v2426 = vunpack.c.l.b16 %v2310
    %v2427 = vunpack.c.h.b16 %v2310
    %v2428 = vunpack.c.l.b16 %v2311
    %v2429 = vunpack.c.h.b16 %v2311
    %v2430 = vunpack.c.l.b16 %v2312
    %v2431 = vunpack.c.h.b16 %v2312
    %v2432 = vunpack.c.l.b16 %v2313
    %v2433 = vunpack.c.h.b16 %v2313
    %v2434 = vunpack.c.l.b16 %v2314
    %v2435 = vunpack.c.h.b16 %v2314
    %v2436 = vunpack.c.l.b16 %v2315
    %v2437 = vunpack.c.h.b16 %v2315
    %v2438 = vunpack.c.l.b16 %v2316
    %v2439 = vunpack.c.h.b16 %v2316
    %v2440 = vunpack.c.l.b16 %v2317
    %v2441 = vunpack.c.h.b16 %v2317
    %v2442 = vunpack.c.l.b16 %v2318
    %v2443 = vunpack.c.h.b16 %v2318
    %v2444 = vunpack.c.l.b16 %v2319
    %v2445 = vunpack.c.h.b16 %v2319
    %v2446 = vunpack.c.l.b16 %v2320
    %v2447 = vunpack.c.h.b16 %v2320
    %v2448 = vunpack.c.l.b16 %v2321
    %v2449 = vunpack.c.h.b16 %v2321
    %v2450 = vunpack.c.l.b16 %v2322
    %v2451 = vunpack.c.h.b16 %v2322
    %v2452 = vunpack.c.l.b16 %v2323
    %v2453 = vunpack.c.h.b16 %v2323
    %v2454 = vunpack.c.l.b16 %v2324
    %v2455 = vunpack.c.h.b16 %v2324
    %v2456 = vunpack.c.l.b16 %v2325
    %v2457 = vunpack.c.h.b16 %v2325
    %v2458 = vunpack.c.l.b16 %v2326
    %v2459 = vunpack.c.h.b16 %v2326
    %v2460 = vunpack.c.l.b16 %v2327
    %v2461 = vunpack.c.h.b16 %v2327
    %v2462 = vunpack.c.l.b16 %v2328
    %v2463 = vunpack.c.h.b16 %v2328
    %v2464 = vunpack.c.l.b16 %v2329
    %v2465 = vunpack.c.h.b16 %v2329
    %v2466 = vunpack.c.l.b16 %v2330
    %v2467 = vunpack.c.h.b16 %v2330
    %v2468 = vunpack.c.l.b16 %v2331
    %v2469 = vunpack.c.h.b16 %v2331
    %v2470 = vpack.c.b16 %v2380, %v2378
    %v2471 = vpack.c.b16 %v2381, %v2379
    %v2472 = vpack.c.b16 %v2384, %v2382
    %v2473 = vpack.c.b16 %v2385, %v2383
    %v2474 = vpack.c.b16 %v2388, %v2386
    %v2475 = vpack.c.b16 %v2389, %v2387
    %v2476 = vpack.c.b16 %v2392, %v2390
    %v2477 = vpack.c.b16 %v2393, %v2391
    %v2478 = vpack.c.b16 %v2396, %v2394
    %v2479 = vpack.c.b16 %v2397, %v2395
    %v2480 = vpack.c.b16 %v2400, %v2398
    %v2481 = vpack.c.b16 %v2401, %v2399
    %v2482 = vpack.c.b16 %v2404, %v2402
    %v2483 = vpack.c.b16 %v2405, %v2403
    %v2484 = vpack.c.b16 %v2408, %v2406
    %v2485 = vpack.c.b16 %v2409, %v2407
    %v2486 = vpack.c.b16 %v2412, %v2410
    %v2487 = vpack.c.b16 %v2413, %v2411
    %v2488 = vpack.c.b16 %v2416, %v2414
    %v2489 = vpack.c.b16 %v2417, %v2415
    %v2490 = vpack.c.b16 %v2420, %v2418
    %v2491 = vpack.c.b16 %v2421, %v2419
    %v2492 = vpack.c.b16 %v2424, %v2422
    %v2493 = vpack.c.b16 %v2425, %v2423
    %v2494 = vpack.c.b16 %v2428, %v2426
    %v2495 = vpack.c.b16 %v2429, %v2427
    %v2496 = vpack.c.b16 %v2432, %v2430
    %v2497 = vpack.c.b16 %v2433, %v2431
    %v2498 = vpack.c.b16 %v2436, %v2434
    %v2499 = vpack.c.b16 %v2437, %v2435
    %v2500 = vpack.c.b16 %v2440, %v2438
    %v2501 = vpack.c.b16 %v2441, %v2439
    %v2502 = vpack.c.b16 %v2444, %v2442
    %v2503 = vpack.c.b16 %v2445, %v2443
    %v2504 = vpack.c.b16 %v2448, %v2446
    %v2505 = vpack.c.b16 %v2449, %v2447
    %v2506 = vpack.c.b16 %v2452, %v2450
    %v2507 = vpack.c.b16 %v2453, %v2451
    %v2508 = vpack.c.b16 %v2456, %v2454
    %v2509 = vpack.c.b16 %v2457, %v2455
    %v2510 = vpack.c.b16 %v2460, %v2458
    %v2511 = vpack.c.b16 %v2461, %v2459
    %v2512 = vpack.c.b16 %v2464, %v2462
    %v2513 = vpack.c.b16 %v2465, %v2463
    %v2514 = vpack.c.b16 %v2468, %v2466
    %v2515 = vpack.c.b16 %v2469, %v2467
    %v2563 = vsel %vm1096, %v2284, 0
    %2565 = vmatprep.subr.bf16.mxu0 %v2485
    %2566 = vmatpush1.bf16.msra.mxu0 %v2484
    %2567 = vmatprep.subr.bf16.mxu0 %v2483
    %2568 = vmatpush1.bf16.msra.mxu0 %v2482
    %2569 = vmatprep.subr.bf16.mxu0 %v2481
    %2570 = vmatpush1.bf16.msra.mxu0 %v2480
    %2571 = vmatprep.subr.bf16.mxu0 %v2479
    %2572 = vmatpush1.bf16.msra.mxu0 %v2478
    %2573 = vmatprep.subr.bf16.mxu0 %v2477
    %2574 = vmatpush1.bf16.msra.mxu0 %v2476
    %2575 = vmatprep.subr.bf16.mxu0 %v2475
    %2576 = vmatpush1.bf16.msra.mxu0 %v2474
    %2577 = vmatprep.subr.bf16.mxu0 %v2473
    %2578 = vmatpush1.bf16.msra.mxu0 %v2472
    %2579 = vmatprep.subr.bf16.mxu0 %v2471
    %2580 = vmatpush1.bf16.msra.mxu0 %v2470
    %2581 = vmatprep.subr.bf16.mxu0 %v2501
    %2582 = vmatpush2.bf16.msra.mxu0 %v2500
    %2583 = vmatprep.subr.bf16.mxu0 %v2499
    %2584 = vmatpush2.bf16.msra.mxu0 %v2498
    %2585 = vmatprep.subr.bf16.mxu0 %v2497
    %2586 = vmatpush2.bf16.msra.mxu0 %v2496
    %2587 = vmatprep.subr.bf16.mxu0 %v2495
    %2588 = vmatpush2.bf16.msra.mxu0 %v2494
    %2589 = vmatprep.subr.bf16.mxu0 %v2493
    %2590 = vmatpush2.bf16.msra.mxu0 %v2492
    %2591 = vmatprep.subr.bf16.mxu0 %v2491
    %2592 = vmatpush2.bf16.msra.mxu0 %v2490
    %2593 = vmatprep.subr.bf16.mxu0 %v2489
    %2594 = vmatpush2.bf16.msra.mxu0 %v2488
    %2595 = vmatprep.subr.bf16.mxu0 %v2487
    %2596 = vmatpush2.bf16.msra.mxu0 %v2486
    %2597 = vmatprep.mubr.bf16.mxu0 %v2283
    %2598 = vmatmul.mubr.bf16.gmra.mxu0 %v2282
    %v2599 = vpop.f32.mrf.mxu0
    %v2600 = vadd.f32 0.0, %v2599
    %v2601 = vpop.f32.mrf.mxu0
    %v2602 = vadd.f32 0.0, %v2601
    %v2603 = vpop.f32.mrf.mxu0
    %v2604 = vadd.f32 0.0, %v2603
    %v2605 = vpop.f32.mrf.mxu0
    %v2606 = vadd.f32 0.0, %v2605
    %2607 = vdwg.mxu0
    %2608 = vmatprep.subr.bf16.mxu0 0
    %2609 = vmatpush1.bf16.msra.mxu0 0
    %2610 = vmatprep.subr.bf16.mxu0 %v2515
    %2611 = vmatpush1.bf16.msra.mxu0 %v2514
    %2612 = vmatprep.subr.bf16.mxu0 %v2513
    %2613 = vmatpush1.bf16.msra.mxu0 %v2512
    %2614 = vmatprep.subr.bf16.mxu0 %v2511
    %2615 = vmatpush1.bf16.msra.mxu0 %v2510
    %2616 = vmatprep.subr.bf16.mxu0 %v2509
    %2617 = vmatpush1.bf16.msra.mxu0 %v2508
    %2618 = vmatprep.subr.bf16.mxu0 %v2507
    %2619 = vmatpush1.bf16.msra.mxu0 %v2506
    %2620 = vmatprep.subr.bf16.mxu0 %v2505
    %2621 = vmatpush1.bf16.msra.mxu0 %v2504
    %2622 = vmatprep.subr.bf16.mxu0 %v2503
    %2623 = vmatpush1.bf16.msra.mxu0 %v2502
    %2624 = vmatprep.subr.bf16.mxu0 0
    %2625 = vmatpush2.bf16.msra.mxu0 0
    %2626 = vmatprep.subr.bf16.mxu0 0
    %2627 = vmatpush2.bf16.msra.mxu0 0
    %2628 = vmatprep.subr.bf16.mxu0 0
    %2629 = vmatpush2.bf16.msra.mxu0 0
    %2630 = vmatprep.subr.bf16.mxu0 0
    %2631 = vmatpush2.bf16.msra.mxu0 0
    %2632 = vmatprep.subr.bf16.mxu0 0
    %2633 = vmatpush2.bf16.msra.mxu0 0
    %2634 = vmatprep.subr.bf16.mxu0 0
    %2635 = vmatpush2.bf16.msra.mxu0 0
    %2636 = vmatprep.subr.bf16.mxu0 0
    %2637 = vmatpush2.bf16.msra.mxu0 0
    %2638 = vmatprep.subr.bf16.mxu0 0
    %2639 = vmatpush2.bf16.msra.mxu0 0
    %2640 = vmatprep.mubr.bf16.mxu0 0
    %2641 = vmatmul.mubr.bf16.gmra.mxu0 %v2563
    %v2642 = vpop.f32.mrf.mxu0
    %v2643 = vadd.f32 %v2600, %v2642
    %v2644 = vpop.f32.mrf.mxu0
    %v2645 = vadd.f32 %v2602, %v2644
    %v2646 = vpop.f32.mrf.mxu0
    %v2647 = vadd.f32 %v2604, %v2646
    %v2648 = vpop.f32.mrf.mxu0
    %v2649 = vadd.f32 %v2606, %v2648
    %2650 = vdwg.mxu0
    %v2651 = vadd.f32 %v2226, %v2643
    %v2652 = vadd.f32 %v2228, %v2645
    %v2653 = vadd.f32 %v2230, %v2647
    %v2654 = vadd.f32 %v2232, %v2649
    %v2655 = vld [vmem:[#allocation3] sm:$0xf8]
    %v2656 = vld [vmem:[#allocation3 + $0x8] sm:$0xf8]
    %v2657 = vld [vmem:[#allocation3 + $0x10] sm:$0xf8]
    %v2658 = vld [vmem:[#allocation3 + $0x18] sm:$0x7]
    %v2659 = vld [vmem:[#allocation3 + $0x20] sm:$0x7]
    %v2660 = vld [vmem:[#allocation3 + $0x28] sm:$0x7]
    %v2661 = vld [vmem:[#allocation3 + $0x30] sm:$0xf8]
    %v2662 = vld [vmem:[#allocation3 + $0x38] sm:$0xf8]
    %v2663 = vld [vmem:[#allocation3 + $0x40] sm:$0xf8]
    %v2664 = vld [vmem:[#allocation3 + $0x48] sm:$0x7]
    %v2665 = vld [vmem:[#allocation3 + $0x50] sm:$0x7]
    %v2666 = vld [vmem:[#allocation3 + $0x58] sm:$0x7]
    %vm2679 = vcmask 1044480
    %v2680 = vrot.slane %v2655, 3
    %v2681 = vrot.slane %v2658, 3
    %v2682 = vsel %vm2679, %v2680, %v2681
    %v2683 = vrot.slane %v2656, 3
    %v2684 = vrot.slane %v2659, 3
    %v2685 = vsel %vm2679, %v2683, %v2684
    %v2686 = vrot.slane %v2657, 3
    %v2687 = vrot.slane %v2660, 3
    %v2688 = vsel %vm2679, %v2686, %v2687
    %v2689 = vrot.slane %v2661, 3
    %v2690 = vrot.slane %v2664, 3
    %v2691 = vsel %vm2679, %v2689, %v2690
    %v2692 = vrot.slane %v2662, 3
    %v2693 = vrot.slane %v2665, 3
    %v2694 = vsel %vm2679, %v2692, %v2693
    %v2695 = vrot.slane %v2663, 3
    %v2696 = vrot.slane %v2666, 3
    %v2697 = vsel %vm2679, %v2695, %v2696
    %v2704 = vpack.c.bf16 %v2691, %v2682
    %v2705 = vpack.c.bf16 %v2694, %v2685
    %v2706 = vpack.c.bf16 %v2697, %v2688
    %s2707 = scalar_lea.vmem %s3, 1104
    %v2708 = vld [vmem:[%s2707] sm:$0xff]
    %v2709 = vld [vmem:[%s2707 + $0x8] sm:$0xff]
    %v2710 = vld [vmem:[%s2707 + $0x10] sm:$0xff]
    %v2711 = vld [vmem:[%s2707 + $0x18] sm:$0xff]
    %v2712 = vld [vmem:[%s2707 + $0x20] sm:$0xff]
    %v2713 = vld [vmem:[%s2707 + $0x28] sm:$0xff]
    %v2714 = vld [vmem:[%s2707 + $0x30] sm:$0xff]
    %v2715 = vld [vmem:[%s2707 + $0x38] sm:$0xff]
    %v2716 = vld [vmem:[%s2707 + $0x40] sm:$0xff]
    %v2717 = vld [vmem:[%s2707 + $0x48] sm:$0xff]
    %v2718 = vld [vmem:[%s2707 + $0x50] sm:$0xff]
    %v2719 = vld [vmem:[%s2707 + $0x58] sm:$0xff]
    %v2720 = vld [vmem:[%s2707 + $0x60] sm:$0xff]
    %v2721 = vld [vmem:[%s2707 + $0x68] sm:$0xff]
    %v2722 = vld [vmem:[%s2707 + $0x70] sm:$0xff]
    %v2723 = vld [vmem:[%s2707 + $0x78] sm:$0xff]
    %v2724 = vld [vmem:[%s2707 + $0x80] sm:$0xff]
    %v2725 = vld [vmem:[%s2707 + $0x88] sm:$0xff]
    %v2726 = vld [vmem:[%s2707 + $0x90] sm:$0xff]
    %v2727 = vld [vmem:[%s2707 + $0x98] sm:$0xff]
    %v2728 = vld [vmem:[%s2707 + $0xa0] sm:$0xff]
    %v2729 = vld [vmem:[%s2707 + $0xa8] sm:$0xff]
    %v2730 = vld [vmem:[%s2707 + $0xb0] sm:$0xff]
    %v2731 = vld [vmem:[%s2707 + $0xb8] sm:$0xff]
    %v2732 = vld [vmem:[%s2707 + $0xc0] sm:$0xff]
    %v2733 = vld [vmem:[%s2707 + $0xc8] sm:$0xff]
    %v2734 = vld [vmem:[%s2707 + $0xd0] sm:$0xff]
    %v2735 = vld [vmem:[%s2707 + $0xd8] sm:$0xff]
    %v2736 = vld [vmem:[%s2707 + $0xe0] sm:$0xff]
    %v2737 = vld [vmem:[%s2707 + $0xe8] sm:$0xff]
    %v2738 = vld [vmem:[%s2707 + $0xf0] sm:$0xff]
    %v2739 = vld [vmem:[%s2707 + $0xf8] sm:$0xff]
    %v2740 = vld [vmem:[%s2707 + $0x100] sm:$0xff]
    %v2741 = vld [vmem:[%s2707 + $0x108] sm:$0xff]
    %v2742 = vld [vmem:[%s2707 + $0x110] sm:$0xff]
    %v2743 = vld [vmem:[%s2707 + $0x118] sm:$0xff]
    %v2744 = vld [vmem:[%s2707 + $0x120] sm:$0xff]
    %v2745 = vld [vmem:[%s2707 + $0x128] sm:$0xff]
    %v2746 = vld [vmem:[%s2707 + $0x130] sm:$0xff]
    %v2747 = vld [vmem:[%s2707 + $0x138] sm:$0xff]
    %v2748 = vld [vmem:[%s2707 + $0x140] sm:$0xff]
    %v2749 = vld [vmem:[%s2707 + $0x148] sm:$0xff]
    %v2750 = vld [vmem:[%s2707 + $0x150] sm:$0xff]
    %v2751 = vld [vmem:[%s2707 + $0x158] sm:$0xff]
    %v2752 = vld [vmem:[%s2707 + $0x160] sm:$0xff]
    %v2753 = vld [vmem:[%s2707 + $0x168] sm:$0xff]
    %v2800 = vunpack.c.l.b16 %v2708
    %v2801 = vunpack.c.h.b16 %v2708
    %v2802 = vunpack.c.l.b16 %v2709
    %v2803 = vunpack.c.h.b16 %v2709
    %v2804 = vunpack.c.l.b16 %v2710
    %v2805 = vunpack.c.h.b16 %v2710
    %v2806 = vunpack.c.l.b16 %v2711
    %v2807 = vunpack.c.h.b16 %v2711
    %v2808 = vunpack.c.l.b16 %v2712
    %v2809 = vunpack.c.h.b16 %v2712
    %v2810 = vunpack.c.l.b16 %v2713
    %v2811 = vunpack.c.h.b16 %v2713
    %v2812 = vunpack.c.l.b16 %v2714
    %v2813 = vunpack.c.h.b16 %v2714
    %v2814 = vunpack.c.l.b16 %v2715
    %v2815 = vunpack.c.h.b16 %v2715
    %v2816 = vunpack.c.l.b16 %v2716
    %v2817 = vunpack.c.h.b16 %v2716
    %v2818 = vunpack.c.l.b16 %v2717
    %v2819 = vunpack.c.h.b16 %v2717
    %v2820 = vunpack.c.l.b16 %v2718
    %v2821 = vunpack.c.h.b16 %v2718
    %v2822 = vunpack.c.l.b16 %v2719
    %v2823 = vunpack.c.h.b16 %v2719
    %v2824 = vunpack.c.l.b16 %v2720
    %v2825 = vunpack.c.h.b16 %v2720
    %v2826 = vunpack.c.l.b16 %v2721
    %v2827 = vunpack.c.h.b16 %v2721
    %v2828 = vunpack.c.l.b16 %v2722
    %v2829 = vunpack.c.h.b16 %v2722
    %v2830 = vunpack.c.l.b16 %v2723
    %v2831 = vunpack.c.h.b16 %v2723
    %v2832 = vunpack.c.l.b16 %v2724
    %v2833 = vunpack.c.h.b16 %v2724
    %v2834 = vunpack.c.l.b16 %v2725
    %v2835 = vunpack.c.h.b16 %v2725
    %v2836 = vunpack.c.l.b16 %v2726
    %v2837 = vunpack.c.h.b16 %v2726
    %v2838 = vunpack.c.l.b16 %v2727
    %v2839 = vunpack.c.h.b16 %v2727
    %v2840 = vunpack.c.l.b16 %v2728
    %v2841 = vunpack.c.h.b16 %v2728
    %v2842 = vunpack.c.l.b16 %v2729
    %v2843 = vunpack.c.h.b16 %v2729
    %v2844 = vunpack.c.l.b16 %v2730
    %v2845 = vunpack.c.h.b16 %v2730
    %v2846 = vunpack.c.l.b16 %v2731
    %v2847 = vunpack.c.h.b16 %v2731
    %v2848 = vunpack.c.l.b16 %v2732
    %v2849 = vunpack.c.h.b16 %v2732
    %v2850 = vunpack.c.l.b16 %v2733
    %v2851 = vunpack.c.h.b16 %v2733
    %v2852 = vunpack.c.l.b16 %v2734
    %v2853 = vunpack.c.h.b16 %v2734
    %v2854 = vunpack.c.l.b16 %v2735
    %v2855 = vunpack.c.h.b16 %v2735
    %v2856 = vunpack.c.l.b16 %v2736
    %v2857 = vunpack.c.h.b16 %v2736
    %v2858 = vunpack.c.l.b16 %v2737
    %v2859 = vunpack.c.h.b16 %v2737
    %v2860 = vunpack.c.l.b16 %v2738
    %v2861 = vunpack.c.h.b16 %v2738
    %v2862 = vunpack.c.l.b16 %v2739
    %v2863 = vunpack.c.h.b16 %v2739
    %v2864 = vunpack.c.l.b16 %v2740
    %v2865 = vunpack.c.h.b16 %v2740
    %v2866 = vunpack.c.l.b16 %v2741
    %v2867 = vunpack.c.h.b16 %v2741
    %v2868 = vunpack.c.l.b16 %v2742
    %v2869 = vunpack.c.h.b16 %v2742
    %v2870 = vunpack.c.l.b16 %v2743
    %v2871 = vunpack.c.h.b16 %v2743
    %v2872 = vunpack.c.l.b16 %v2744
    %v2873 = vunpack.c.h.b16 %v2744
    %v2874 = vunpack.c.l.b16 %v2745
    %v2875 = vunpack.c.h.b16 %v2745
    %v2876 = vunpack.c.l.b16 %v2746
    %v2877 = vunpack.c.h.b16 %v2746
    %v2878 = vunpack.c.l.b16 %v2747
    %v2879 = vunpack.c.h.b16 %v2747
    %v2880 = vunpack.c.l.b16 %v2748
    %v2881 = vunpack.c.h.b16 %v2748
    %v2882 = vunpack.c.l.b16 %v2749
    %v2883 = vunpack.c.h.b16 %v2749
    %v2884 = vunpack.c.l.b16 %v2750
    %v2885 = vunpack.c.h.b16 %v2750
    %v2886 = vunpack.c.l.b16 %v2751
    %v2887 = vunpack.c.h.b16 %v2751
    %v2888 = vunpack.c.l.b16 %v2752
    %v2889 = vunpack.c.h.b16 %v2752
    %v2890 = vunpack.c.l.b16 %v2753
    %v2891 = vunpack.c.h.b16 %v2753
    %v2892 = vpack.c.b16 %v2802, %v2800
    %v2893 = vpack.c.b16 %v2803, %v2801
    %v2894 = vpack.c.b16 %v2806, %v2804
    %v2895 = vpack.c.b16 %v2807, %v2805
    %v2896 = vpack.c.b16 %v2810, %v2808
    %v2897 = vpack.c.b16 %v2811, %v2809
    %v2898 = vpack.c.b16 %v2814, %v2812
    %v2899 = vpack.c.b16 %v2815, %v2813
    %v2900 = vpack.c.b16 %v2818, %v2816
    %v2901 = vpack.c.b16 %v2819, %v2817
    %v2902 = vpack.c.b16 %v2822, %v2820
    %v2903 = vpack.c.b16 %v2823, %v2821
    %v2904 = vpack.c.b16 %v2826, %v2824
    %v2905 = vpack.c.b16 %v2827, %v2825
    %v2906 = vpack.c.b16 %v2830, %v2828
    %v2907 = vpack.c.b16 %v2831, %v2829
    %v2908 = vpack.c.b16 %v2834, %v2832
    %v2909 = vpack.c.b16 %v2835, %v2833
    %v2910 = vpack.c.b16 %v2838, %v2836
    %v2911 = vpack.c.b16 %v2839, %v2837
    %v2912 = vpack.c.b16 %v2842, %v2840
    %v2913 = vpack.c.b16 %v2843, %v2841
    %v2914 = vpack.c.b16 %v2846, %v2844
    %v2915 = vpack.c.b16 %v2847, %v2845
    %v2916 = vpack.c.b16 %v2850, %v2848
    %v2917 = vpack.c.b16 %v2851, %v2849
    %v2918 = vpack.c.b16 %v2854, %v2852
    %v2919 = vpack.c.b16 %v2855, %v2853
    %v2920 = vpack.c.b16 %v2858, %v2856
    %v2921 = vpack.c.b16 %v2859, %v2857
    %v2922 = vpack.c.b16 %v2862, %v2860
    %v2923 = vpack.c.b16 %v2863, %v2861
    %v2924 = vpack.c.b16 %v2866, %v2864
    %v2925 = vpack.c.b16 %v2867, %v2865
    %v2926 = vpack.c.b16 %v2870, %v2868
    %v2927 = vpack.c.b16 %v2871, %v2869
    %v2928 = vpack.c.b16 %v2874, %v2872
    %v2929 = vpack.c.b16 %v2875, %v2873
    %v2930 = vpack.c.b16 %v2878, %v2876
    %v2931 = vpack.c.b16 %v2879, %v2877
    %v2932 = vpack.c.b16 %v2882, %v2880
    %v2933 = vpack.c.b16 %v2883, %v2881
    %v2934 = vpack.c.b16 %v2886, %v2884
    %v2935 = vpack.c.b16 %v2887, %v2885
    %v2936 = vpack.c.b16 %v2890, %v2888
    %v2937 = vpack.c.b16 %v2891, %v2889
    %v2985 = vsel %vm1096, %v2706, 0
    %2987 = vmatprep.subr.bf16.mxu0 %v2907
    %2988 = vmatpush1.bf16.msra.mxu0 %v2906
    %2989 = vmatprep.subr.bf16.mxu0 %v2905
    %2990 = vmatpush1.bf16.msra.mxu0 %v2904
    %2991 = vmatprep.subr.bf16.mxu0 %v2903
    %2992 = vmatpush1.bf16.msra.mxu0 %v2902
    %2993 = vmatprep.subr.bf16.mxu0 %v2901
    %2994 = vmatpush1.bf16.msra.mxu0 %v2900
    %2995 = vmatprep.subr.bf16.mxu0 %v2899
    %2996 = vmatpush1.bf16.msra.mxu0 %v2898
    %2997 = vmatprep.subr.bf16.mxu0 %v2897
    %2998 = vmatpush1.bf16.msra.mxu0 %v2896
    %2999 = vmatprep.subr.bf16.mxu0 %v2895
    %3000 = vmatpush1.bf16.msra.mxu0 %v2894
    %3001 = vmatprep.subr.bf16.mxu0 %v2893
    %3002 = vmatpush1.bf16.msra.mxu0 %v2892
    %3003 = vmatprep.subr.bf16.mxu0 %v2923
    %3004 = vmatpush2.bf16.msra.mxu0 %v2922
    %3005 = vmatprep.subr.bf16.mxu0 %v2921
    %3006 = vmatpush2.bf16.msra.mxu0 %v2920
    %3007 = vmatprep.subr.bf16.mxu0 %v2919
    %3008 = vmatpush2.bf16.msra.mxu0 %v2918
    %3009 = vmatprep.subr.bf16.mxu0 %v2917
    %3010 = vmatpush2.bf16.msra.mxu0 %v2916
    %3011 = vmatprep.subr.bf16.mxu0 %v2915
    %3012 = vmatpush2.bf16.msra.mxu0 %v2914
    %3013 = vmatprep.subr.bf16.mxu0 %v2913
    %3014 = vmatpush2.bf16.msra.mxu0 %v2912
    %3015 = vmatprep.subr.bf16.mxu0 %v2911
    %3016 = vmatpush2.bf16.msra.mxu0 %v2910
    %3017 = vmatprep.subr.bf16.mxu0 %v2909
    %3018 = vmatpush2.bf16.msra.mxu0 %v2908
    %3019 = vmatprep.mubr.bf16.mxu0 %v2705
    %3020 = vmatmul.mubr.bf16.gmra.mxu0 %v2704
    %v3021 = vpop.f32.mrf.mxu0
    %v3022 = vadd.f32 0.0, %v3021
    %v3023 = vpop.f32.mrf.mxu0
    %v3024 = vadd.f32 0.0, %v3023
    %v3025 = vpop.f32.mrf.mxu0
    %v3026 = vadd.f32 0.0, %v3025
    %v3027 = vpop.f32.mrf.mxu0
    %v3028 = vadd.f32 0.0, %v3027
    %3029 = vdwg.mxu0
    %3030 = vmatprep.subr.bf16.mxu0 0
    %3031 = vmatpush1.bf16.msra.mxu0 0
    %3032 = vmatprep.subr.bf16.mxu0 %v2937
    %3033 = vmatpush1.bf16.msra.mxu0 %v2936
    %3034 = vmatprep.subr.bf16.mxu0 %v2935
    %3035 = vmatpush1.bf16.msra.mxu0 %v2934
    %3036 = vmatprep.subr.bf16.mxu0 %v2933
    %3037 = vmatpush1.bf16.msra.mxu0 %v2932
    %3038 = vmatprep.subr.bf16.mxu0 %v2931
    %3039 = vmatpush1.bf16.msra.mxu0 %v2930
    %3040 = vmatprep.subr.bf16.mxu0 %v2929
    %3041 = vmatpush1.bf16.msra.mxu0 %v2928
    %3042 = vmatprep.subr.bf16.mxu0 %v2927
    %3043 = vmatpush1.bf16.msra.mxu0 %v2926
    %3044 = vmatprep.subr.bf16.mxu0 %v2925
    %3045 = vmatpush1.bf16.msra.mxu0 %v2924
    %3046 = vmatprep.subr.bf16.mxu0 0
    %3047 = vmatpush2.bf16.msra.mxu0 0
    %3048 = vmatprep.subr.bf16.mxu0 0
    %3049 = vmatpush2.bf16.msra.mxu0 0
    %3050 = vmatprep.subr.bf16.mxu0 0
    %3051 = vmatpush2.bf16.msra.mxu0 0
    %3052 = vmatprep.subr.bf16.mxu0 0
    %3053 = vmatpush2.bf16.msra.mxu0 0
    %3054 = vmatprep.subr.bf16.mxu0 0
    %3055 = vmatpush2.bf16.msra.mxu0 0
    %3056 = vmatprep.subr.bf16.mxu0 0
    %3057 = vmatpush2.bf16.msra.mxu0 0
    %3058 = vmatprep.subr.bf16.mxu0 0
    %3059 = vmatpush2.bf16.msra.mxu0 0
    %3060 = vmatprep.subr.bf16.mxu0 0
    %3061 = vmatpush2.bf16.msra.mxu0 0
    %3062 = vmatprep.mubr.bf16.mxu0 0
    %3063 = vmatmul.mubr.bf16.gmra.mxu0 %v2985
    %v3064 = vpop.f32.mrf.mxu0
    %v3065 = vadd.f32 %v3022, %v3064
    %v3066 = vpop.f32.mrf.mxu0
    %v3067 = vadd.f32 %v3024, %v3066
    %v3068 = vpop.f32.mrf.mxu0
    %v3069 = vadd.f32 %v3026, %v3068
    %v3070 = vpop.f32.mrf.mxu0
    %v3071 = vadd.f32 %v3028, %v3070
    %3072 = vdwg.mxu0
    %v3073 = vadd.f32 %v2651, %v3065
    %v3074 = vadd.f32 %v2652, %v3067
    %v3075 = vadd.f32 %v2653, %v3069
    %v3076 = vadd.f32 %v2654, %v3071
    %v3077 = vld [vmem:[#allocation3] sm:$0xf0]
    %v3078 = vld [vmem:[#allocation3 + $0x8] sm:$0xf0]
    %v3079 = vld [vmem:[#allocation3 + $0x10] sm:$0xf0]
    %v3080 = vld [vmem:[#allocation3 + $0x18] sm:$0xf]
    %v3081 = vld [vmem:[#allocation3 + $0x20] sm:$0xf]
    %v3082 = vld [vmem:[#allocation3 + $0x28] sm:$0xf]
    %v3083 = vld [vmem:[#allocation3 + $0x30] sm:$0xf0]
    %v3084 = vld [vmem:[#allocation3 + $0x38] sm:$0xf0]
    %v3085 = vld [vmem:[#allocation3 + $0x40] sm:$0xf0]
    %v3086 = vld [vmem:[#allocation3 + $0x48] sm:$0xf]
    %v3087 = vld [vmem:[#allocation3 + $0x50] sm:$0xf]
    %v3088 = vld [vmem:[#allocation3 + $0x58] sm:$0xf]
    %vm3101 = vcmask 1043456
    %v3102 = vrot.slane %v3077, 4
    %v3103 = vrot.slane %v3080, 4
    %v3104 = vsel %vm3101, %v3102, %v3103
    %v3105 = vrot.slane %v3078, 4
    %v3106 = vrot.slane %v3081, 4
    %v3107 = vsel %vm3101, %v3105, %v3106
    %v3108 = vrot.slane %v3079, 4
    %v3109 = vrot.slane %v3082, 4
    %v3110 = vsel %vm3101, %v3108, %v3109
    %v3111 = vrot.slane %v3083, 4
    %v3112 = vrot.slane %v3086, 4
    %v3113 = vsel %vm3101, %v3111, %v3112
    %v3114 = vrot.slane %v3084, 4
    %v3115 = vrot.slane %v3087, 4
    %v3116 = vsel %vm3101, %v3114, %v3115
    %v3117 = vrot.slane %v3085, 4
    %v3118 = vrot.slane %v3088, 4
    %v3119 = vsel %vm3101, %v3117, %v3118
    %v3126 = vpack.c.bf16 %v3113, %v3104
    %v3127 = vpack.c.bf16 %v3116, %v3107
    %v3128 = vpack.c.bf16 %v3119, %v3110
    %s3129 = scalar_lea.vmem %s3, 1472
    %v3130 = vld [vmem:[%s3129] sm:$0xff]
    %v3131 = vld [vmem:[%s3129 + $0x8] sm:$0xff]
    %v3132 = vld [vmem:[%s3129 + $0x10] sm:$0xff]
    %v3133 = vld [vmem:[%s3129 + $0x18] sm:$0xff]
    %v3134 = vld [vmem:[%s3129 + $0x20] sm:$0xff]
    %v3135 = vld [vmem:[%s3129 + $0x28] sm:$0xff]
    %v3136 = vld [vmem:[%s3129 + $0x30] sm:$0xff]
    %v3137 = vld [vmem:[%s3129 + $0x38] sm:$0xff]
    %v3138 = vld [vmem:[%s3129 + $0x40] sm:$0xff]
    %v3139 = vld [vmem:[%s3129 + $0x48] sm:$0xff]
    %v3140 = vld [vmem:[%s3129 + $0x50] sm:$0xff]
    %v3141 = vld [vmem:[%s3129 + $0x58] sm:$0xff]
    %v3142 = vld [vmem:[%s3129 + $0x60] sm:$0xff]
    %v3143 = vld [vmem:[%s3129 + $0x68] sm:$0xff]
    %v3144 = vld [vmem:[%s3129 + $0x70] sm:$0xff]
    %v3145 = vld [vmem:[%s3129 + $0x78] sm:$0xff]
    %v3146 = vld [vmem:[%s3129 + $0x80] sm:$0xff]
    %v3147 = vld [vmem:[%s3129 + $0x88] sm:$0xff]
    %v3148 = vld [vmem:[%s3129 + $0x90] sm:$0xff]
    %v3149 = vld [vmem:[%s3129 + $0x98] sm:$0xff]
    %v3150 = vld [vmem:[%s3129 + $0xa0] sm:$0xff]
    %v3151 = vld [vmem:[%s3129 + $0xa8] sm:$0xff]
    %v3152 = vld [vmem:[%s3129 + $0xb0] sm:$0xff]
    %v3153 = vld [vmem:[%s3129 + $0xb8] sm:$0xff]
    %v3154 = vld [vmem:[%s3129 + $0xc0] sm:$0xff]
    %v3155 = vld [vmem:[%s3129 + $0xc8] sm:$0xff]
    %v3156 = vld [vmem:[%s3129 + $0xd0] sm:$0xff]
    %v3157 = vld [vmem:[%s3129 + $0xd8] sm:$0xff]
    %v3158 = vld [vmem:[%s3129 + $0xe0] sm:$0xff]
    %v3159 = vld [vmem:[%s3129 + $0xe8] sm:$0xff]
    %v3160 = vld [vmem:[%s3129 + $0xf0] sm:$0xff]
    %v3161 = vld [vmem:[%s3129 + $0xf8] sm:$0xff]
    %v3162 = vld [vmem:[%s3129 + $0x100] sm:$0xff]
    %v3163 = vld [vmem:[%s3129 + $0x108] sm:$0xff]
    %v3164 = vld [vmem:[%s3129 + $0x110] sm:$0xff]
    %v3165 = vld [vmem:[%s3129 + $0x118] sm:$0xff]
    %v3166 = vld [vmem:[%s3129 + $0x120] sm:$0xff]
    %v3167 = vld [vmem:[%s3129 + $0x128] sm:$0xff]
    %v3168 = vld [vmem:[%s3129 + $0x130] sm:$0xff]
    %v3169 = vld [vmem:[%s3129 + $0x138] sm:$0xff]
    %v3170 = vld [vmem:[%s3129 + $0x140] sm:$0xff]
    %v3171 = vld [vmem:[%s3129 + $0x148] sm:$0xff]
    %v3172 = vld [vmem:[%s3129 + $0x150] sm:$0xff]
    %v3173 = vld [vmem:[%s3129 + $0x158] sm:$0xff]
    %v3174 = vld [vmem:[%s3129 + $0x160] sm:$0xff]
    %v3175 = vld [vmem:[%s3129 + $0x168] sm:$0xff]
    %v3222 = vunpack.c.l.b16 %v3130
    %v3223 = vunpack.c.h.b16 %v3130
    %v3224 = vunpack.c.l.b16 %v3131
    %v3225 = vunpack.c.h.b16 %v3131
    %v3226 = vunpack.c.l.b16 %v3132
    %v3227 = vunpack.c.h.b16 %v3132
    %v3228 = vunpack.c.l.b16 %v3133
    %v3229 = vunpack.c.h.b16 %v3133
    %v3230 = vunpack.c.l.b16 %v3134
    %v3231 = vunpack.c.h.b16 %v3134
    %v3232 = vunpack.c.l.b16 %v3135
    %v3233 = vunpack.c.h.b16 %v3135
    %v3234 = vunpack.c.l.b16 %v3136
    %v3235 = vunpack.c.h.b16 %v3136
    %v3236 = vunpack.c.l.b16 %v3137
    %v3237 = vunpack.c.h.b16 %v3137
    %v3238 = vunpack.c.l.b16 %v3138
    %v3239 = vunpack.c.h.b16 %v3138
    %v3240 = vunpack.c.l.b16 %v3139
    %v3241 = vunpack.c.h.b16 %v3139
    %v3242 = vunpack.c.l.b16 %v3140
    %v3243 = vunpack.c.h.b16 %v3140
    %v3244 = vunpack.c.l.b16 %v3141
    %v3245 = vunpack.c.h.b16 %v3141
    %v3246 = vunpack.c.l.b16 %v3142
    %v3247 = vunpack.c.h.b16 %v3142
    %v3248 = vunpack.c.l.b16 %v3143
    %v3249 = vunpack.c.h.b16 %v3143
    %v3250 = vunpack.c.l.b16 %v3144
    %v3251 = vunpack.c.h.b16 %v3144
    %v3252 = vunpack.c.l.b16 %v3145
    %v3253 = vunpack.c.h.b16 %v3145
    %v3254 = vunpack.c.l.b16 %v3146
    %v3255 = vunpack.c.h.b16 %v3146
    %v3256 = vunpack.c.l.b16 %v3147
    %v3257 = vunpack.c.h.b16 %v3147
    %v3258 = vunpack.c.l.b16 %v3148
    %v3259 = vunpack.c.h.b16 %v3148
    %v3260 = vunpack.c.l.b16 %v3149
    %v3261 = vunpack.c.h.b16 %v3149
    %v3262 = vunpack.c.l.b16 %v3150
    %v3263 = vunpack.c.h.b16 %v3150
    %v3264 = vunpack.c.l.b16 %v3151
    %v3265 = vunpack.c.h.b16 %v3151
    %v3266 = vunpack.c.l.b16 %v3152
    %v3267 = vunpack.c.h.b16 %v3152
    %v3268 = vunpack.c.l.b16 %v3153
    %v3269 = vunpack.c.h.b16 %v3153
    %v3270 = vunpack.c.l.b16 %v3154
    %v3271 = vunpack.c.h.b16 %v3154
    %v3272 = vunpack.c.l.b16 %v3155
    %v3273 = vunpack.c.h.b16 %v3155
    %v3274 = vunpack.c.l.b16 %v3156
    %v3275 = vunpack.c.h.b16 %v3156
    %v3276 = vunpack.c.l.b16 %v3157
    %v3277 = vunpack.c.h.b16 %v3157
    %v3278 = vunpack.c.l.b16 %v3158
    %v3279 = vunpack.c.h.b16 %v3158
    %v3280 = vunpack.c.l.b16 %v3159
    %v3281 = vunpack.c.h.b16 %v3159
    %v3282 = vunpack.c.l.b16 %v3160
    %v3283 = vunpack.c.h.b16 %v3160
    %v3284 = vunpack.c.l.b16 %v3161
    %v3285 = vunpack.c.h.b16 %v3161
    %v3286 = vunpack.c.l.b16 %v3162
    %v3287 = vunpack.c.h.b16 %v3162
    %v3288 = vunpack.c.l.b16 %v3163
    %v3289 = vunpack.c.h.b16 %v3163
    %v3290 = vunpack.c.l.b16 %v3164
    %v3291 = vunpack.c.h.b16 %v3164
    %v3292 = vunpack.c.l.b16 %v3165
    %v3293 = vunpack.c.h.b16 %v3165
    %v3294 = vunpack.c.l.b16 %v3166
    %v3295 = vunpack.c.h.b16 %v3166
    %v3296 = vunpack.c.l.b16 %v3167
    %v3297 = vunpack.c.h.b16 %v3167
    %v3298 = vunpack.c.l.b16 %v3168
    %v3299 = vunpack.c.h.b16 %v3168
    %v3300 = vunpack.c.l.b16 %v3169
    %v3301 = vunpack.c.h.b16 %v3169
    %v3302 = vunpack.c.l.b16 %v3170
    %v3303 = vunpack.c.h.b16 %v3170
    %v3304 = vunpack.c.l.b16 %v3171
    %v3305 = vunpack.c.h.b16 %v3171
    %v3306 = vunpack.c.l.b16 %v3172
    %v3307 = vunpack.c.h.b16 %v3172
    %v3308 = vunpack.c.l.b16 %v3173
    %v3309 = vunpack.c.h.b16 %v3173
    %v3310 = vunpack.c.l.b16 %v3174
    %v3311 = vunpack.c.h.b16 %v3174
    %v3312 = vunpack.c.l.b16 %v3175
    %v3313 = vunpack.c.h.b16 %v3175
    %v3314 = vpack.c.b16 %v3224, %v3222
    %v3315 = vpack.c.b16 %v3225, %v3223
    %v3316 = vpack.c.b16 %v3228, %v3226
    %v3317 = vpack.c.b16 %v3229, %v3227
    %v3318 = vpack.c.b16 %v3232, %v3230
    %v3319 = vpack.c.b16 %v3233, %v3231
    %v3320 = vpack.c.b16 %v3236, %v3234
    %v3321 = vpack.c.b16 %v3237, %v3235
    %v3322 = vpack.c.b16 %v3240, %v3238
    %v3323 = vpack.c.b16 %v3241, %v3239
    %v3324 = vpack.c.b16 %v3244, %v3242
    %v3325 = vpack.c.b16 %v3245, %v3243
    %v3326 = vpack.c.b16 %v3248, %v3246
    %v3327 = vpack.c.b16 %v3249, %v3247
    %v3328 = vpack.c.b16 %v3252, %v3250
    %v3329 = vpack.c.b16 %v3253, %v3251
    %v3330 = vpack.c.b16 %v3256, %v3254
    %v3331 = vpack.c.b16 %v3257, %v3255
    %v3332 = vpack.c.b16 %v3260, %v3258
    %v3333 = vpack.c.b16 %v3261, %v3259
    %v3334 = vpack.c.b16 %v3264, %v3262
    %v3335 = vpack.c.b16 %v3265, %v3263
    %v3336 = vpack.c.b16 %v3268, %v3266
    %v3337 = vpack.c.b16 %v3269, %v3267
    %v3338 = vpack.c.b16 %v3272, %v3270
    %v3339 = vpack.c.b16 %v3273, %v3271
    %v3340 = vpack.c.b16 %v3276, %v3274
    %v3341 = vpack.c.b16 %v3277, %v3275
    %v3342 = vpack.c.b16 %v3280, %v3278
    %v3343 = vpack.c.b16 %v3281, %v3279
    %v3344 = vpack.c.b16 %v3284, %v3282
    %v3345 = vpack.c.b16 %v3285, %v3283
    %v3346 = vpack.c.b16 %v3288, %v3286
    %v3347 = vpack.c.b16 %v3289, %v3287
    %v3348 = vpack.c.b16 %v3292, %v3290
    %v3349 = vpack.c.b16 %v3293, %v3291
    %v3350 = vpack.c.b16 %v3296, %v3294
    %v3351 = vpack.c.b16 %v3297, %v3295
    %v3352 = vpack.c.b16 %v3300, %v3298
    %v3353 = vpack.c.b16 %v3301, %v3299
    %v3354 = vpack.c.b16 %v3304, %v3302
    %v3355 = vpack.c.b16 %v3305, %v3303
    %v3356 = vpack.c.b16 %v3308, %v3306
    %v3357 = vpack.c.b16 %v3309, %v3307
    %v3358 = vpack.c.b16 %v3312, %v3310
    %v3359 = vpack.c.b16 %v3313, %v3311
    %v3407 = vsel %vm1096, %v3128, 0
    %3409 = vmatprep.subr.bf16.mxu0 %v3329
    %3410 = vmatpush1.bf16.msra.mxu0 %v3328
    %3411 = vmatprep.subr.bf16.mxu0 %v3327
    %3412 = vmatpush1.bf16.msra.mxu0 %v3326
    %3413 = vmatprep.subr.bf16.mxu0 %v3325
    %3414 = vmatpush1.bf16.msra.mxu0 %v3324
    %3415 = vmatprep.subr.bf16.mxu0 %v3323
    %3416 = vmatpush1.bf16.msra.mxu0 %v3322
    %3417 = vmatprep.subr.bf16.mxu0 %v3321
    %3418 = vmatpush1.bf16.msra.mxu0 %v3320
    %3419 = vmatprep.subr.bf16.mxu0 %v3319
    %3420 = vmatpush1.bf16.msra.mxu0 %v3318
    %3421 = vmatprep.subr.bf16.mxu0 %v3317
    %3422 = vmatpush1.bf16.msra.mxu0 %v3316
    %3423 = vmatprep.subr.bf16.mxu0 %v3315
    %3424 = vmatpush1.bf16.msra.mxu0 %v3314
    %3425 = vmatprep.subr.bf16.mxu0 %v3345
    %3426 = vmatpush2.bf16.msra.mxu0 %v3344
    %3427 = vmatprep.subr.bf16.mxu0 %v3343
    %3428 = vmatpush2.bf16.msra.mxu0 %v3342
    %3429 = vmatprep.subr.bf16.mxu0 %v3341
    %3430 = vmatpush2.bf16.msra.mxu0 %v3340
    %3431 = vmatprep.subr.bf16.mxu0 %v3339
    %3432 = vmatpush2.bf16.msra.mxu0 %v3338
    %3433 = vmatprep.subr.bf16.mxu0 %v3337
    %3434 = vmatpush2.bf16.msra.mxu0 %v3336
    %3435 = vmatprep.subr.bf16.mxu0 %v3335
    %3436 = vmatpush2.bf16.msra.mxu0 %v3334
    %3437 = vmatprep.subr.bf16.mxu0 %v3333
    %3438 = vmatpush2.bf16.msra.mxu0 %v3332
    %3439 = vmatprep.subr.bf16.mxu0 %v3331
    %3440 = vmatpush2.bf16.msra.mxu0 %v3330
    %3441 = vmatprep.mubr.bf16.mxu0 %v3127
    %3442 = vmatmul.mubr.bf16.gmra.mxu0 %v3126
    %v3443 = vpop.f32.mrf.mxu0
    %v3444 = vadd.f32 0.0, %v3443
    %v3445 = vpop.f32.mrf.mxu0
    %v3446 = vadd.f32 0.0, %v3445
    %v3447 = vpop.f32.mrf.mxu0
    %v3448 = vadd.f32 0.0, %v3447
    %v3449 = vpop.f32.mrf.mxu0
    %v3450 = vadd.f32 0.0, %v3449
    %3451 = vdwg.mxu0
    %3452 = vmatprep.subr.bf16.mxu0 0
    %3453 = vmatpush1.bf16.msra.mxu0 0
    %3454 = vmatprep.subr.bf16.mxu0 %v3359
    %3455 = vmatpush1.bf16.msra.mxu0 %v3358
    %3456 = vmatprep.subr.bf16.mxu0 %v3357
    %3457 = vmatpush1.bf16.msra.mxu0 %v3356
    %3458 = vmatprep.subr.bf16.mxu0 %v3355
    %3459 = vmatpush1.bf16.msra.mxu0 %v3354
    %3460 = vmatprep.subr.bf16.mxu0 %v3353
    %3461 = vmatpush1.bf16.msra.mxu0 %v3352
    %3462 = vmatprep.subr.bf16.mxu0 %v3351
    %3463 = vmatpush1.bf16.msra.mxu0 %v3350
    %3464 = vmatprep.subr.bf16.mxu0 %v3349
    %3465 = vmatpush1.bf16.msra.mxu0 %v3348
    %3466 = vmatprep.subr.bf16.mxu0 %v3347
    %3467 = vmatpush1.bf16.msra.mxu0 %v3346
    %3468 = vmatprep.subr.bf16.mxu0 0
    %3469 = vmatpush2.bf16.msra.mxu0 0
    %3470 = vmatprep.subr.bf16.mxu0 0
    %3471 = vmatpush2.bf16.msra.mxu0 0
    %3472 = vmatprep.subr.bf16.mxu0 0
    %3473 = vmatpush2.bf16.msra.mxu0 0
    %3474 = vmatprep.subr.bf16.mxu0 0
    %3475 = vmatpush2.bf16.msra.mxu0 0
    %3476 = vmatprep.subr.bf16.mxu0 0
    %3477 = vmatpush2.bf16.msra.mxu0 0
    %3478 = vmatprep.subr.bf16.mxu0 0
    %3479 = vmatpush2.bf16.msra.mxu0 0
    %3480 = vmatprep.subr.bf16.mxu0 0
    %3481 = vmatpush2.bf16.msra.mxu0 0
    %3482 = vmatprep.subr.bf16.mxu0 0
    %3483 = vmatpush2.bf16.msra.mxu0 0
    %3484 = vmatprep.mubr.bf16.mxu0 0
    %3485 = vmatmul.mubr.bf16.gmra.mxu0 %v3407
    %v3486 = vpop.f32.mrf.mxu0
    %v3487 = vadd.f32 %v3444, %v3486
    %v3488 = vpop.f32.mrf.mxu0
    %v3489 = vadd.f32 %v3446, %v3488
    %v3490 = vpop.f32.mrf.mxu0
    %v3491 = vadd.f32 %v3448, %v3490
    %v3492 = vpop.f32.mrf.mxu0
    %v3493 = vadd.f32 %v3450, %v3492
    %3494 = vdwg.mxu0
    %v3495 = vadd.f32 %v3073, %v3487
    %v3496 = vadd.f32 %v3074, %v3489
    %v3497 = vadd.f32 %v3075, %v3491
    %v3498 = vadd.f32 %v3076, %v3493
    %v3499 = vld [vmem:[%s4] sm:$0x3]
    %v3501 = vlaneseq
    %v3502 = vshrl.u32 %v3501, 7
    %v3503 = vsub.s32 0, %v3502
    %v3504 = vrot.slane %v3499, %v3503
    %v3505 = vlaneseq
    %v3506 = vshrl.u32 %v3505, 7
    %v3507 = vsub.s32 1, %v3506
    %v3508 = vrot.slane %v3499, %v3507
    %v3511 = vadd.f32 %v3495, %v3504
    %v3512 = vadd.f32 %v3496, %v3508
    %v3513 = vadd.f32 %v3497, %v3504
    %v3514 = vadd.f32 %v3498, %v3508
    %v3515 = vmax.f32 %v3511, 0.0
    %v3516 = vmax.f32 %v3512, 0.0
    %v3517 = vmax.f32 %v3513, 0.0
    %v3518 = vmax.f32 %v3514, 0.0
    %3519 = vst [vmem:[#allocation4] sm:$0xff] %v3515
    %3520 = vst [vmem:[#allocation4 + $0x8] sm:$0xff] %v3516
    %3521 = vst [vmem:[#allocation4 + $0x10] sm:$0xff] %v3517
    %3522 = vst [vmem:[#allocation4 + $0x18] sm:$0xff] %v3518
    %3523 = vst [vmem:[#allocation5] sm:$0xff] 0.0
    %3524 = vst [vmem:[#allocation5 + $0x8] sm:$0xff] 0.0
    %v3525 = vld [vmem:[#allocation4] ss:$8 sm:$0x3]
    %s3526 = scalar_lea.vmem [#allocation4], 16
    %v3527 = vld [vmem:[%s3526] ss:$8 sm:$0x3]
    %s3528 = scalar_lea.vmem [#allocation4], 1
    %v3529 = vld [vmem:[%s3528] ss:$8 sm:$0x3]
    %s3530 = scalar_lea.vmem [#allocation4], 17
    %v3531 = vld [vmem:[%s3530] ss:$8 sm:$0x3]
    %v3532 = vmax.f32 %v3525, %v3529
    %v3533 = vmax.f32 %v3527, %v3531
    %3536 = vrot.lane.b32.xlu0 %v3532, 96
    %v3537 = vpop.permute.xlu0 %3536
    %3538 = vrot.lane.b32.xlu0 %v3533, 96
    %v3539 = vpop.permute.xlu0 %3538
    %v3540 = vrot.slane %v3537, 1
    %v3541 = vrot.slane %v3539, 1
    %vm3542 = vcmask 785408
    %v3543 = vsel %vm3542, %v3537, %v3540
    %v3544 = vsel %vm3542, %v3539, %v3541
    %v3547 = vmax.f32 %v3532, %v3543
    %v3548 = vmax.f32 %v3533, %v3544
    %v3551 = vcombine.low %v3547, %v3548
    %v3553 = vunpack.c.l.s4 1935823168
    %v3554 = vunpack.c.0.s8 %v3553
    %v3555 = vlaneseq
    %v3556 = vshrl.u32 %v3555, 7
    %v3557 = vsub.s32 %v3554, %v3556
    %v3558 = vrot.slane %v3551, %v3557
    %vm3560 = vcmask 1041408
    %vm3561 = vcmask 781314
    %vm3562 = vmor %vm3561, %vm3560
    %3563 = vst.msk [vmem:[#allocation5] sm:$0xf] %vm3562, %v3558
    %s3564 = scalar_lea.vmem [#allocation4], 2
    %v3565 = vld [vmem:[%s3564] ss:$8 sm:$0x3]
    %s3566 = scalar_lea.vmem [#allocation4], 18
    %v3567 = vld [vmem:[%s3566] ss:$8 sm:$0x3]
    %s3568 = scalar_lea.vmem [#allocation4], 3
    %v3569 = vld [vmem:[%s3568] ss:$8 sm:$0x3]
    %s3570 = scalar_lea.vmem [#allocation4], 19
    %v3571 = vld [vmem:[%s3570] ss:$8 sm:$0x3]
    %v3572 = vmax.f32 %v3565, %v3569
    %v3573 = vmax.f32 %v3567, %v3571
    %3576 = vrot.lane.b32.xlu0 %v3572, 96
    %v3577 = vpop.permute.xlu0 %3576
    %3578 = vrot.lane.b32.xlu0 %v3573, 96
    %v3579 = vpop.permute.xlu0 %3578
    %v3580 = vrot.slane %v3577, 1
    %v3581 = vrot.slane %v3579, 1
    %v3582 = vsel %vm3542, %v3577, %v3580
    %v3583 = vsel %vm3542, %v3579, %v3581
    %v3586 = vmax.f32 %v3572, %v3582
    %v3587 = vmax.f32 %v3573, %v3583
    %v3590 = vcombine.low %v3586, %v3587
    %v3592 = vunpack.c.l.s4 1935823168
    %v3593 = vunpack.c.0.s8 %v3592
    %v3594 = vlaneseq
    %v3595 = vshrl.u32 %v3594, 7
    %v3596 = vsub.s32 %v3593, %v3595
    %v3597 = vrot.slane %v3590, %v3596
    %3599 = vst.msk [vmem:[#allocation5 + $0x4] sm:$0xf] %vm3562, %v3597
    %s3600 = scalar_lea.vmem [#allocation4], 4
    %v3601 = vld [vmem:[%s3600] ss:$8 sm:$0x3]
    %s3602 = scalar_lea.vmem [#allocation4], 20
    %v3603 = vld [vmem:[%s3602] ss:$8 sm:$0x3]
    %s3604 = scalar_lea.vmem [#allocation4], 5
    %v3605 = vld [vmem:[%s3604] ss:$8 sm:$0x3]
    %s3606 = scalar_lea.vmem [#allocation4], 21
    %v3607 = vld [vmem:[%s3606] ss:$8 sm:$0x3]
    %v3608 = vmax.f32 %v3601, %v3605
    %v3609 = vmax.f32 %v3603, %v3607
    %3612 = vrot.lane.b32.xlu0 %v3608, 96
    %v3613 = vpop.permute.xlu0 %3612
    %3614 = vrot.lane.b32.xlu0 %v3609, 96
    %v3615 = vpop.permute.xlu0 %3614
    %v3616 = vrot.slane %v3613, 1
    %v3617 = vrot.slane %v3615, 1
    %v3618 = vsel %vm3542, %v3613, %v3616
    %v3619 = vsel %vm3542, %v3615, %v3617
    %v3622 = vmax.f32 %v3608, %v3618
    %v3623 = vmax.f32 %v3609, %v3619
    %v3626 = vcombine.low %v3622, %v3623
    %v3628 = vunpack.c.l.s4 1935823168
    %v3629 = vunpack.c.0.s8 %v3628
    %v3630 = vlaneseq
    %v3631 = vshrl.u32 %v3630, 7
    %v3632 = vsub.s32 %v3629, %v3631
    %v3633 = vrot.slane %v3626, %v3632
    %3635 = vst.msk [vmem:[#allocation5 + $0x8] sm:$0xf] %vm3562, %v3633
    %s3636 = scalar_lea.vmem [#allocation4], 6
    %v3637 = vld [vmem:[%s3636] ss:$8 sm:$0x3]
    %s3638 = scalar_lea.vmem [#allocation4], 22
    %v3639 = vld [vmem:[%s3638] ss:$8 sm:$0x3]
    %s3640 = scalar_lea.vmem [#allocation4], 7
    %v3641 = vld [vmem:[%s3640] ss:$8 sm:$0x3]
    %s3642 = scalar_lea.vmem [#allocation4], 23
    %v3643 = vld [vmem:[%s3642] ss:$8 sm:$0x3]
    %v3644 = vmax.f32 %v3637, %v3641
    %v3645 = vmax.f32 %v3639, %v3643
    %3648 = vrot.lane.b32.xlu0 %v3644, 96
    %v3649 = vpop.permute.xlu0 %3648
    %3650 = vrot.lane.b32.xlu0 %v3645, 96
    %v3651 = vpop.permute.xlu0 %3650
    %v3652 = vrot.slane %v3649, 1
    %v3653 = vrot.slane %v3651, 1
    %v3654 = vsel %vm3542, %v3649, %v3652
    %v3655 = vsel %vm3542, %v3651, %v3653
    %v3658 = vmax.f32 %v3644, %v3654
    %v3659 = vmax.f32 %v3645, %v3655
    %v3662 = vcombine.low %v3658, %v3659
    %v3664 = vunpack.c.l.s4 1935823168
    %v3665 = vunpack.c.0.s8 %v3664
    %v3666 = vlaneseq
    %v3667 = vshrl.u32 %v3666, 7
    %v3668 = vsub.s32 %v3665, %v3667
    %v3669 = vrot.slane %v3662, %v3668
    %3671 = vst.msk [vmem:[#allocation5 + $0xc] sm:$0xf] %vm3562, %v3669
    %v3672 = vld [vmem:[#allocation5] sm:$0xff]
    %v3673 = vld [vmem:[#allocation5 + $0x8] sm:$0xff]
    %v3676 = vcombine.high %v3672, %v3672
    %v3678 = vunpack.c.l.s4 1983009808
    %v3679 = vunpack.c.0.s8 %v3678
    %v3680 = vlaneseq
    %v3681 = vshrl.u32 %v3680, 7
    %v3682 = vsub.s32 %v3679, %v3681
    %v3683 = vrot.slane %v3672, %v3682
    %v3685 = vunpack.c.l.s4 1983009808
    %v3686 = vunpack.c.0.s8 %v3685
    %v3687 = vlaneseq
    %v3688 = vshrl.u32 %v3687, 7
    %v3689 = vsub.s32 %v3686, %v3688
    %v3690 = vrot.slane %v3676, %v3689
    %v3691 = vcombine.high %v3683, %v3683
    %v3692 = vcombine.high %v3690, %v3690
    %v3693 = vcombine.high %v3673, %v3673
    %v3695 = vunpack.c.l.s4 1983009808
    %v3696 = vunpack.c.0.s8 %v3695
    %v3697 = vlaneseq
    %v3698 = vshrl.u32 %v3697, 7
    %v3699 = vsub.s32 %v3696, %v3698
    %v3700 = vrot.slane %v3673, %v3699
    %v3702 = vunpack.c.l.s4 1983009808
    %v3703 = vunpack.c.0.s8 %v3702
    %v3704 = vlaneseq
    %v3705 = vshrl.u32 %v3704, 7
    %v3706 = vsub.s32 %v3703, %v3705
    %v3707 = vrot.slane %v3693, %v3706
    %v3708 = vcombine.high %v3700, %v3700
    %v3709 = vcombine.high %v3707, %v3707
    %v3718 = vpack.c.bf16 %v3683, %v3683
    %v3719 = vpack.c.bf16 %v3691, %v3691
    %v3720 = vpack.c.bf16 %v3690, %v3690
    %v3721 = vpack.c.bf16 %v3692, %v3692
    %v3722 = vpack.c.bf16 %v3700, %v3700
    %v3723 = vpack.c.bf16 %v3708, %v3708
    %v3724 = vpack.c.bf16 %v3707, %v3707
    %v3725 = vpack.c.bf16 %v3709, %v3709
    %v3726 = vld [vmem:[%s5] sm:$0xf]
    %v3727 = vld [vmem:[%s5 + $0x4] sm:$0xf]
    %v3728 = vld [vmem:[%s5 + $0x8] sm:$0xf]
    %v3729 = vld [vmem:[%s5 + $0xc] sm:$0xf]
    %v3730 = vld [vmem:[%s5 + $0x10] sm:$0xf]
    %v3731 = vld [vmem:[%s5 + $0x14] sm:$0xf]
    %v3732 = vld [vmem:[%s5 + $0x18] sm:$0xf]
    %v3733 = vld [vmem:[%s5 + $0x1c] sm:$0xf]
    %v3734 = vld [vmem:[%s5 + $0x20] sm:$0xf]
    %v3735 = vld [vmem:[%s5 + $0x24] sm:$0xf]
    %v3736 = vld [vmem:[%s5 + $0x28] sm:$0xf]
    %v3737 = vld [vmem:[%s5 + $0x2c] sm:$0xf]
    %v3738 = vld [vmem:[%s5 + $0x30] sm:$0xf]
    %v3739 = vld [vmem:[%s5 + $0x34] sm:$0xf]
    %v3740 = vld [vmem:[%s5 + $0x38] sm:$0xf]
    %v3741 = vld [vmem:[%s5 + $0x3c] sm:$0xf]
    %v3742 = vld [vmem:[%s5 + $0x40] sm:$0xf]
    %v3743 = vld [vmem:[%s5 + $0x44] sm:$0xf]
    %v3744 = vld [vmem:[%s5 + $0x48] sm:$0xf]
    %v3745 = vld [vmem:[%s5 + $0x4c] sm:$0xf]
    %v3746 = vld [vmem:[%s5 + $0x50] sm:$0xf]
    %v3747 = vld [vmem:[%s5 + $0x54] sm:$0xf]
    %v3748 = vld [vmem:[%s5 + $0x58] sm:$0xf]
    %v3749 = vld [vmem:[%s5 + $0x5c] sm:$0xf]
    %v3750 = vld [vmem:[%s5 + $0x60] sm:$0xf]
    %v3751 = vld [vmem:[%s5 + $0x64] sm:$0xf]
    %v3752 = vld [vmem:[%s5 + $0x68] sm:$0xf]
    %v3753 = vld [vmem:[%s5 + $0x6c] sm:$0xf]
    %v3754 = vld [vmem:[%s5 + $0x70] sm:$0xf]
    %v3755 = vld [vmem:[%s5 + $0x74] sm:$0xf]
    %v3756 = vld [vmem:[%s5 + $0x78] sm:$0xf]
    %v3757 = vld [vmem:[%s5 + $0x7c] sm:$0xf]
    %v3758 = vld [vmem:[%s5 + $0x80] sm:$0xf]
    %v3759 = vld [vmem:[%s5 + $0x84] sm:$0xf]
    %v3760 = vld [vmem:[%s5 + $0x88] sm:$0xf]
    %v3761 = vld [vmem:[%s5 + $0x8c] sm:$0xf]
    %v3762 = vld [vmem:[%s5 + $0x90] sm:$0xf]
    %v3763 = vld [vmem:[%s5 + $0x94] sm:$0xf]
    %v3764 = vld [vmem:[%s5 + $0x98] sm:$0xf]
    %v3765 = vld [vmem:[%s5 + $0x9c] sm:$0xf]
    %v3766 = vld [vmem:[%s5 + $0xa0] sm:$0xf]
    %v3767 = vld [vmem:[%s5 + $0xa4] sm:$0xf]
    %v3768 = vld [vmem:[%s5 + $0xa8] sm:$0xf]
    %v3769 = vld [vmem:[%s5 + $0xac] sm:$0xf]
    %v3770 = vld [vmem:[%s5 + $0xb0] sm:$0xf]
    %v3771 = vld [vmem:[%s5 + $0xb4] sm:$0xf]
    %v3772 = vld [vmem:[%s5 + $0xb8] sm:$0xf]
    %v3773 = vld [vmem:[%s5 + $0xbc] sm:$0xf]
    %v3774 = vld [vmem:[%s5 + $0xc0] sm:$0xf]
    %v3775 = vld [vmem:[%s5 + $0xc4] sm:$0xf]
    %v3776 = vld [vmem:[%s5 + $0xc8] sm:$0xf]
    %v3777 = vld [vmem:[%s5 + $0xcc] sm:$0xf]
    %v3778 = vld [vmem:[%s5 + $0xd0] sm:$0xf]
    %v3779 = vld [vmem:[%s5 + $0xd4] sm:$0xf]
    %v3780 = vld [vmem:[%s5 + $0xd8] sm:$0xf]
    %v3781 = vld [vmem:[%s5 + $0xdc] sm:$0xf]
    %v3782 = vld [vmem:[%s5 + $0xe0] sm:$0xf]
    %v3783 = vld [vmem:[%s5 + $0xe4] sm:$0xf]
    %v3784 = vld [vmem:[%s5 + $0xe8] sm:$0xf]
    %v3785 = vld [vmem:[%s5 + $0xec] sm:$0xf]
    %v3786 = vld [vmem:[%s5 + $0xf0] sm:$0xf]
    %v3787 = vld [vmem:[%s5 + $0xf4] sm:$0xf]
    %v3788 = vld [vmem:[%s5 + $0xf8] sm:$0xf]
    %v3789 = vld [vmem:[%s5 + $0xfc] sm:$0xf]
    %v3790 = vld [vmem:[%s5 + $0x100] sm:$0xf]
    %v3791 = vld [vmem:[%s5 + $0x104] sm:$0xf]
    %v3792 = vld [vmem:[%s5 + $0x108] sm:$0xf]
    %v3793 = vld [vmem:[%s5 + $0x10c] sm:$0xf]
    %v3794 = vld [vmem:[%s5 + $0x110] sm:$0xf]
    %v3795 = vld [vmem:[%s5 + $0x114] sm:$0xf]
    %v3796 = vld [vmem:[%s5 + $0x118] sm:$0xf]
    %v3797 = vld [vmem:[%s5 + $0x11c] sm:$0xf]
    %v3798 = vld [vmem:[%s5 + $0x120] sm:$0xf]
    %v3799 = vld [vmem:[%s5 + $0x124] sm:$0xf]
    %v3800 = vld [vmem:[%s5 + $0x128] sm:$0xf]
    %v3801 = vld [vmem:[%s5 + $0x12c] sm:$0xf]
    %v3802 = vld [vmem:[%s5 + $0x130] sm:$0xf]
    %v3803 = vld [vmem:[%s5 + $0x134] sm:$0xf]
    %v3804 = vld [vmem:[%s5 + $0x138] sm:$0xf]
    %v3805 = vld [vmem:[%s5 + $0x13c] sm:$0xf]
    %v3806 = vld [vmem:[%s5 + $0x140] sm:$0xf]
    %v3807 = vld [vmem:[%s5 + $0x144] sm:$0xf]
    %v3808 = vld [vmem:[%s5 + $0x148] sm:$0xf]
    %v3809 = vld [vmem:[%s5 + $0x14c] sm:$0xf]
    %v3810 = vld [vmem:[%s5 + $0x150] sm:$0xf]
    %v3811 = vld [vmem:[%s5 + $0x154] sm:$0xf]
    %v3812 = vld [vmem:[%s5 + $0x158] sm:$0xf]
    %v3813 = vld [vmem:[%s5 + $0x15c] sm:$0xf]
    %v3814 = vld [vmem:[%s5 + $0x160] sm:$0xf]
    %v3815 = vld [vmem:[%s5 + $0x164] sm:$0xf]
    %v3816 = vld [vmem:[%s5 + $0x168] sm:$0xf]
    %v3817 = vld [vmem:[%s5 + $0x16c] sm:$0xf]
    %v3818 = vld [vmem:[%s5 + $0x170] sm:$0xf]
    %v3819 = vld [vmem:[%s5 + $0x174] sm:$0xf]
    %v3820 = vld [vmem:[%s5 + $0x178] sm:$0xf]
    %v3821 = vld [vmem:[%s5 + $0x17c] sm:$0xf]
    %v3822 = vld [vmem:[%s5 + $0x180] sm:$0xf]
    %v3823 = vld [vmem:[%s5 + $0x184] sm:$0xf]
    %v3824 = vld [vmem:[%s5 + $0x188] sm:$0xf]
    %v3825 = vld [vmem:[%s5 + $0x18c] sm:$0xf]
    %v3826 = vld [vmem:[%s5 + $0x190] sm:$0xf]
    %v3827 = vld [vmem:[%s5 + $0x194] sm:$0xf]
    %v3828 = vld [vmem:[%s5 + $0x198] sm:$0xf]
    %v3829 = vld [vmem:[%s5 + $0x19c] sm:$0xf]
    %v3830 = vld [vmem:[%s5 + $0x1a0] sm:$0xf]
    %v3831 = vld [vmem:[%s5 + $0x1a4] sm:$0xf]
    %v3832 = vld [vmem:[%s5 + $0x1a8] sm:$0xf]
    %v3833 = vld [vmem:[%s5 + $0x1ac] sm:$0xf]
    %v3834 = vld [vmem:[%s5 + $0x1b0] sm:$0xf]
    %v3835 = vld [vmem:[%s5 + $0x1b4] sm:$0xf]
    %v3836 = vld [vmem:[%s5 + $0x1b8] sm:$0xf]
    %v3837 = vld [vmem:[%s5 + $0x1bc] sm:$0xf]
    %v3838 = vld [vmem:[%s5 + $0x1c0] sm:$0xf]
    %v3839 = vld [vmem:[%s5 + $0x1c4] sm:$0xf]
    %v3840 = vld [vmem:[%s5 + $0x1c8] sm:$0xf]
    %v3841 = vld [vmem:[%s5 + $0x1cc] sm:$0xf]
    %v3842 = vld [vmem:[%s5 + $0x1d0] sm:$0xf]
    %v3843 = vld [vmem:[%s5 + $0x1d4] sm:$0xf]
    %v3844 = vld [vmem:[%s5 + $0x1d8] sm:$0xf]
    %v3845 = vld [vmem:[%s5 + $0x1dc] sm:$0xf]
    %v3846 = vld [vmem:[%s5 + $0x1e0] sm:$0xf]
    %v3847 = vld [vmem:[%s5 + $0x1e4] sm:$0xf]
    %v3848 = vld [vmem:[%s5 + $0x1e8] sm:$0xf]
    %v3849 = vld [vmem:[%s5 + $0x1ec] sm:$0xf]
    %v3850 = vld [vmem:[%s5 + $0x1f0] sm:$0xf]
    %v3851 = vld [vmem:[%s5 + $0x1f4] sm:$0xf]
    %v3852 = vld [vmem:[%s5 + $0x1f8] sm:$0xf]
    %v3853 = vld [vmem:[%s5 + $0x1fc] sm:$0xf]
    %v3854 = vld [vmem:[%s6] sm:$0x1]
    %v3856 = vlaneseq
    %v3857 = vshrl.u32 %v3856, 7
    %v3858 = vsub.s32 0, %v3857
    %v3859 = vrot.slane %v3854, %v3858
    %v3989 = vunpack.c.l.b16 %v3726
    %v3990 = vunpack.c.l.b16 %v3727
    %v3991 = vunpack.c.l.b16 %v3728
    %v3992 = vunpack.c.l.b16 %v3729
    %v3993 = vunpack.c.l.b16 %v3730
    %v3994 = vunpack.c.l.b16 %v3731
    %v3995 = vunpack.c.l.b16 %v3732
    %v3996 = vunpack.c.l.b16 %v3733
    %v3997 = vunpack.c.l.b16 %v3734
    %v3998 = vunpack.c.l.b16 %v3735
    %v3999 = vunpack.c.l.b16 %v3736
    %v4000 = vunpack.c.l.b16 %v3737
    %v4001 = vunpack.c.l.b16 %v3738
    %v4002 = vunpack.c.l.b16 %v3739
    %v4003 = vunpack.c.l.b16 %v3740
    %v4004 = vunpack.c.l.b16 %v3741
    %v4005 = vunpack.c.l.b16 %v3742
    %v4006 = vunpack.c.l.b16 %v3743
    %v4007 = vunpack.c.l.b16 %v3744
    %v4008 = vunpack.c.l.b16 %v3745
    %v4009 = vunpack.c.l.b16 %v3746
    %v4010 = vunpack.c.l.b16 %v3747
    %v4011 = vunpack.c.l.b16 %v3748
    %v4012 = vunpack.c.l.b16 %v3749
    %v4013 = vunpack.c.l.b16 %v3750
    %v4014 = vunpack.c.l.b16 %v3751
    %v4015 = vunpack.c.l.b16 %v3752
    %v4016 = vunpack.c.l.b16 %v3753
    %v4017 = vunpack.c.l.b16 %v3754
    %v4018 = vunpack.c.l.b16 %v3755
    %v4019 = vunpack.c.l.b16 %v3756
    %v4020 = vunpack.c.l.b16 %v3757
    %v4021 = vunpack.c.l.b16 %v3758
    %v4022 = vunpack.c.l.b16 %v3759
    %v4023 = vunpack.c.l.b16 %v3760
    %v4024 = vunpack.c.l.b16 %v3761
    %v4025 = vunpack.c.l.b16 %v3762
    %v4026 = vunpack.c.l.b16 %v3763
    %v4027 = vunpack.c.l.b16 %v3764
    %v4028 = vunpack.c.l.b16 %v3765
    %v4029 = vunpack.c.l.b16 %v3766
    %v4030 = vunpack.c.l.b16 %v3767
    %v4031 = vunpack.c.l.b16 %v3768
    %v4032 = vunpack.c.l.b16 %v3769
    %v4033 = vunpack.c.l.b16 %v3770
    %v4034 = vunpack.c.l.b16 %v3771
    %v4035 = vunpack.c.l.b16 %v3772
    %v4036 = vunpack.c.l.b16 %v3773
    %v4037 = vunpack.c.l.b16 %v3774
    %v4038 = vunpack.c.l.b16 %v3775
    %v4039 = vunpack.c.l.b16 %v3776
    %v4040 = vunpack.c.l.b16 %v3777
    %v4041 = vunpack.c.l.b16 %v3778
    %v4042 = vunpack.c.l.b16 %v3779
    %v4043 = vunpack.c.l.b16 %v3780
    %v4044 = vunpack.c.l.b16 %v3781
    %v4045 = vunpack.c.l.b16 %v3782
    %v4046 = vunpack.c.l.b16 %v3783
    %v4047 = vunpack.c.l.b16 %v3784
    %v4048 = vunpack.c.l.b16 %v3785
    %v4049 = vunpack.c.l.b16 %v3786
    %v4050 = vunpack.c.l.b16 %v3787
    %v4051 = vunpack.c.l.b16 %v3788
    %v4052 = vunpack.c.l.b16 %v3789
    %v4053 = vunpack.c.l.b16 %v3790
    %v4054 = vunpack.c.l.b16 %v3791
    %v4055 = vunpack.c.l.b16 %v3792
    %v4056 = vunpack.c.l.b16 %v3793
    %v4057 = vunpack.c.l.b16 %v3794
    %v4058 = vunpack.c.l.b16 %v3795
    %v4059 = vunpack.c.l.b16 %v3796
    %v4060 = vunpack.c.l.b16 %v3797
    %v4061 = vunpack.c.l.b16 %v3798
    %v4062 = vunpack.c.l.b16 %v3799
    %v4063 = vunpack.c.l.b16 %v3800
    %v4064 = vunpack.c.l.b16 %v3801
    %v4065 = vunpack.c.l.b16 %v3802
    %v4066 = vunpack.c.l.b16 %v3803
    %v4067 = vunpack.c.l.b16 %v3804
    %v4068 = vunpack.c.l.b16 %v3805
    %v4069 = vunpack.c.l.b16 %v3806
    %v4070 = vunpack.c.l.b16 %v3807
    %v4071 = vunpack.c.l.b16 %v3808
    %v4072 = vunpack.c.l.b16 %v3809
    %v4073 = vunpack.c.l.b16 %v3810
    %v4074 = vunpack.c.l.b16 %v3811
    %v4075 = vunpack.c.l.b16 %v3812
    %v4076 = vunpack.c.l.b16 %v3813
    %v4077 = vunpack.c.l.b16 %v3814
    %v4078 = vunpack.c.l.b16 %v3815
    %v4079 = vunpack.c.l.b16 %v3816
    %v4080 = vunpack.c.l.b16 %v3817
    %v4081 = vunpack.c.l.b16 %v3818
    %v4082 = vunpack.c.l.b16 %v3819
    %v4083 = vunpack.c.l.b16 %v3820
    %v4084 = vunpack.c.l.b16 %v3821
    %v4085 = vunpack.c.l.b16 %v3822
    %v4086 = vunpack.c.l.b16 %v3823
    %v4087 = vunpack.c.l.b16 %v3824
    %v4088 = vunpack.c.l.b16 %v3825
    %v4089 = vunpack.c.l.b16 %v3826
    %v4090 = vunpack.c.l.b16 %v3827
    %v4091 = vunpack.c.l.b16 %v3828
    %v4092 = vunpack.c.l.b16 %v3829
    %v4093 = vunpack.c.l.b16 %v3830
    %v4094 = vunpack.c.l.b16 %v3831
    %v4095 = vunpack.c.l.b16 %v3832
    %v4096 = vunpack.c.l.b16 %v3833
    %v4097 = vunpack.c.l.b16 %v3834
    %v4098 = vunpack.c.l.b16 %v3835
    %v4099 = vunpack.c.l.b16 %v3836
    %v4100 = vunpack.c.l.b16 %v3837
    %v4101 = vunpack.c.l.b16 %v3838
    %v4102 = vunpack.c.l.b16 %v3839
    %v4103 = vunpack.c.l.b16 %v3840
    %v4104 = vunpack.c.l.b16 %v3841
    %v4105 = vunpack.c.l.b16 %v3842
    %v4106 = vunpack.c.l.b16 %v3843
    %v4107 = vunpack.c.l.b16 %v3844
    %v4108 = vunpack.c.l.b16 %v3845
    %v4109 = vunpack.c.l.b16 %v3846
    %v4110 = vunpack.c.l.b16 %v3847
    %v4111 = vunpack.c.l.b16 %v3848
    %v4112 = vunpack.c.l.b16 %v3849
    %v4113 = vunpack.c.l.b16 %v3850
    %v4114 = vunpack.c.l.b16 %v3851
    %v4115 = vunpack.c.l.b16 %v3852
    %v4116 = vunpack.c.l.b16 %v3853
    %v4117 = vpack.c.b16 %v3990, %v3989
    %v4118 = vpack.c.b16 %v3992, %v3991
    %v4119 = vpack.c.b16 %v3994, %v3993
    %v4120 = vpack.c.b16 %v3996, %v3995
    %v4121 = vpack.c.b16 %v3998, %v3997
    %v4122 = vpack.c.b16 %v4000, %v3999
    %v4123 = vpack.c.b16 %v4002, %v4001
    %v4124 = vpack.c.b16 %v4004, %v4003
    %v4125 = vpack.c.b16 %v4006, %v4005
    %v4126 = vpack.c.b16 %v4008, %v4007
    %v4127 = vpack.c.b16 %v4010, %v4009
    %v4128 = vpack.c.b16 %v4012, %v4011
    %v4129 = vpack.c.b16 %v4014, %v4013
    %v4130 = vpack.c.b16 %v4016, %v4015
    %v4131 = vpack.c.b16 %v4018, %v4017
    %v4132 = vpack.c.b16 %v4020, %v4019
    %v4133 = vpack.c.b16 %v4022, %v4021
    %v4134 = vpack.c.b16 %v4024, %v4023
    %v4135 = vpack.c.b16 %v4026, %v4025
    %v4136 = vpack.c.b16 %v4028, %v4027
    %v4137 = vpack.c.b16 %v4030, %v4029
    %v4138 = vpack.c.b16 %v4032, %v4031
    %v4139 = vpack.c.b16 %v4034, %v4033
    %v4140 = vpack.c.b16 %v4036, %v4035
    %v4141 = vpack.c.b16 %v4038, %v4037
    %v4142 = vpack.c.b16 %v4040, %v4039
    %v4143 = vpack.c.b16 %v4042, %v4041
    %v4144 = vpack.c.b16 %v4044, %v4043
    %v4145 = vpack.c.b16 %v4046, %v4045
    %v4146 = vpack.c.b16 %v4048, %v4047
    %v4147 = vpack.c.b16 %v4050, %v4049
    %v4148 = vpack.c.b16 %v4052, %v4051
    %v4149 = vpack.c.b16 %v4054, %v4053
    %v4150 = vpack.c.b16 %v4056, %v4055
    %v4151 = vpack.c.b16 %v4058, %v4057
    %v4152 = vpack.c.b16 %v4060, %v4059
    %v4153 = vpack.c.b16 %v4062, %v4061
    %v4154 = vpack.c.b16 %v4064, %v4063
    %v4155 = vpack.c.b16 %v4066, %v4065
    %v4156 = vpack.c.b16 %v4068, %v4067
    %v4157 = vpack.c.b16 %v4070, %v4069
    %v4158 = vpack.c.b16 %v4072, %v4071
    %v4159 = vpack.c.b16 %v4074, %v4073
    %v4160 = vpack.c.b16 %v4076, %v4075
    %v4161 = vpack.c.b16 %v4078, %v4077
    %v4162 = vpack.c.b16 %v4080, %v4079
    %v4163 = vpack.c.b16 %v4082, %v4081
    %v4164 = vpack.c.b16 %v4084, %v4083
    %v4165 = vpack.c.b16 %v4086, %v4085
    %v4166 = vpack.c.b16 %v4088, %v4087
    %v4167 = vpack.c.b16 %v4090, %v4089
    %v4168 = vpack.c.b16 %v4092, %v4091
    %v4169 = vpack.c.b16 %v4094, %v4093
    %v4170 = vpack.c.b16 %v4096, %v4095
    %v4171 = vpack.c.b16 %v4098, %v4097
    %v4172 = vpack.c.b16 %v4100, %v4099
    %v4173 = vpack.c.b16 %v4102, %v4101
    %v4174 = vpack.c.b16 %v4104, %v4103
    %v4175 = vpack.c.b16 %v4106, %v4105
    %v4176 = vpack.c.b16 %v4108, %v4107
    %v4177 = vpack.c.b16 %v4110, %v4109
    %v4178 = vpack.c.b16 %v4112, %v4111
    %v4179 = vpack.c.b16 %v4114, %v4113
    %v4180 = vpack.c.b16 %v4116, %v4115
    %4245 = vmatprep.subr.bf16.mxu0 0
    %4246 = vmatpush1.bf16.msra.mxu0 %v4124
    %4247 = vmatprep.subr.bf16.mxu0 0
    %4248 = vmatpush1.bf16.msra.mxu0 %v4123
    %4249 = vmatprep.subr.bf16.mxu0 0
    %4250 = vmatpush1.bf16.msra.mxu0 %v4122
    %4251 = vmatprep.subr.bf16.mxu0 0
    %4252 = vmatpush1.bf16.msra.mxu0 %v4121
    %4253 = vmatprep.subr.bf16.mxu0 0
    %4254 = vmatpush1.bf16.msra.mxu0 %v4120
    %4255 = vmatprep.subr.bf16.mxu0 0
    %4256 = vmatpush1.bf16.msra.mxu0 %v4119
    %4257 = vmatprep.subr.bf16.mxu0 0
    %4258 = vmatpush1.bf16.msra.mxu0 %v4118
    %4259 = vmatprep.subr.bf16.mxu0 0
    %4260 = vmatpush1.bf16.msra.mxu0 %v4117
    %4261 = vmatprep.subr.bf16.mxu0 0
    %4262 = vmatpush2.bf16.msra.mxu0 %v4132
    %4263 = vmatprep.subr.bf16.mxu0 0
    %4264 = vmatpush2.bf16.msra.mxu0 %v4131
    %4265 = vmatprep.subr.bf16.mxu0 0
    %4266 = vmatpush2.bf16.msra.mxu0 %v4130
    %4267 = vmatprep.subr.bf16.mxu0 0
    %4268 = vmatpush2.bf16.msra.mxu0 %v4129
    %4269 = vmatprep.subr.bf16.mxu0 0
    %4270 = vmatpush2.bf16.msra.mxu0 %v4128
    %4271 = vmatprep.subr.bf16.mxu0 0
    %4272 = vmatpush2.bf16.msra.mxu0 %v4127
    %4273 = vmatprep.subr.bf16.mxu0 0
    %4274 = vmatpush2.bf16.msra.mxu0 %v4126
    %4275 = vmatprep.subr.bf16.mxu0 0
    %4276 = vmatpush2.bf16.msra.mxu0 %v4125
    %4277 = vmatprep.mubr.bf16.mxu0 %v3719
    %4278 = vmatmul.mubr.bf16.gmra.mxu0 %v3718
    %v4279 = vpop.f32.mrf.mxu0
    %v4280 = vadd.f32 %v3859, %v4279
    %v4281 = vpop.f32.mrf.mxu0
    %v4282 = vpop.f32.mrf.mxu0
    %v4283 = vpop.f32.mrf.mxu0
    %4284 = vdwg.mxu0
    %4285 = vmatprep.subr.bf16.mxu0 0
    %4286 = vmatpush1.bf16.msra.mxu0 %v4140
    %4287 = vmatprep.subr.bf16.mxu0 0
    %4288 = vmatpush1.bf16.msra.mxu0 %v4139
    %4289 = vmatprep.subr.bf16.mxu0 0
    %4290 = vmatpush1.bf16.msra.mxu0 %v4138
    %4291 = vmatprep.subr.bf16.mxu0 0
    %4292 = vmatpush1.bf16.msra.mxu0 %v4137
    %4293 = vmatprep.subr.bf16.mxu0 0
    %4294 = vmatpush1.bf16.msra.mxu0 %v4136
    %4295 = vmatprep.subr.bf16.mxu0 0
    %4296 = vmatpush1.bf16.msra.mxu0 %v4135
    %4297 = vmatprep.subr.bf16.mxu0 0
    %4298 = vmatpush1.bf16.msra.mxu0 %v4134
    %4299 = vmatprep.subr.bf16.mxu0 0
    %4300 = vmatpush1.bf16.msra.mxu0 %v4133
    %4301 = vmatprep.subr.bf16.mxu0 0
    %4302 = vmatpush2.bf16.msra.mxu0 %v4148
    %4303 = vmatprep.subr.bf16.mxu0 0
    %4304 = vmatpush2.bf16.msra.mxu0 %v4147
    %4305 = vmatprep.subr.bf16.mxu0 0
    %4306 = vmatpush2.bf16.msra.mxu0 %v4146
    %4307 = vmatprep.subr.bf16.mxu0 0
    %4308 = vmatpush2.bf16.msra.mxu0 %v4145
    %4309 = vmatprep.subr.bf16.mxu0 0
    %4310 = vmatpush2.bf16.msra.mxu0 %v4144
    %4311 = vmatprep.subr.bf16.mxu0 0
    %4312 = vmatpush2.bf16.msra.mxu0 %v4143
    %4313 = vmatprep.subr.bf16.mxu0 0
    %4314 = vmatpush2.bf16.msra.mxu0 %v4142
    %4315 = vmatprep.subr.bf16.mxu0 0
    %4316 = vmatpush2.bf16.msra.mxu0 %v4141
    %4317 = vmatprep.mubr.bf16.mxu0 %v3721
    %4318 = vmatmul.mubr.bf16.gmra.mxu0 %v3720
    %v4319 = vpop.f32.mrf.mxu0
    %v4320 = vadd.f32 %v4280, %v4319
    %v4321 = vpop.f32.mrf.mxu0
    %v4322 = vpop.f32.mrf.mxu0
    %v4323 = vpop.f32.mrf.mxu0
    %4324 = vdwg.mxu0
    %4325 = vmatprep.subr.bf16.mxu0 0
    %4326 = vmatpush1.bf16.msra.mxu0 %v4156
    %4327 = vmatprep.subr.bf16.mxu0 0
    %4328 = vmatpush1.bf16.msra.mxu0 %v4155
    %4329 = vmatprep.subr.bf16.mxu0 0
    %4330 = vmatpush1.bf16.msra.mxu0 %v4154
    %4331 = vmatprep.subr.bf16.mxu0 0
    %4332 = vmatpush1.bf16.msra.mxu0 %v4153
    %4333 = vmatprep.subr.bf16.mxu0 0
    %4334 = vmatpush1.bf16.msra.mxu0 %v4152
    %4335 = vmatprep.subr.bf16.mxu0 0
    %4336 = vmatpush1.bf16.msra.mxu0 %v4151
    %4337 = vmatprep.subr.bf16.mxu0 0
    %4338 = vmatpush1.bf16.msra.mxu0 %v4150
    %4339 = vmatprep.subr.bf16.mxu0 0
    %4340 = vmatpush1.bf16.msra.mxu0 %v4149
    %4341 = vmatprep.subr.bf16.mxu0 0
    %4342 = vmatpush2.bf16.msra.mxu0 %v4164
    %4343 = vmatprep.subr.bf16.mxu0 0
    %4344 = vmatpush2.bf16.msra.mxu0 %v4163
    %4345 = vmatprep.subr.bf16.mxu0 0
    %4346 = vmatpush2.bf16.msra.mxu0 %v4162
    %4347 = vmatprep.subr.bf16.mxu0 0
    %4348 = vmatpush2.bf16.msra.mxu0 %v4161
    %4349 = vmatprep.subr.bf16.mxu0 0
    %4350 = vmatpush2.bf16.msra.mxu0 %v4160
    %4351 = vmatprep.subr.bf16.mxu0 0
    %4352 = vmatpush2.bf16.msra.mxu0 %v4159
    %4353 = vmatprep.subr.bf16.mxu0 0
    %4354 = vmatpush2.bf16.msra.mxu0 %v4158
    %4355 = vmatprep.subr.bf16.mxu0 0
    %4356 = vmatpush2.bf16.msra.mxu0 %v4157
    %4357 = vmatprep.mubr.bf16.mxu0 %v3723
    %4358 = vmatmul.mubr.bf16.gmra.mxu0 %v3722
    %v4359 = vpop.f32.mrf.mxu0
    %v4360 = vadd.f32 %v4320, %v4359
    %v4361 = vpop.f32.mrf.mxu0
    %v4362 = vpop.f32.mrf.mxu0
    %v4363 = vpop.f32.mrf.mxu0
    %4364 = vdwg.mxu0
    %4365 = vmatprep.subr.bf16.mxu0 0
    %4366 = vmatpush1.bf16.msra.mxu0 %v4172
    %4367 = vmatprep.subr.bf16.mxu0 0
    %4368 = vmatpush1.bf16.msra.mxu0 %v4171
    %4369 = vmatprep.subr.bf16.mxu0 0
    %4370 = vmatpush1.bf16.msra.mxu0 %v4170
    %4371 = vmatprep.subr.bf16.mxu0 0
    %4372 = vmatpush1.bf16.msra.mxu0 %v4169
    %4373 = vmatprep.subr.bf16.mxu0 0
    %4374 = vmatpush1.bf16.msra.mxu0 %v4168
    %4375 = vmatprep.subr.bf16.mxu0 0
    %4376 = vmatpush1.bf16.msra.mxu0 %v4167
    %4377 = vmatprep.subr.bf16.mxu0 0
    %4378 = vmatpush1.bf16.msra.mxu0 %v4166
    %4379 = vmatprep.subr.bf16.mxu0 0
    %4380 = vmatpush1.bf16.msra.mxu0 %v4165
    %4381 = vmatprep.subr.bf16.mxu0 0
    %4382 = vmatpush2.bf16.msra.mxu0 %v4180
    %4383 = vmatprep.subr.bf16.mxu0 0
    %4384 = vmatpush2.bf16.msra.mxu0 %v4179
    %4385 = vmatprep.subr.bf16.mxu0 0
    %4386 = vmatpush2.bf16.msra.mxu0 %v4178
    %4387 = vmatprep.subr.bf16.mxu0 0
    %4388 = vmatpush2.bf16.msra.mxu0 %v4177
    %4389 = vmatprep.subr.bf16.mxu0 0
    %4390 = vmatpush2.bf16.msra.mxu0 %v4176
    %4391 = vmatprep.subr.bf16.mxu0 0
    %4392 = vmatpush2.bf16.msra.mxu0 %v4175
    %4393 = vmatprep.subr.bf16.mxu0 0
    %4394 = vmatpush2.bf16.msra.mxu0 %v4174
    %4395 = vmatprep.subr.bf16.mxu0 0
    %4396 = vmatpush2.bf16.msra.mxu0 %v4173
    %4397 = vmatprep.mubr.bf16.mxu0 %v3725
    %4398 = vmatmul.mubr.bf16.gmra.mxu0 %v3724
    %v4399 = vpop.f32.mrf.mxu0
    %v4400 = vadd.f32 %v4360, %v4399
    %v4401 = vpop.f32.mrf.mxu0
    %v4402 = vpop.f32.mrf.mxu0
    %v4403 = vpop.f32.mrf.mxu0
    %4404 = vdwg.mxu0
    %4405 = vst [vmem:[#allocation6] sm:$0x3] %v4400
    // Predicated region
    $region30: #{cnn_forward.1} parent=1 // pred_check
      _
    $region31: #{cnn_forward.1} parent=1 // pred_check_branch
      %4407 = sbr.rel (0) target = $region33
    $region32: #{cnn_forward.1} parent=1 // pred_region
      %s4409 = ssub.s32 32, 32
      %4410 = vsyncadd [#allocation7], %s4409
      %s4412 = sshll.u32 [#allocation6], 4
      %s4413 = int_to_ptr.vmem [resolvable:$true] %s4412
      %4415 = dma.vmem_to_hbm [thread:$0]  %s4413, 32, %s7, [#allocation7]
    $region33: #{cnn_forward.1} parent=1 // pred_fallthru
      _
    // Predicated region
    $region34: #{cnn_forward.1} parent=1 // pred_check
      _
    $region35: #{cnn_forward.1} parent=1 // pred_check_branch
      %4417 = sbr.rel (0) target = $region37
    $region36: #{cnn_forward.1} parent=1 // pred_region
      %4418 = dma.done [#allocation7], 32
    $region37: #{cnn_forward.1} parent=1 // pred_fallthru
      _
    %4419 = vsyncpa [#allocation7], 1

</llo_original>
